<compile_context>
chip_gen: v7x
topology: tpu7x:2x2x1
jax: 0.10.0
libtpu: 0.0.40
codegen_flags: <defaults>
</compile_context>

<pallas_src>
import math
import numpy as np
import jax
import jax.numpy as jnp
from jax import lax
from jax.experimental import pallas as pl
from jax.experimental.pallas import tpu as pltpu


def _make_attention_kernel(heads, dim_head):
    hidden = heads * dim_head

    def kernel(qkv_ref, o_ref):
        # (N, 3*hidden) bf16; scale is already folded into the q columns.
        qkv = qkv_ref[...]

        outs = []
        for h in range(heads):
            q = qkv[:, h * dim_head:(h + 1) * dim_head]                               # (N, dh) bf16
            k = qkv[:, hidden + h * dim_head: hidden + (h + 1) * dim_head]            # (N, dh) bf16
            v = qkv[:, 2 * hidden + h * dim_head: 2 * hidden + (h + 1) * dim_head]    # (N, dh) bf16

            # q @ k^T via transposed-RHS contraction (no materialized k.T),
            # bf16 operands, f32 accumulation on the MXU.
            sim = lax.dot_general(
                q, k,
                dimension_numbers=(((1,), (1,)), ((), ())),
                preferred_element_type=jnp.float32)                                   # (N, N) f32

            # softmax statistics in f32 (safe/optimal on v5e as well)
            m = jnp.max(sim, axis=-1, keepdims=True)                                  # (N, 1)
            e = jnp.exp(sim - m)                                                      # (N, N) f32
            denom = jnp.sum(e, axis=-1, keepdims=True)                                # (N, 1)

            # PV matmul with bf16 operands, f32 accumulation.
            o_h = jnp.dot(e.astype(jnp.bfloat16), v,
                          preferred_element_type=jnp.float32)                         # (N, dh) f32
            # normalize after the PV matmul: (N, dh) scale instead of (N, N);
            # approx reciprocal runs on the otherwise idle EUP slot.
            o_h = o_h * pl.reciprocal(denom, approx=True)
            outs.append(o_h)

        # lane-dense store: heads * dim_head = 128 lanes, one full-width write
        o_ref[...] = jnp.concatenate(outs, axis=-1).astype(o_ref.dtype)

    return kernel


def attention_forward(x_nchw, w_qkv, w_out, b_out, *, heads, dim_head):
    """x_nchw: (b, dim, h, w). w_qkv: (3*heads*dim_head, dim).
    w_out: (dim, heads*dim_head). b_out: (dim,). Returns (b, dim, h, w)."""
    b, c, h, w = x_nchw.shape
    dim = c
    N = h * w
    hidden = heads * dim_head
    scale = dim_head ** (-0.5)

    # fold the softmax scale into the q rows of the qkv weight (one-time,
    # tiny constant transform; rows [0, hidden) are the q output channels)
    w_qkv_scaled = w_qkv.at[:hidden].multiply(scale)

    # glue: NCHW -> (b, N, C) sequence layout
    x_seq = jnp.transpose(x_nchw, (0, 2, 3, 1)).reshape(b, N, c)

    # K=dim(=4) contraction is degenerate on the MXU (4/256 rows used), so the
    # qkv 1x1-conv projection is done here and fused by XLA with the transpose;
    # the kernel receives a lane-dense bf16 (b, N, 3*hidden) qkv tile.
    qkv = jnp.einsum("bnc,oc->bno", x_seq, w_qkv_scaled)               # (b, N, 3*hidden) f32
    qkv = qkv.astype(jnp.bfloat16)                                     # bf16 MXU operands

    kernel = _make_attention_kernel(heads, dim_head)

    o_seq = pl.pallas_call(
        kernel,
        out_shape=jax.ShapeDtypeStruct((b, N, hidden), jnp.float32),
        grid_spec=pltpu.PrefetchScalarGridSpec(
            num_scalar_prefetch=0,
            grid=(b,),
            in_specs=[
                # batch dim squeezed out of the kernel view
                pl.BlockSpec((None, N, 3 * hidden), lambda bi: (bi, 0, 0)),
            ],
            out_specs=pl.BlockSpec((None, N, hidden), lambda bi: (bi, 0, 0)),
        ),
        compiler_params=pltpu.CompilerParams(
            dimension_semantics=("parallel",)),   # b=2 shards across v7x's 2 TCs
    )(qkv)

    # final 1x1-conv output projection (hidden -> dim) + bias: tiny, fused by XLA
    out = jnp.einsum("bnh,dh->bnd", o_seq, w_out) + b_out              # (b, N, dim)

    # glue: back to NCHW
    return jnp.transpose(out.reshape(b, h, w, dim), (0, 3, 1, 2))


def attention_reference(x_nchw, w_qkv, w_out, b_out, *, heads, dim_head):
    """Pure-JAX f32 reference mirroring the PyTorch forward."""
    b, c, h, w = x_nchw.shape
    N = h * w
    scale = dim_head ** (-0.5)
    x_seq = jnp.transpose(x_nchw, (0, 2, 3, 1)).reshape(b, N, c)
    qkv = jnp.einsum("bnc,oc->bno", x_seq, w_qkv)                 # (b, N, 3*hidden)
    qkv = qkv.reshape(b, N, 3, heads, dim_head)
    q = qkv[:, :, 0] * scale                                      # (b, N, heads, dh)
    k = qkv[:, :, 1]
    v = qkv[:, :, 2]
    sim = jnp.einsum("bihd,bjhd->bhij", q, k)
    sim = sim - jnp.max(sim, axis=-1, keepdims=True)
    attn = jax.nn.softmax(sim, axis=-1)
    o = jnp.einsum("bhij,bjhd->bhid", attn, v)                    # (b, heads, N, dh)
    o = jnp.transpose(o, (0, 2, 1, 3)).reshape(b, N, heads * dim_head)
    out = jnp.einsum("bnh,dh->bnd", o, w_out) + b_out
    return jnp.transpose(out.reshape(b, h, w, c), (0, 3, 1, 2))


if __name__ == "__main__":
    # module config: Attention(dim=4, heads=4, dim_head=32)
    dim, heads, dim_head = 4, 4, 32
    hidden = heads * dim_head
    b, h, w = 2, 16, 16

    key = jax.random.PRNGKey(0)
    kx, kqkv, kwo, kbo = jax.random.split(key, 4)

    x = jax.random.normal(kx, (b, dim, h, w), dtype=jnp.float32)
    # deterministic parameter init (kaiming-ish scaling, not a checkpoint)
    w_qkv = jax.random.normal(kqkv, (hidden * 3, dim), dtype=jnp.float32) / math.sqrt(dim)
    w_out = jax.random.normal(kwo, (dim, hidden), dtype=jnp.float32) / math.sqrt(hidden)
    b_out = jax.random.normal(kbo, (dim,), dtype=jnp.float32) * 0.01

    out = attention_forward(x, w_qkv, w_out, b_out, heads=heads, dim_head=dim_head)
    out = jax.block_until_ready(out)

    ref = attention_reference(x, w_qkv, w_out, b_out, heads=heads, dim_head=dim_head)
    # tolerance loosened vs. the f32 reference because matmul operands are bf16
    # (f32 accumulation is preserved via preferred_element_type=jnp.float32)
    np.testing.assert_allclose(np.asarray(out), np.asarray(ref), rtol=2e-2, atol=2e-2)

    print("KERNEL_OK")
</pallas_src>

<mosaic_0001>
module attributes {stable_mosaic.version = 11 : i64} {
  func.func @kernel(%arg0: i32, %arg1: memref<1x256x384xbf16, #tpu.memory_space<vmem>>, %arg2: memref<1x256x128xf32, #tpu.memory_space<vmem>>) attributes {dimension_semantics = [#tpu.dimension_semantics<parallel>], iteration_bounds = array<i64: 2>, scalar_prefetch = 0 : i64, scratch_operands = 0 : i64, tpu.core_type = #tpu.core_type<tc>, window_params = [{transform_indices = @transform_0, window_bounds = array<i64: 1, 256, 384>}, {transform_indices = @transform_1, window_bounds = array<i64: 1, 256, 128>}]} {
    %c0 = arith.constant 0 : index
    %c0_0 = arith.constant 0 : index
    %c0_1 = arith.constant 0 : index
    %0 = vector.load %arg1[%c0, %c0_0, %c0_1] : memref<1x256x384xbf16, #tpu.memory_space<vmem>>, vector<1x256x384xbf16>
    %1 = vector.shape_cast %0 : vector<1x256x384xbf16> to vector<256x384xbf16>
    %2 = vector.extract_strided_slice %1 {offsets = [0, 0], sizes = [256, 32], strides = [1, 1]} : vector<256x384xbf16> to vector<256x32xbf16>
    %3 = vector.extract_strided_slice %1 {offsets = [0, 128], sizes = [256, 32], strides = [1, 1]} : vector<256x384xbf16> to vector<256x32xbf16>
    %4 = vector.extract_strided_slice %1 {offsets = [0, 256], sizes = [256, 32], strides = [1, 1]} : vector<256x384xbf16> to vector<256x32xbf16>
    %cst = arith.constant dense<0.000000e+00> : vector<256x256xf32>
    %5 = tpu.matmul %2, %3, %cst {dimension_numbers = #tpu.dot_dimension_numbers<[1], [1], [0], [0], [0, 0, 1, 0], [], []>} : vector<256x32xbf16>, vector<256x32xbf16>, vector<256x256xf32> -> vector<256x256xf32>
    %cst_2 = arith.constant dense<0xFF800000> : vector<256xf32>
    %6 = vector.multi_reduction <maximumf>, %5, %cst_2 [1] : vector<256x256xf32> to vector<256xf32>
    %7 = vector.shape_cast %6 : vector<256xf32> to vector<256x1xf32>
    %8 = vector.broadcast %7 : vector<256x1xf32> to vector<256x256xf32>
    %9 = arith.subf %5, %8 : vector<256x256xf32>
    %10 = math.exp %9 : vector<256x256xf32>
    %cst_3 = arith.constant dense<0.000000e+00> : vector<256xf32>
    %11 = vector.multi_reduction <add>, %10, %cst_3 [1] : vector<256x256xf32> to vector<256xf32>
    %12 = vector.shape_cast %11 : vector<256xf32> to vector<256x1xf32>
    %13 = arith.truncf %10 : vector<256x256xf32> to vector<256x256xbf16>
    %cst_4 = arith.constant dense<0.000000e+00> : vector<256x32xf32>
    %14 = tpu.matmul %13, %4, %cst_4 {dimension_numbers = #tpu.dot_dimension_numbers<[1], [0], [0], [1], [0, 0, 1, 1], [], []>} : vector<256x256xbf16>, vector<256x32xbf16>, vector<256x32xf32> -> vector<256x32xf32>
    %15 = tpu.reciprocal %12 {approx = true} : vector<256x1xf32> -> vector<256x1xf32>
    %16 = vector.broadcast %15 : vector<256x1xf32> to vector<256x32xf32>
    %17 = arith.mulf %14, %16 : vector<256x32xf32>
    %18 = vector.extract_strided_slice %1 {offsets = [0, 32], sizes = [256, 32], strides = [1, 1]} : vector<256x384xbf16> to vector<256x32xbf16>
    %19 = vector.extract_strided_slice %1 {offsets = [0, 160], sizes = [256, 32], strides = [1, 1]} : vector<256x384xbf16> to vector<256x32xbf16>
    %20 = vector.extract_strided_slice %1 {offsets = [0, 288], sizes = [256, 32], strides = [1, 1]} : vector<256x384xbf16> to vector<256x32xbf16>
    %cst_5 = arith.constant dense<0.000000e+00> : vector<256x256xf32>
    %21 = tpu.matmul %18, %19, %cst_5 {dimension_numbers = #tpu.dot_dimension_numbers<[1], [1], [0], [0], [0, 0, 1, 0], [], []>} : vector<256x32xbf16>, vector<256x32xbf16>, vector<256x256xf32> -> vector<256x256xf32>
    %cst_6 = arith.constant dense<0xFF800000> : vector<256xf32>
    %22 = vector.multi_reduction <maximumf>, %21, %cst_6 [1] : vector<256x256xf32> to vector<256xf32>
    %23 = vector.shape_cast %22 : vector<256xf32> to vector<256x1xf32>
    %24 = vector.broadcast %23 : vector<256x1xf32> to vector<256x256xf32>
    %25 = arith.subf %21, %24 : vector<256x256xf32>
    %26 = math.exp %25 : vector<256x256xf32>
    %cst_7 = arith.constant dense<0.000000e+00> : vector<256xf32>
    %27 = vector.multi_reduction <add>, %26, %cst_7 [1] : vector<256x256xf32> to vector<256xf32>
    %28 = vector.shape_cast %27 : vector<256xf32> to vector<256x1xf32>
    %29 = arith.truncf %26 : vector<256x256xf32> to vector<256x256xbf16>
    %cst_8 = arith.constant dense<0.000000e+00> : vector<256x32xf32>
    %30 = tpu.matmul %29, %20, %cst_8 {dimension_numbers = #tpu.dot_dimension_numbers<[1], [0], [0], [1], [0, 0, 1, 1], [], []>} : vector<256x256xbf16>, vector<256x32xbf16>, vector<256x32xf32> -> vector<256x32xf32>
    %31 = tpu.reciprocal %28 {approx = true} : vector<256x1xf32> -> vector<256x1xf32>
    %32 = vector.broadcast %31 : vector<256x1xf32> to vector<256x32xf32>
    %33 = arith.mulf %30, %32 : vector<256x32xf32>
    %34 = vector.extract_strided_slice %1 {offsets = [0, 64], sizes = [256, 32], strides = [1, 1]} : vector<256x384xbf16> to vector<256x32xbf16>
    %35 = vector.extract_strided_slice %1 {offsets = [0, 192], sizes = [256, 32], strides = [1, 1]} : vector<256x384xbf16> to vector<256x32xbf16>
    %36 = vector.extract_strided_slice %1 {offsets = [0, 320], sizes = [256, 32], strides = [1, 1]} : vector<256x384xbf16> to vector<256x32xbf16>
    %cst_9 = arith.constant dense<0.000000e+00> : vector<256x256xf32>
    %37 = tpu.matmul %34, %35, %cst_9 {dimension_numbers = #tpu.dot_dimension_numbers<[1], [1], [0], [0], [0, 0, 1, 0], [], []>} : vector<256x32xbf16>, vector<256x32xbf16>, vector<256x256xf32> -> vector<256x256xf32>
    %cst_10 = arith.constant dense<0xFF800000> : vector<256xf32>
    %38 = vector.multi_reduction <maximumf>, %37, %cst_10 [1] : vector<256x256xf32> to vector<256xf32>
    %39 = vector.shape_cast %38 : vector<256xf32> to vector<256x1xf32>
    %40 = vector.broadcast %39 : vector<256x1xf32> to vector<256x256xf32>
    %41 = arith.subf %37, %40 : vector<256x256xf32>
    %42 = math.exp %41 : vector<256x256xf32>
    %cst_11 = arith.constant dense<0.000000e+00> : vector<256xf32>
    %43 = vector.multi_reduction <add>, %42, %cst_11 [1] : vector<256x256xf32> to vector<256xf32>
    %44 = vector.shape_cast %43 : vector<256xf32> to vector<256x1xf32>
    %45 = arith.truncf %42 : vector<256x256xf32> to vector<256x256xbf16>
    %cst_12 = arith.constant dense<0.000000e+00> : vector<256x32xf32>
    %46 = tpu.matmul %45, %36, %cst_12 {dimension_numbers = #tpu.dot_dimension_numbers<[1], [0], [0], [1], [0, 0, 1, 1], [], []>} : vector<256x256xbf16>, vector<256x32xbf16>, vector<256x32xf32> -> vector<256x32xf32>
    %47 = tpu.reciprocal %44 {approx = true} : vector<256x1xf32> -> vector<256x1xf32>
    %48 = vector.broadcast %47 : vector<256x1xf32> to vector<256x32xf32>
    %49 = arith.mulf %46, %48 : vector<256x32xf32>
    %50 = vector.extract_strided_slice %1 {offsets = [0, 96], sizes = [256, 32], strides = [1, 1]} : vector<256x384xbf16> to vector<256x32xbf16>
    %51 = vector.extract_strided_slice %1 {offsets = [0, 224], sizes = [256, 32], strides = [1, 1]} : vector<256x384xbf16> to vector<256x32xbf16>
    %52 = vector.extract_strided_slice %1 {offsets = [0, 352], sizes = [256, 32], strides = [1, 1]} : vector<256x384xbf16> to vector<256x32xbf16>
    %cst_13 = arith.constant dense<0.000000e+00> : vector<256x256xf32>
    %53 = tpu.matmul %50, %51, %cst_13 {dimension_numbers = #tpu.dot_dimension_numbers<[1], [1], [0], [0], [0, 0, 1, 0], [], []>} : vector<256x32xbf16>, vector<256x32xbf16>, vector<256x256xf32> -> vector<256x256xf32>
    %cst_14 = arith.constant dense<0xFF800000> : vector<256xf32>
    %54 = vector.multi_reduction <maximumf>, %53, %cst_14 [1] : vector<256x256xf32> to vector<256xf32>
    %55 = vector.shape_cast %54 : vector<256xf32> to vector<256x1xf32>
    %56 = vector.broadcast %55 : vector<256x1xf32> to vector<256x256xf32>
    %57 = arith.subf %53, %56 : vector<256x256xf32>
    %58 = math.exp %57 : vector<256x256xf32>
    %cst_15 = arith.constant dense<0.000000e+00> : vector<256xf32>
    %59 = vector.multi_reduction <add>, %58, %cst_15 [1] : vector<256x256xf32> to vector<256xf32>
    %60 = vector.shape_cast %59 : vector<256xf32> to vector<256x1xf32>
    %61 = arith.truncf %58 : vector<256x256xf32> to vector<256x256xbf16>
    %cst_16 = arith.constant dense<0.000000e+00> : vector<256x32xf32>
    %62 = tpu.matmul %61, %52, %cst_16 {dimension_numbers = #tpu.dot_dimension_numbers<[1], [0], [0], [1], [0, 0, 1, 1], [], []>} : vector<256x256xbf16>, vector<256x32xbf16>, vector<256x32xf32> -> vector<256x32xf32>
    %63 = tpu.reciprocal %60 {approx = true} : vector<256x1xf32> -> vector<256x1xf32>
    %64 = vector.broadcast %63 : vector<256x1xf32> to vector<256x32xf32>
    %65 = arith.mulf %62, %64 : vector<256x32xf32>
    %66 = tpu.concatenate %17, %33, %49, %65 in 1 : vector<256x32xf32>, vector<256x32xf32>, vector<256x32xf32>, vector<256x32xf32> -> vector<256x128xf32>
    %c0_17 = arith.constant 0 : index
    %c0_18 = arith.constant 0 : index
    %c0_19 = arith.constant 0 : index
    %67 = vector.load %arg2[%c0_17, %c0_18, %c0_19] : memref<1x256x128xf32, #tpu.memory_space<vmem>>, vector<1x256x128xf32>
    %68 = vector.shape_cast %67 : vector<1x256x128xf32> to vector<256x128xf32>
    %69 = vector.shape_cast %66 : vector<256x128xf32> to vector<1x256x128xf32>
    tpu.vector_store %arg2[%c0_17, %c0_18, %c0_19], %69 {strides = array<i32>} : memref<1x256x128xf32, #tpu.memory_space<vmem>>, vector<1x256x128xf32>,
    return
  }
  func.func @transform_0(%arg0: i32) -> (i32, i32, i32) {
    %c0_i32 = arith.constant 0 : i32
    %c0_i32_0 = arith.constant 0 : i32
    %c0_i32_1 = arith.constant 0 : i32
    return %arg0, %c0_i32, %c0_i32_0 : i32, i32, i32
  }
  func.func @transform_1(%arg0: i32) -> (i32, i32, i32) {
    %c0_i32 = arith.constant 0 : i32
    %c0_i32_0 = arith.constant 0 : i32
    %c0_i32_1 = arith.constant 0 : i32
    return %arg0, %c0_i32, %c0_i32_0 : i32, i32, i32
  }
}

</mosaic_0001>

<llo_original>
// kernel: tpu_custom_call.1
$region0: #{tpu_custom_call.1}
  #allocation0 [shape = 'u32[]', space=smem, size = 0x4, offset = 0x4, fixed_abs, tag = 'smem constant byte address 0x4 - core index']
  #allocation1 [shape = 'u32[144,128]{1,0:T(1,128)}', space=vmem, size = 0x12000, scoped, tag = 'internal scratch']
  %s0 = inlined_call_operand.hbm [shape: bf16[2,256,384], index: 0, kind: input, shape index: {}]
  %s1 = inlined_call_operand.hbm [shape: f32[2,256,128], index: 1, kind: output, shape index: {}]
  %s2 = sld [smem:[#allocation0]]
  $region41: #{tpu_custom_call.1} parent=0
    _
  %s4 = ssub.s32 1, %s2
  %s5 = scalar_select 0, %s4, %s2
  $region1: #{tpu_custom_call.1} parent=0
    #allocation2 [shape = 'u8[393216]{0}', space=vmem, size = 0x60000, scoped, tag = 'input window, operand 0']
    #allocation3 [shape = 's32[2]{0}', space=sflag, size = 0x8, scoped, tag = 'scoped memory for tpu_custom_call.1']
    #allocation4 [shape = 's32[2]{0}', space=sflag, size = 0x8, scoped, tag = 'scoped memory for tpu_custom_call.1']
    #allocation5 [shape = 'u8[262144]{0}', space=vmem, size = 0x40000, scoped, tag = 'output window, operand 0']
    %6 = vsyncpa [#allocation3], 0
    %s7 = scalar_lea.sflag [#allocation3], 1
    %8 = vsyncpa %s7, 0
    %9 = vsyncpa [#allocation4], 0
    %s10 = scalar_lea.sflag [#allocation4], 1
    %11 = vsyncpa %s10, 0
    loop: start=0, step=1, limit=4
    $region2: #{tpu_custom_call.1} parent=1 // loop_pre_header
      _
    $region3: #{tpu_custom_call.1} parent=1 // loop_header
      %s13 = sphi 0, %s17
      %p14 = scmp.ge.s32.totalorder %s13, 4
      %s23 = sphi 0, %s25
      %s26 = sphi 0, %s23
      %s27 = sphi 0, %s26
      %s43 = sphi 0, %s27
      %s49 = sphi 0, %s51
      %s52 = sphi 0, %s49
      %s53 = sphi 0, %s52
      %s69 = sphi 0, %s53
    $region4: #{tpu_custom_call.1} parent=1 // loop_header_branch
      %16 = sbr.rel (%p14) target = $region8
    $region5: #{tpu_custom_call.1} parent=1 // loop_body
      %s18 = ssub.s32 %s13, 1
      %s19 = ssub.s32 %s13, 2
      %s20 = sadd.s32 %s13, 1
      %s21 = ssub.s32 %s13, %s20
      %p22 = scmp.eq.s32.totalorder %s21, 0
      %s24 = sadd.s32 %s23, 1
      %s25 = scalar_select %p22, %s23, %s24
      %p28 = pneg %p22
      %p29 = scmp.eq.s32.totalorder %s13, 1
      %p30 = por %p28, %p29
      %p31 = scmp.ne.s32.totalorder %s23, %s26
      %p32 = scmp.eq.s32.totalorder %s13, 0
      %p33 = por %p31, %p32
      %p34 = scmp.ne.s32.totalorder %s23, %s26
      %p35 = scmp.eq.s32.totalorder %s18, 1
      %p36 = por %p34, %p35
      %p37 = scmp.ne.s32.totalorder %s26, %s27
      %p38 = scmp.eq.s32.totalorder %s18, 0
      %p39 = por %p37, %p38
      %p40 = scmp.ne.s32.totalorder %s26, %s27
      %p41 = scmp.eq.s32.totalorder %s19, 1
      %p42 = por %p40, %p41
      %p44 = scmp.ne.s32.totalorder %s27, %s43
      %p45 = scmp.eq.s32.totalorder %s19, 0
      %p46 = por %p44, %p45
      %s47 = ssub.s32 %s13, %s20
      %p48 = scmp.eq.s32.totalorder %s47, 0
      %s50 = sadd.s32 %s49, 1
      %s51 = scalar_select %p48, %s49, %s50
      %p54 = pneg %p48
      %p55 = scmp.eq.s32.totalorder %s13, 1
      %p56 = por %p54, %p55
      %p57 = scmp.ne.s32.totalorder %s49, %s52
      %p58 = scmp.eq.s32.totalorder %s13, 0
      %p59 = por %p57, %p58
      %p60 = scmp.ne.s32.totalorder %s49, %s52
      %p61 = scmp.eq.s32.totalorder %s18, 1
      %p62 = por %p60, %p61
      %p63 = scmp.ne.s32.totalorder %s52, %s53
      %p64 = scmp.eq.s32.totalorder %s18, 0
      %p65 = por %p63, %p64
      %p66 = scmp.ne.s32.totalorder %s52, %s53
      %p67 = scmp.eq.s32.totalorder %s19, 1
      %p68 = por %p66, %p67
      %p70 = scmp.ne.s32.totalorder %s53, %s69
      %p71 = scmp.eq.s32.totalorder %s19, 0
      %p72 = por %p70, %p71
      %p73 = scmp.le.s32.totalorder 1, %s13
      %p74 = scmp.lt.s32.totalorder %s13, 3
      %p75 = pnand %p73, %p74
      %p76 = pneg %p75
      // Predicated region
      $region9: #{tpu_custom_call.1} parent=5 // pred_check
        _
      $region10: #{tpu_custom_call.1} parent=5 // pred_check_branch
        %78 = sbr.rel (%p75) target = $region12
      $region11: #{tpu_custom_call.1} parent=5 // pred_region
        %s79 = ssub.s32 %s13, 1
      $region12: #{tpu_custom_call.1} parent=5 // pred_fallthru
        _
      %p80 = scmp.lt.s32.totalorder %s13, 2
      // Predicated region
      $region13: #{tpu_custom_call.1} parent=5 // pred_check
        %p81 = pneg %p80
      $region14: #{tpu_custom_call.1} parent=5 // pred_check_branch
        %83 = sbr.rel (%p81) target = $region16
      $region15: #{tpu_custom_call.1} parent=5 // pred_region
        // Predicated region
        $region17: #{tpu_custom_call.1} parent=15 // pred_check
          %p84 = pneg %p33
        $region18: #{tpu_custom_call.1} parent=15 // pred_check_branch
          %86 = sbr.rel (%p84) target = $region20
        $region19: #{tpu_custom_call.1} parent=15 // pred_region
          %s87 = sand.u32 %s23, 1
          %s88 = scalar_lea.sflag [#allocation3], %s87
          %s89 = sand.u32 %s23, 1
          %s90 = smul.addr %s89, 384
          %s91 = scalar_lea.vmem [#allocation2], %s90
          %s93 = ssub.s32 6144, 6144
          %94 = vsyncadd %s88, %s93
          %s95 = smul.addr %s13, 96
          %s96 = smul.addr %s95, 64
          %s97 = scalar_lea.hbm %s0, %s96
          %s98 = sshll.u32 %s91, 4
          %s99 = int_to_ptr.vmem [resolvable:$true] %s98
          %104 = dma.hbm_to_vmem [thread:$0]  %s97, 6144, %s99, %s88, 192, 192, 12
        $region20: #{tpu_custom_call.1} parent=15 // pred_fallthru
          _
      $region16: #{tpu_custom_call.1} parent=5 // pred_fallthru
        _
      %p105 = scmp.le.s32.totalorder 1, %s13
      %p106 = scmp.lt.s32.totalorder %s13, 3
      %p107 = pnand %p105, %p106
      %p108 = pneg %p107
      // Predicated region
      $region21: #{tpu_custom_call.1} parent=5 // pred_check
        _
      $region22: #{tpu_custom_call.1} parent=5 // pred_check_branch
        %110 = sbr.rel (%p107) target = $region24
      $region23: #{tpu_custom_call.1} parent=5 // pred_region
        %s111 = ssub.s32 %s13, 1
        %s112 = sand.u32 %s26, 1
        %s113 = scalar_lea.sflag [#allocation3], %s112
        %s114 = sand.u32 %s26, 1
        %s115 = smul.addr %s114, 384
        %s116 = scalar_lea.vmem [#allocation2], %s115
        // Predicated region
        $region25: #{tpu_custom_call.1} parent=23 // pred_check
          %p117 = pneg %p39
        $region26: #{tpu_custom_call.1} parent=23 // pred_check_branch
          %119 = sbr.rel (%p117) target = $region28
        $region27: #{tpu_custom_call.1} parent=23 // pred_region
          %120 = dma.done %s113, 6144
        $region28: #{tpu_custom_call.1} parent=23 // pred_fallthru
          _
        %s121 = sand.u32 %s26, 1
        %s122 = scalar_lea.sflag [#allocation3], %s121
        %s123 = sand.u32 %s26, 1
        %s124 = smul.addr %s123, 384
        %s125 = scalar_lea.vmem [#allocation2], %s124
        %p126 = pneg %p39
        %p127 = pneg %p36
        %p128 = pneg %p65
        %p129 = pneg %p62
        %s130 = sand.u32 %s52, 1
        %s131 = scalar_lea.sflag [#allocation4], %s130
        %s132 = sand.u32 %s52, 1
        %s133 = smul.addr %s132, 256
        %s134 = scalar_lea.vmem [#allocation5], %s133
        %v136 = vld [vmem:[%s116] sm:$0xff]
        %v137 = vld [vmem:[%s116 + $0x8] sm:$0xf]
        %v138 = vld [vmem:[%s116 + $0xc] sm:$0xff]
        %v139 = vld [vmem:[%s116 + $0x14] sm:$0xf]
        %v140 = vld [vmem:[%s116 + $0x18] sm:$0xff]
        %v141 = vld [vmem:[%s116 + $0x20] sm:$0xf]
        %v142 = vld [vmem:[%s116 + $0x24] sm:$0xff]
        %v143 = vld [vmem:[%s116 + $0x2c] sm:$0xf]
        %v144 = vld [vmem:[%s116 + $0x30] sm:$0xff]
        %v145 = vld [vmem:[%s116 + $0x38] sm:$0xf]
        %v146 = vld [vmem:[%s116 + $0x3c] sm:$0xff]
        %v147 = vld [vmem:[%s116 + $0x44] sm:$0xf]
        %v148 = vld [vmem:[%s116 + $0x48] sm:$0xff]
        %v149 = vld [vmem:[%s116 + $0x50] sm:$0xf]
        %v150 = vld [vmem:[%s116 + $0x54] sm:$0xff]
        %v151 = vld [vmem:[%s116 + $0x5c] sm:$0xf]
        %v152 = vld [vmem:[%s116 + $0x60] sm:$0xff]
        %v153 = vld [vmem:[%s116 + $0x68] sm:$0xf]
        %v154 = vld [vmem:[%s116 + $0x6c] sm:$0xff]
        %v155 = vld [vmem:[%s116 + $0x74] sm:$0xf]
        %v156 = vld [vmem:[%s116 + $0x78] sm:$0xff]
        %v157 = vld [vmem:[%s116 + $0x80] sm:$0xf]
        %v158 = vld [vmem:[%s116 + $0x84] sm:$0xff]
        %v159 = vld [vmem:[%s116 + $0x8c] sm:$0xf]
        %v160 = vld [vmem:[%s116 + $0x90] sm:$0xff]
        %v161 = vld [vmem:[%s116 + $0x98] sm:$0xf]
        %v162 = vld [vmem:[%s116 + $0x9c] sm:$0xff]
        %v163 = vld [vmem:[%s116 + $0xa4] sm:$0xf]
        %v164 = vld [vmem:[%s116 + $0xa8] sm:$0xff]
        %v165 = vld [vmem:[%s116 + $0xb0] sm:$0xf]
        %v166 = vld [vmem:[%s116 + $0xb4] sm:$0xff]
        %v167 = vld [vmem:[%s116 + $0xbc] sm:$0xf]
        %v168 = vld [vmem:[%s116 + $0xc0] sm:$0xff]
        %v169 = vld [vmem:[%s116 + $0xc8] sm:$0xf]
        %v170 = vld [vmem:[%s116 + $0xcc] sm:$0xff]
        %v171 = vld [vmem:[%s116 + $0xd4] sm:$0xf]
        %v172 = vld [vmem:[%s116 + $0xd8] sm:$0xff]
        %v173 = vld [vmem:[%s116 + $0xe0] sm:$0xf]
        %v174 = vld [vmem:[%s116 + $0xe4] sm:$0xff]
        %v175 = vld [vmem:[%s116 + $0xec] sm:$0xf]
        %v176 = vld [vmem:[%s116 + $0xf0] sm:$0xff]
        %v177 = vld [vmem:[%s116 + $0xf8] sm:$0xf]
        %v178 = vld [vmem:[%s116 + $0xfc] sm:$0xff]
        %v179 = vld [vmem:[%s116 + $0x104] sm:$0xf]
        %v180 = vld [vmem:[%s116 + $0x108] sm:$0xff]
        %v181 = vld [vmem:[%s116 + $0x110] sm:$0xf]
        %v182 = vld [vmem:[%s116 + $0x114] sm:$0xff]
        %v183 = vld [vmem:[%s116 + $0x11c] sm:$0xf]
        %v184 = vld [vmem:[%s116 + $0x120] sm:$0xff]
        %v185 = vld [vmem:[%s116 + $0x128] sm:$0xf]
        %v186 = vld [vmem:[%s116 + $0x12c] sm:$0xff]
        %v187 = vld [vmem:[%s116 + $0x134] sm:$0xf]
        %v188 = vld [vmem:[%s116 + $0x138] sm:$0xff]
        %v189 = vld [vmem:[%s116 + $0x140] sm:$0xf]
        %v190 = vld [vmem:[%s116 + $0x144] sm:$0xff]
        %v191 = vld [vmem:[%s116 + $0x14c] sm:$0xf]
        %v192 = vld [vmem:[%s116 + $0x150] sm:$0xff]
        %v193 = vld [vmem:[%s116 + $0x158] sm:$0xf]
        %v194 = vld [vmem:[%s116 + $0x15c] sm:$0xff]
        %v195 = vld [vmem:[%s116 + $0x164] sm:$0xf]
        %v196 = vld [vmem:[%s116 + $0x168] sm:$0xff]
        %v197 = vld [vmem:[%s116 + $0x170] sm:$0xf]
        %v198 = vld [vmem:[%s116 + $0x174] sm:$0xff]
        %v199 = vld [vmem:[%s116 + $0x17c] sm:$0xf]
        %v232 = vunpack.c.l.b16 %v136
        %v233 = vunpack.c.l.b16 %v138
        %v234 = vunpack.c.l.b16 %v140
        %v235 = vunpack.c.l.b16 %v142
        %v236 = vunpack.c.l.b16 %v144
        %v237 = vunpack.c.l.b16 %v146
        %v238 = vunpack.c.l.b16 %v148
        %v239 = vunpack.c.l.b16 %v150
        %v240 = vunpack.c.l.b16 %v152
        %v241 = vunpack.c.l.b16 %v154
        %v242 = vunpack.c.l.b16 %v156
        %v243 = vunpack.c.l.b16 %v158
        %v244 = vunpack.c.l.b16 %v160
        %v245 = vunpack.c.l.b16 %v162
        %v246 = vunpack.c.l.b16 %v164
        %v247 = vunpack.c.l.b16 %v166
        %v248 = vunpack.c.l.b16 %v168
        %v249 = vunpack.c.l.b16 %v170
        %v250 = vunpack.c.l.b16 %v172
        %v251 = vunpack.c.l.b16 %v174
        %v252 = vunpack.c.l.b16 %v176
        %v253 = vunpack.c.l.b16 %v178
        %v254 = vunpack.c.l.b16 %v180
        %v255 = vunpack.c.l.b16 %v182
        %v256 = vunpack.c.l.b16 %v184
        %v257 = vunpack.c.l.b16 %v186
        %v258 = vunpack.c.l.b16 %v188
        %v259 = vunpack.c.l.b16 %v190
        %v260 = vunpack.c.l.b16 %v192
        %v261 = vunpack.c.l.b16 %v194
        %v262 = vunpack.c.l.b16 %v196
        %v263 = vunpack.c.l.b16 %v198
        %v264 = vpack.c.b16 %v233, %v232
        %v265 = vpack.c.b16 %v235, %v234
        %v266 = vpack.c.b16 %v237, %v236
        %v267 = vpack.c.b16 %v239, %v238
        %v268 = vpack.c.b16 %v241, %v240
        %v269 = vpack.c.b16 %v243, %v242
        %v270 = vpack.c.b16 %v245, %v244
        %v271 = vpack.c.b16 %v247, %v246
        %v272 = vpack.c.b16 %v249, %v248
        %v273 = vpack.c.b16 %v251, %v250
        %v274 = vpack.c.b16 %v253, %v252
        %v275 = vpack.c.b16 %v255, %v254
        %v276 = vpack.c.b16 %v257, %v256
        %v277 = vpack.c.b16 %v259, %v258
        %v278 = vpack.c.b16 %v261, %v260
        %v279 = vpack.c.b16 %v263, %v262
        %v280 = vunpack.c.h.b16 %v136
        %v281 = vunpack.c.h.b16 %v138
        %v282 = vunpack.c.h.b16 %v140
        %v283 = vunpack.c.h.b16 %v142
        %v284 = vunpack.c.h.b16 %v144
        %v285 = vunpack.c.h.b16 %v146
        %v286 = vunpack.c.h.b16 %v148
        %v287 = vunpack.c.h.b16 %v150
        %v288 = vunpack.c.h.b16 %v152
        %v289 = vunpack.c.h.b16 %v154
        %v290 = vunpack.c.h.b16 %v156
        %v291 = vunpack.c.h.b16 %v158
        %v292 = vunpack.c.h.b16 %v160
        %v293 = vunpack.c.h.b16 %v162
        %v294 = vunpack.c.h.b16 %v164
        %v295 = vunpack.c.h.b16 %v166
        %v296 = vunpack.c.h.b16 %v168
        %v297 = vunpack.c.h.b16 %v170
        %v298 = vunpack.c.h.b16 %v172
        %v299 = vunpack.c.h.b16 %v174
        %v300 = vunpack.c.h.b16 %v176
        %v301 = vunpack.c.h.b16 %v178
        %v302 = vunpack.c.h.b16 %v180
        %v303 = vunpack.c.h.b16 %v182
        %v304 = vunpack.c.h.b16 %v184
        %v305 = vunpack.c.h.b16 %v186
        %v306 = vunpack.c.h.b16 %v188
        %v307 = vunpack.c.h.b16 %v190
        %v308 = vunpack.c.h.b16 %v192
        %v309 = vunpack.c.h.b16 %v194
        %v310 = vunpack.c.h.b16 %v196
        %v311 = vunpack.c.h.b16 %v198
        %v312 = vpack.c.b16 %v281, %v280
        %v313 = vpack.c.b16 %v283, %v282
        %v314 = vpack.c.b16 %v285, %v284
        %v315 = vpack.c.b16 %v287, %v286
        %v316 = vpack.c.b16 %v289, %v288
        %v317 = vpack.c.b16 %v291, %v290
        %v318 = vpack.c.b16 %v293, %v292
        %v319 = vpack.c.b16 %v295, %v294
        %v320 = vpack.c.b16 %v297, %v296
        %v321 = vpack.c.b16 %v299, %v298
        %v322 = vpack.c.b16 %v301, %v300
        %v323 = vpack.c.b16 %v303, %v302
        %v324 = vpack.c.b16 %v305, %v304
        %v325 = vpack.c.b16 %v307, %v306
        %v326 = vpack.c.b16 %v309, %v308
        %v327 = vpack.c.b16 %v311, %v310
        %vm328 = vcmask 261120
        %v330 = vsel %vm328, %v264, 0
        %v333 = vsel %vm328, %v265, 0
        %v336 = vsel %vm328, %v266, 0
        %v339 = vsel %vm328, %v267, 0
        %v342 = vsel %vm328, %v268, 0
        %v345 = vsel %vm328, %v269, 0
        %v348 = vsel %vm328, %v270, 0
        %v351 = vsel %vm328, %v271, 0
        %v354 = vsel %vm328, %v272, 0
        %v357 = vsel %vm328, %v273, 0
        %v360 = vsel %vm328, %v274, 0
        %v363 = vsel %vm328, %v275, 0
        %v366 = vsel %vm328, %v276, 0
        %v369 = vsel %vm328, %v277, 0
        %v372 = vsel %vm328, %v278, 0
        %v375 = vsel %vm328, %v279, 0
        %v378 = vsel %vm328, %v312, 0
        %v381 = vsel %vm328, %v313, 0
        %v384 = vsel %vm328, %v314, 0
        %v387 = vsel %vm328, %v315, 0
        %v390 = vsel %vm328, %v316, 0
        %v393 = vsel %vm328, %v317, 0
        %v396 = vsel %vm328, %v318, 0
        %v399 = vsel %vm328, %v319, 0
        %v402 = vsel %vm328, %v320, 0
        %v405 = vsel %vm328, %v321, 0
        %v408 = vsel %vm328, %v322, 0
        %v411 = vsel %vm328, %v323, 0
        %v414 = vsel %vm328, %v324, 0
        %v417 = vsel %vm328, %v325, 0
        %v420 = vsel %vm328, %v326, 0
        %v423 = vsel %vm328, %v327, 0
        %425 = vmatprep.subr.bf16.mxu0 0
        %426 = vmatpush1.bf16.xpose.msra.mxu0 %v378
        %427 = vmatprep.subr.bf16.mxu0 0
        %428 = vmatpush1.bf16.xpose.msra.mxu0 %v381
        %429 = vmatprep.subr.bf16.mxu0 0
        %430 = vmatpush1.bf16.xpose.msra.mxu0 %v384
        %431 = vmatprep.subr.bf16.mxu0 0
        %432 = vmatpush1.bf16.xpose.msra.mxu0 %v387
        %433 = vmatprep.subr.bf16.mxu0 0
        %434 = vmatpush1.bf16.xpose.msra.mxu0 %v390
        %435 = vmatprep.subr.bf16.mxu0 0
        %436 = vmatpush1.bf16.xpose.msra.mxu0 %v393
        %437 = vmatprep.subr.bf16.mxu0 0
        %438 = vmatpush1.bf16.xpose.msra.mxu0 %v396
        %439 = vmatprep.subr.bf16.mxu0 0
        %440 = vmatpush1.bf16.xpose.msra.mxu0 %v399
        %441 = vmatprep.subr.bf16.mxu0 0
        %442 = vmatpush1.bf16.xpose.msra.mxu0 %v402
        %443 = vmatprep.subr.bf16.mxu0 0
        %444 = vmatpush1.bf16.xpose.msra.mxu0 %v405
        %445 = vmatprep.subr.bf16.mxu0 0
        %446 = vmatpush1.bf16.xpose.msra.mxu0 %v408
        %447 = vmatprep.subr.bf16.mxu0 0
        %448 = vmatpush1.bf16.xpose.msra.mxu0 %v411
        %449 = vmatprep.subr.bf16.mxu0 0
        %450 = vmatpush1.bf16.xpose.msra.mxu0 %v414
        %451 = vmatprep.subr.bf16.mxu0 0
        %452 = vmatpush1.bf16.xpose.msra.mxu0 %v417
        %453 = vmatprep.subr.bf16.mxu0 0
        %454 = vmatpush1.bf16.xpose.msra.mxu0 %v420
        %455 = vmatprep.subr.bf16.mxu0 0
        %456 = vmatpush1.bf16.xpose.msra.mxu0 %v423
        %457 = vmatprep.mubr.bf16.mxu0 0
        %458 = vmatmul.mubr.bf16.gmra.mrb[0].mxu0 %v330
        %v459 = vpop.f32.mrb[0].mxu0
        %v460 = vadd.f32 0.0, %v459
        %v461 = vpop.f32.mrb[0].mxu0
        %v462 = vadd.f32 0.0, %v461
        %v463 = vpop.f32.mrb[0].mxu0
        %v464 = vadd.f32 0.0, %v463
        %v465 = vpop.f32.mrb[0].mxu0
        %v466 = vadd.f32 0.0, %v465
        %467 = vmatprep.mubr.bf16.mxu0 0
        %468 = vmatmul.mubr.bf16.gmra.mrb[0].mxu0 %v333
        %v469 = vpop.f32.mrb[0].mxu0
        %v470 = vadd.f32 0.0, %v469
        %v471 = vpop.f32.mrb[0].mxu0
        %v472 = vadd.f32 0.0, %v471
        %v473 = vpop.f32.mrb[0].mxu0
        %v474 = vadd.f32 0.0, %v473
        %v475 = vpop.f32.mrb[0].mxu0
        %v476 = vadd.f32 0.0, %v475
        %477 = vmatprep.mubr.bf16.mxu0 0
        %478 = vmatmul.mubr.bf16.gmra.mrb[0].mxu0 %v336
        %v479 = vpop.f32.mrb[0].mxu0
        %v480 = vadd.f32 0.0, %v479
        %v481 = vpop.f32.mrb[0].mxu0
        %v482 = vadd.f32 0.0, %v481
        %v483 = vpop.f32.mrb[0].mxu0
        %v484 = vadd.f32 0.0, %v483
        %v485 = vpop.f32.mrb[0].mxu0
        %v486 = vadd.f32 0.0, %v485
        %487 = vmatprep.mubr.bf16.mxu0 0
        %488 = vmatmul.mubr.bf16.gmra.mrb[0].mxu0 %v339
        %v489 = vpop.f32.mrb[0].mxu0
        %v490 = vadd.f32 0.0, %v489
        %v491 = vpop.f32.mrb[0].mxu0
        %v492 = vadd.f32 0.0, %v491
        %v493 = vpop.f32.mrb[0].mxu0
        %v494 = vadd.f32 0.0, %v493
        %v495 = vpop.f32.mrb[0].mxu0
        %v496 = vadd.f32 0.0, %v495
        %497 = vmatprep.mubr.bf16.mxu0 0
        %498 = vmatmul.mubr.bf16.gmra.mrb[0].mxu0 %v342
        %v499 = vpop.f32.mrb[0].mxu0
        %v500 = vadd.f32 0.0, %v499
        %v501 = vpop.f32.mrb[0].mxu0
        %v502 = vadd.f32 0.0, %v501
        %v503 = vpop.f32.mrb[0].mxu0
        %v504 = vadd.f32 0.0, %v503
        %v505 = vpop.f32.mrb[0].mxu0
        %v506 = vadd.f32 0.0, %v505
        %507 = vmatprep.mubr.bf16.mxu0 0
        %508 = vmatmul.mubr.bf16.gmra.mrb[0].mxu0 %v345
        %v509 = vpop.f32.mrb[0].mxu0
        %v510 = vadd.f32 0.0, %v509
        %v511 = vpop.f32.mrb[0].mxu0
        %v512 = vadd.f32 0.0, %v511
        %v513 = vpop.f32.mrb[0].mxu0
        %v514 = vadd.f32 0.0, %v513
        %v515 = vpop.f32.mrb[0].mxu0
        %v516 = vadd.f32 0.0, %v515
        %517 = vmatprep.mubr.bf16.mxu0 0
        %518 = vmatmul.mubr.bf16.gmra.mrb[0].mxu0 %v348
        %v519 = vpop.f32.mrb[0].mxu0
        %v520 = vadd.f32 0.0, %v519
        %v521 = vpop.f32.mrb[0].mxu0
        %v522 = vadd.f32 0.0, %v521
        %v523 = vpop.f32.mrb[0].mxu0
        %v524 = vadd.f32 0.0, %v523
        %v525 = vpop.f32.mrb[0].mxu0
        %v526 = vadd.f32 0.0, %v525
        %527 = vmatprep.mubr.bf16.mxu0 0
        %528 = vmatmul.mubr.bf16.gmra.mrb[0].mxu0 %v351
        %v529 = vpop.f32.mrb[0].mxu0
        %v530 = vadd.f32 0.0, %v529
        %v531 = vpop.f32.mrb[0].mxu0
        %v532 = vadd.f32 0.0, %v531
        %v533 = vpop.f32.mrb[0].mxu0
        %v534 = vadd.f32 0.0, %v533
        %v535 = vpop.f32.mrb[0].mxu0
        %v536 = vadd.f32 0.0, %v535
        %537 = vmatprep.mubr.bf16.mxu0 0
        %538 = vmatmul.mubr.bf16.gmra.mrb[0].mxu0 %v354
        %v539 = vpop.f32.mrb[0].mxu0
        %v540 = vadd.f32 0.0, %v539
        %v541 = vpop.f32.mrb[0].mxu0
        %v542 = vadd.f32 0.0, %v541
        %v543 = vpop.f32.mrb[0].mxu0
        %v544 = vadd.f32 0.0, %v543
        %v545 = vpop.f32.mrb[0].mxu0
        %v546 = vadd.f32 0.0, %v545
        %547 = vmatprep.mubr.bf16.mxu0 0
        %548 = vmatmul.mubr.bf16.gmra.mrb[0].mxu0 %v357
        %v549 = vpop.f32.mrb[0].mxu0
        %v550 = vadd.f32 0.0, %v549
        %v551 = vpop.f32.mrb[0].mxu0
        %v552 = vadd.f32 0.0, %v551
        %v553 = vpop.f32.mrb[0].mxu0
        %v554 = vadd.f32 0.0, %v553
        %v555 = vpop.f32.mrb[0].mxu0
        %v556 = vadd.f32 0.0, %v555
        %557 = vmatprep.mubr.bf16.mxu0 0
        %558 = vmatmul.mubr.bf16.gmra.mrb[0].mxu0 %v360
        %v559 = vpop.f32.mrb[0].mxu0
        %v560 = vadd.f32 0.0, %v559
        %v561 = vpop.f32.mrb[0].mxu0
        %v562 = vadd.f32 0.0, %v561
        %v563 = vpop.f32.mrb[0].mxu0
        %v564 = vadd.f32 0.0, %v563
        %v565 = vpop.f32.mrb[0].mxu0
        %v566 = vadd.f32 0.0, %v565
        %567 = vmatprep.mubr.bf16.mxu0 0
        %568 = vmatmul.mubr.bf16.gmra.mrb[0].mxu0 %v363
        %v569 = vpop.f32.mrb[0].mxu0
        %v570 = vadd.f32 0.0, %v569
        %v571 = vpop.f32.mrb[0].mxu0
        %v572 = vadd.f32 0.0, %v571
        %v573 = vpop.f32.mrb[0].mxu0
        %v574 = vadd.f32 0.0, %v573
        %v575 = vpop.f32.mrb[0].mxu0
        %v576 = vadd.f32 0.0, %v575
        %577 = vmatprep.mubr.bf16.mxu0 0
        %578 = vmatmul.mubr.bf16.gmra.mrb[0].mxu0 %v366
        %v579 = vpop.f32.mrb[0].mxu0
        %v580 = vadd.f32 0.0, %v579
        %v581 = vpop.f32.mrb[0].mxu0
        %v582 = vadd.f32 0.0, %v581
        %v583 = vpop.f32.mrb[0].mxu0
        %v584 = vadd.f32 0.0, %v583
        %v585 = vpop.f32.mrb[0].mxu0
        %v586 = vadd.f32 0.0, %v585
        %587 = vmatprep.mubr.bf16.mxu0 0
        %588 = vmatmul.mubr.bf16.gmra.mrb[0].mxu0 %v369
        %v589 = vpop.f32.mrb[0].mxu0
        %v590 = vadd.f32 0.0, %v589
        %v591 = vpop.f32.mrb[0].mxu0
        %v592 = vadd.f32 0.0, %v591
        %v593 = vpop.f32.mrb[0].mxu0
        %v594 = vadd.f32 0.0, %v593
        %v595 = vpop.f32.mrb[0].mxu0
        %v596 = vadd.f32 0.0, %v595
        %597 = vmatprep.mubr.bf16.mxu0 0
        %598 = vmatmul.mubr.bf16.gmra.mrb[0].mxu0 %v372
        %v599 = vpop.f32.mrb[0].mxu0
        %v600 = vadd.f32 0.0, %v599
        %v601 = vpop.f32.mrb[0].mxu0
        %v602 = vadd.f32 0.0, %v601
        %v603 = vpop.f32.mrb[0].mxu0
        %v604 = vadd.f32 0.0, %v603
        %v605 = vpop.f32.mrb[0].mxu0
        %v606 = vadd.f32 0.0, %v605
        %607 = vmatprep.mubr.bf16.mxu0 0
        %608 = vmatmul.mubr.bf16.gmra.mrb[0].mxu0 %v375
        %v609 = vpop.f32.mrb[0].mxu0
        %v610 = vadd.f32 0.0, %v609
        %v611 = vpop.f32.mrb[0].mxu0
        %v612 = vadd.f32 0.0, %v611
        %v613 = vpop.f32.mrb[0].mxu0
        %v614 = vadd.f32 0.0, %v613
        %v615 = vpop.f32.mrb[0].mxu0
        %v616 = vadd.f32 0.0, %v615
        %617 = vdwg.mxu0
        %v618 = vmax.f32 %v460, %v462
        %619 = vmax.xlane.f32.xlu0 %v618
        %v620 = vpop.xlane.xlu0 %619
        %v621 = vmax.f32 %v464, %v466
        %622 = vmax.xlane.f32.xlu0 %v621
        %v623 = vpop.xlane.xlu0 %622
        %v624 = vmax.f32 %v470, %v472
        %625 = vmax.xlane.f32.xlu0 %v624
        %v626 = vpop.xlane.xlu0 %625
        %v627 = vmax.f32 %v474, %v476
        %628 = vmax.xlane.f32.xlu0 %v627
        %v629 = vpop.xlane.xlu0 %628
        %v630 = vmax.f32 %v480, %v482
        %631 = vmax.xlane.f32.xlu0 %v630
        %v632 = vpop.xlane.xlu0 %631
        %v633 = vmax.f32 %v484, %v486
        %634 = vmax.xlane.f32.xlu0 %v633
        %v635 = vpop.xlane.xlu0 %634
        %v636 = vmax.f32 %v490, %v492
        %637 = vmax.xlane.f32.xlu0 %v636
        %v638 = vpop.xlane.xlu0 %637
        %v639 = vmax.f32 %v494, %v496
        %640 = vmax.xlane.f32.xlu0 %v639
        %v641 = vpop.xlane.xlu0 %640
        %v642 = vmax.f32 %v500, %v502
        %643 = vmax.xlane.f32.xlu0 %v642
        %v644 = vpop.xlane.xlu0 %643
        %v645 = vmax.f32 %v504, %v506
        %646 = vmax.xlane.f32.xlu0 %v645
        %v647 = vpop.xlane.xlu0 %646
        %v648 = vmax.f32 %v510, %v512
        %649 = vmax.xlane.f32.xlu0 %v648
        %v650 = vpop.xlane.xlu0 %649
        %v651 = vmax.f32 %v514, %v516
        %652 = vmax.xlane.f32.xlu0 %v651
        %v653 = vpop.xlane.xlu0 %652
        %v654 = vmax.f32 %v520, %v522
        %655 = vmax.xlane.f32.xlu0 %v654
        %v656 = vpop.xlane.xlu0 %655
        %v657 = vmax.f32 %v524, %v526
        %658 = vmax.xlane.f32.xlu0 %v657
        %v659 = vpop.xlane.xlu0 %658
        %v660 = vmax.f32 %v530, %v532
        %661 = vmax.xlane.f32.xlu0 %v660
        %v662 = vpop.xlane.xlu0 %661
        %v663 = vmax.f32 %v534, %v536
        %664 = vmax.xlane.f32.xlu0 %v663
        %v665 = vpop.xlane.xlu0 %664
        %v666 = vmax.f32 %v540, %v542
        %667 = vmax.xlane.f32.xlu0 %v666
        %v668 = vpop.xlane.xlu0 %667
        %v669 = vmax.f32 %v544, %v546
        %670 = vmax.xlane.f32.xlu0 %v669
        %v671 = vpop.xlane.xlu0 %670
        %v672 = vmax.f32 %v550, %v552
        %673 = vmax.xlane.f32.xlu0 %v672
        %v674 = vpop.xlane.xlu0 %673
        %v675 = vmax.f32 %v554, %v556
        %676 = vmax.xlane.f32.xlu0 %v675
        %v677 = vpop.xlane.xlu0 %676
        %v678 = vmax.f32 %v560, %v562
        %679 = vmax.xlane.f32.xlu0 %v678
        %v680 = vpop.xlane.xlu0 %679
        %v681 = vmax.f32 %v564, %v566
        %682 = vmax.xlane.f32.xlu0 %v681
        %v683 = vpop.xlane.xlu0 %682
        %v684 = vmax.f32 %v570, %v572
        %685 = vmax.xlane.f32.xlu0 %v684
        %v686 = vpop.xlane.xlu0 %685
        %v687 = vmax.f32 %v574, %v576
        %688 = vmax.xlane.f32.xlu0 %v687
        %v689 = vpop.xlane.xlu0 %688
        %v690 = vmax.f32 %v580, %v582
        %691 = vmax.xlane.f32.xlu0 %v690
        %v692 = vpop.xlane.xlu0 %691
        %v693 = vmax.f32 %v584, %v586
        %694 = vmax.xlane.f32.xlu0 %v693
        %v695 = vpop.xlane.xlu0 %694
        %v696 = vmax.f32 %v590, %v592
        %697 = vmax.xlane.f32.xlu0 %v696
        %v698 = vpop.xlane.xlu0 %697
        %v699 = vmax.f32 %v594, %v596
        %700 = vmax.xlane.f32.xlu0 %v699
        %v701 = vpop.xlane.xlu0 %700
        %v702 = vmax.f32 %v600, %v602
        %703 = vmax.xlane.f32.xlu0 %v702
        %v704 = vpop.xlane.xlu0 %703
        %v705 = vmax.f32 %v604, %v606
        %706 = vmax.xlane.f32.xlu0 %v705
        %v707 = vpop.xlane.xlu0 %706
        %v708 = vmax.f32 %v610, %v612
        %709 = vmax.xlane.f32.xlu0 %v708
        %v710 = vpop.xlane.xlu0 %709
        %v711 = vmax.f32 %v614, %v616
        %712 = vmax.xlane.f32.xlu0 %v711
        %v713 = vpop.xlane.xlu0 %712
        %v714 = vsub.f32 %v460, %v620
        %v715 = vsub.f32 %v462, %v620
        %v716 = vsub.f32 %v464, %v623
        %v717 = vsub.f32 %v466, %v623
        %v718 = vsub.f32 %v470, %v626
        %v719 = vsub.f32 %v472, %v626
        %v720 = vsub.f32 %v474, %v629
        %v721 = vsub.f32 %v476, %v629
        %v722 = vsub.f32 %v480, %v632
        %v723 = vsub.f32 %v482, %v632
        %v724 = vsub.f32 %v484, %v635
        %v725 = vsub.f32 %v486, %v635
        %v726 = vsub.f32 %v490, %v638
        %v727 = vsub.f32 %v492, %v638
        %v728 = vsub.f32 %v494, %v641
        %v729 = vsub.f32 %v496, %v641
        %v730 = vsub.f32 %v500, %v644
        %v731 = vsub.f32 %v502, %v644
        %v732 = vsub.f32 %v504, %v647
        %v733 = vsub.f32 %v506, %v647
        %v734 = vsub.f32 %v510, %v650
        %v735 = vsub.f32 %v512, %v650
        %v736 = vsub.f32 %v514, %v653
        %v737 = vsub.f32 %v516, %v653
        %v738 = vsub.f32 %v520, %v656
        %v739 = vsub.f32 %v522, %v656
        %v740 = vsub.f32 %v524, %v659
        %v741 = vsub.f32 %v526, %v659
        %v742 = vsub.f32 %v530, %v662
        %v743 = vsub.f32 %v532, %v662
        %v744 = vsub.f32 %v534, %v665
        %v745 = vsub.f32 %v536, %v665
        %v746 = vsub.f32 %v540, %v668
        %v747 = vsub.f32 %v542, %v668
        %v748 = vsub.f32 %v544, %v671
        %v749 = vsub.f32 %v546, %v671
        %v750 = vsub.f32 %v550, %v674
        %v751 = vsub.f32 %v552, %v674
        %v752 = vsub.f32 %v554, %v677
        %v753 = vsub.f32 %v556, %v677
        %v754 = vsub.f32 %v560, %v680
        %v755 = vsub.f32 %v562, %v680
        %v756 = vsub.f32 %v564, %v683
        %v757 = vsub.f32 %v566, %v683
        %v758 = vsub.f32 %v570, %v686
        %v759 = vsub.f32 %v572, %v686
        %v760 = vsub.f32 %v574, %v689
        %v761 = vsub.f32 %v576, %v689
        %v762 = vsub.f32 %v580, %v692
        %v763 = vsub.f32 %v582, %v692
        %v764 = vsub.f32 %v584, %v695
        %v765 = vsub.f32 %v586, %v695
        %v766 = vsub.f32 %v590, %v698
        %v767 = vsub.f32 %v592, %v698
        %v768 = vsub.f32 %v594, %v701
        %v769 = vsub.f32 %v596, %v701
        %v770 = vsub.f32 %v600, %v704
        %v771 = vsub.f32 %v602, %v704
        %v772 = vsub.f32 %v604, %v707
        %v773 = vsub.f32 %v606, %v707
        %v774 = vsub.f32 %v610, %v710
        %v775 = vsub.f32 %v612, %v710
        %v776 = vsub.f32 %v614, %v713
        %v777 = vsub.f32 %v616, %v713
        %v778 = vmul.f32 %v714, 1.442695
        %v779 = vpow.pop %v778
        %v780 = vmul.f32 %v715, 1.442695
        %v781 = vpow.pop %v780
        %v782 = vmul.f32 %v716, 1.442695
        %v783 = vpow.pop %v782
        %v784 = vmul.f32 %v717, 1.442695
        %v785 = vpow.pop %v784
        %v786 = vmul.f32 %v718, 1.442695
        %v787 = vpow.pop %v786
        %v788 = vmul.f32 %v719, 1.442695
        %v789 = vpow.pop %v788
        %v790 = vmul.f32 %v720, 1.442695
        %v791 = vpow.pop %v790
        %v792 = vmul.f32 %v721, 1.442695
        %v793 = vpow.pop %v792
        %v794 = vmul.f32 %v722, 1.442695
        %v795 = vpow.pop %v794
        %v796 = vmul.f32 %v723, 1.442695
        %v797 = vpow.pop %v796
        %v798 = vmul.f32 %v724, 1.442695
        %v799 = vpow.pop %v798
        %v800 = vmul.f32 %v725, 1.442695
        %v801 = vpow.pop %v800
        %v802 = vmul.f32 %v726, 1.442695
        %v803 = vpow.pop %v802
        %v804 = vmul.f32 %v727, 1.442695
        %v805 = vpow.pop %v804
        %v806 = vmul.f32 %v728, 1.442695
        %v807 = vpow.pop %v806
        %v808 = vmul.f32 %v729, 1.442695
        %v809 = vpow.pop %v808
        %v810 = vmul.f32 %v730, 1.442695
        %v811 = vpow.pop %v810
        %v812 = vmul.f32 %v731, 1.442695
        %v813 = vpow.pop %v812
        %v814 = vmul.f32 %v732, 1.442695
        %v815 = vpow.pop %v814
        %v816 = vmul.f32 %v733, 1.442695
        %v817 = vpow.pop %v816
        %v818 = vmul.f32 %v734, 1.442695
        %v819 = vpow.pop %v818
        %v820 = vmul.f32 %v735, 1.442695
        %v821 = vpow.pop %v820
        %v822 = vmul.f32 %v736, 1.442695
        %v823 = vpow.pop %v822
        %v824 = vmul.f32 %v737, 1.442695
        %v825 = vpow.pop %v824
        %v826 = vmul.f32 %v738, 1.442695
        %v827 = vpow.pop %v826
        %v828 = vmul.f32 %v739, 1.442695
        %v829 = vpow.pop %v828
        %v830 = vmul.f32 %v740, 1.442695
        %v831 = vpow.pop %v830
        %v832 = vmul.f32 %v741, 1.442695
        %v833 = vpow.pop %v832
        %v834 = vmul.f32 %v742, 1.442695
        %v835 = vpow.pop %v834
        %v836 = vmul.f32 %v743, 1.442695
        %v837 = vpow.pop %v836
        %v838 = vmul.f32 %v744, 1.442695
        %v839 = vpow.pop %v838
        %v840 = vmul.f32 %v745, 1.442695
        %v841 = vpow.pop %v840
        %v842 = vmul.f32 %v746, 1.442695
        %v843 = vpow.pop %v842
        %v844 = vmul.f32 %v747, 1.442695
        %v845 = vpow.pop %v844
        %v846 = vmul.f32 %v748, 1.442695
        %v847 = vpow.pop %v846
        %v848 = vmul.f32 %v749, 1.442695
        %v849 = vpow.pop %v848
        %v850 = vmul.f32 %v750, 1.442695
        %v851 = vpow.pop %v850
        %v852 = vmul.f32 %v751, 1.442695
        %v853 = vpow.pop %v852
        %v854 = vmul.f32 %v752, 1.442695
        %v855 = vpow.pop %v854
        %v856 = vmul.f32 %v753, 1.442695
        %v857 = vpow.pop %v856
        %v858 = vmul.f32 %v754, 1.442695
        %v859 = vpow.pop %v858
        %v860 = vmul.f32 %v755, 1.442695
        %v861 = vpow.pop %v860
        %v862 = vmul.f32 %v756, 1.442695
        %v863 = vpow.pop %v862
        %v864 = vmul.f32 %v757, 1.442695
        %v865 = vpow.pop %v864
        %v866 = vmul.f32 %v758, 1.442695
        %v867 = vpow.pop %v866
        %v868 = vmul.f32 %v759, 1.442695
        %v869 = vpow.pop %v868
        %v870 = vmul.f32 %v760, 1.442695
        %v871 = vpow.pop %v870
        %v872 = vmul.f32 %v761, 1.442695
        %v873 = vpow.pop %v872
        %v874 = vmul.f32 %v762, 1.442695
        %v875 = vpow.pop %v874
        %v876 = vmul.f32 %v763, 1.442695
        %v877 = vpow.pop %v876
        %v878 = vmul.f32 %v764, 1.442695
        %v879 = vpow.pop %v878
        %v880 = vmul.f32 %v765, 1.442695
        %v881 = vpow.pop %v880
        %v882 = vmul.f32 %v766, 1.442695
        %v883 = vpow.pop %v882
        %v884 = vmul.f32 %v767, 1.442695
        %v885 = vpow.pop %v884
        %v886 = vmul.f32 %v768, 1.442695
        %v887 = vpow.pop %v886
        %v888 = vmul.f32 %v769, 1.442695
        %v889 = vpow.pop %v888
        %v890 = vmul.f32 %v770, 1.442695
        %v891 = vpow.pop %v890
        %v892 = vmul.f32 %v771, 1.442695
        %v893 = vpow.pop %v892
        %v894 = vmul.f32 %v772, 1.442695
        %v895 = vpow.pop %v894
        %v896 = vmul.f32 %v773, 1.442695
        %v897 = vpow.pop %v896
        %v898 = vmul.f32 %v774, 1.442695
        %v899 = vpow.pop %v898
        %v900 = vmul.f32 %v775, 1.442695
        %v901 = vpow.pop %v900
        %v902 = vmul.f32 %v776, 1.442695
        %v903 = vpow.pop %v902
        %v904 = vmul.f32 %v777, 1.442695
        %v905 = vpow.pop %v904
        %v906 = vadd.f32 %v779, %v781
        %907 = vadd.xlane.f32.xlu0 %v906
        %v908 = vpop.xlane.xlu0 %907
        %v909 = vadd.f32 %v783, %v785
        %910 = vadd.xlane.f32.xlu0 %v909
        %v911 = vpop.xlane.xlu0 %910
        %v912 = vadd.f32 %v787, %v789
        %913 = vadd.xlane.f32.xlu0 %v912
        %v914 = vpop.xlane.xlu0 %913
        %v915 = vadd.f32 %v791, %v793
        %916 = vadd.xlane.f32.xlu0 %v915
        %v917 = vpop.xlane.xlu0 %916
        %v918 = vadd.f32 %v795, %v797
        %919 = vadd.xlane.f32.xlu0 %v918
        %v920 = vpop.xlane.xlu0 %919
        %v921 = vadd.f32 %v799, %v801
        %922 = vadd.xlane.f32.xlu0 %v921
        %v923 = vpop.xlane.xlu0 %922
        %v924 = vadd.f32 %v803, %v805
        %925 = vadd.xlane.f32.xlu0 %v924
        %v926 = vpop.xlane.xlu0 %925
        %v927 = vadd.f32 %v807, %v809
        %928 = vadd.xlane.f32.xlu0 %v927
        %v929 = vpop.xlane.xlu0 %928
        %v930 = vadd.f32 %v811, %v813
        %931 = vadd.xlane.f32.xlu0 %v930
        %v932 = vpop.xlane.xlu0 %931
        %v933 = vadd.f32 %v815, %v817
        %934 = vadd.xlane.f32.xlu0 %v933
        %v935 = vpop.xlane.xlu0 %934
        %v936 = vadd.f32 %v819, %v821
        %937 = vadd.xlane.f32.xlu0 %v936
        %v938 = vpop.xlane.xlu0 %937
        %v939 = vadd.f32 %v823, %v825
        %940 = vadd.xlane.f32.xlu0 %v939
        %v941 = vpop.xlane.xlu0 %940
        %v942 = vadd.f32 %v827, %v829
        %943 = vadd.xlane.f32.xlu0 %v942
        %v944 = vpop.xlane.xlu0 %943
        %v945 = vadd.f32 %v831, %v833
        %946 = vadd.xlane.f32.xlu0 %v945
        %v947 = vpop.xlane.xlu0 %946
        %v948 = vadd.f32 %v835, %v837
        %949 = vadd.xlane.f32.xlu0 %v948
        %v950 = vpop.xlane.xlu0 %949
        %v951 = vadd.f32 %v839, %v841
        %952 = vadd.xlane.f32.xlu0 %v951
        %v953 = vpop.xlane.xlu0 %952
        %v954 = vadd.f32 %v843, %v845
        %955 = vadd.xlane.f32.xlu0 %v954
        %v956 = vpop.xlane.xlu0 %955
        %v957 = vadd.f32 %v847, %v849
        %958 = vadd.xlane.f32.xlu0 %v957
        %v959 = vpop.xlane.xlu0 %958
        %v960 = vadd.f32 %v851, %v853
        %961 = vadd.xlane.f32.xlu0 %v960
        %v962 = vpop.xlane.xlu0 %961
        %v963 = vadd.f32 %v855, %v857
        %964 = vadd.xlane.f32.xlu0 %v963
        %v965 = vpop.xlane.xlu0 %964
        %v966 = vadd.f32 %v859, %v861
        %967 = vadd.xlane.f32.xlu0 %v966
        %v968 = vpop.xlane.xlu0 %967
        %v969 = vadd.f32 %v863, %v865
        %970 = vadd.xlane.f32.xlu0 %v969
        %v971 = vpop.xlane.xlu0 %970
        %v972 = vadd.f32 %v867, %v869
        %973 = vadd.xlane.f32.xlu0 %v972
        %v974 = vpop.xlane.xlu0 %973
        %v975 = vadd.f32 %v871, %v873
        %976 = vadd.xlane.f32.xlu0 %v975
        %v977 = vpop.xlane.xlu0 %976
        %v978 = vadd.f32 %v875, %v877
        %979 = vadd.xlane.f32.xlu0 %v978
        %v980 = vpop.xlane.xlu0 %979
        %v981 = vadd.f32 %v879, %v881
        %982 = vadd.xlane.f32.xlu0 %v981
        %v983 = vpop.xlane.xlu0 %982
        %v984 = vadd.f32 %v883, %v885
        %985 = vadd.xlane.f32.xlu0 %v984
        %v986 = vpop.xlane.xlu0 %985
        %v987 = vadd.f32 %v887, %v889
        %988 = vadd.xlane.f32.xlu0 %v987
        %v989 = vpop.xlane.xlu0 %988
        %v990 = vadd.f32 %v891, %v893
        %991 = vadd.xlane.f32.xlu0 %v990
        %v992 = vpop.xlane.xlu0 %991
        %v993 = vadd.f32 %v895, %v897
        %994 = vadd.xlane.f32.xlu0 %v993
        %v995 = vpop.xlane.xlu0 %994
        %v996 = vadd.f32 %v899, %v901
        %997 = vadd.xlane.f32.xlu0 %v996
        %v998 = vpop.xlane.xlu0 %997
        %v999 = vadd.f32 %v903, %v905
        %1000 = vadd.xlane.f32.xlu0 %v999
        %v1001 = vpop.xlane.xlu0 %1000
        %v1002 = vpack.c.bf16 %v783, %v779
        %v1003 = vpack.c.bf16 %v785, %v781
        %v1004 = vpack.c.bf16 %v791, %v787
        %v1005 = vpack.c.bf16 %v793, %v789
        %v1006 = vpack.c.bf16 %v799, %v795
        %v1007 = vpack.c.bf16 %v801, %v797
        %v1008 = vpack.c.bf16 %v807, %v803
        %v1009 = vpack.c.bf16 %v809, %v805
        %v1010 = vpack.c.bf16 %v815, %v811
        %v1011 = vpack.c.bf16 %v817, %v813
        %v1012 = vpack.c.bf16 %v823, %v819
        %v1013 = vpack.c.bf16 %v825, %v821
        %v1014 = vpack.c.bf16 %v831, %v827
        %v1015 = vpack.c.bf16 %v833, %v829
        %v1016 = vpack.c.bf16 %v839, %v835
        %v1017 = vpack.c.bf16 %v841, %v837
        %v1018 = vpack.c.bf16 %v847, %v843
        %v1019 = vpack.c.bf16 %v849, %v845
        %v1020 = vpack.c.bf16 %v855, %v851
        %v1021 = vpack.c.bf16 %v857, %v853
        %v1022 = vpack.c.bf16 %v863, %v859
        %v1023 = vpack.c.bf16 %v865, %v861
        %v1024 = vpack.c.bf16 %v871, %v867
        %v1025 = vpack.c.bf16 %v873, %v869
        %v1026 = vpack.c.bf16 %v879, %v875
        %v1027 = vpack.c.bf16 %v881, %v877
        %v1028 = vpack.c.bf16 %v887, %v883
        %v1029 = vpack.c.bf16 %v889, %v885
        %v1030 = vpack.c.bf16 %v895, %v891
        %v1031 = vpack.c.bf16 %v897, %v893
        %v1032 = vpack.c.bf16 %v903, %v899
        %v1033 = vpack.c.bf16 %v905, %v901
        %v1066 = vunpack.c.l.b16 %v137
        %v1067 = vunpack.c.l.b16 %v139
        %v1068 = vunpack.c.l.b16 %v141
        %v1069 = vunpack.c.l.b16 %v143
        %v1070 = vunpack.c.l.b16 %v145
        %v1071 = vunpack.c.l.b16 %v147
        %v1072 = vunpack.c.l.b16 %v149
        %v1073 = vunpack.c.l.b16 %v151
        %v1074 = vunpack.c.l.b16 %v153
        %v1075 = vunpack.c.l.b16 %v155
        %v1076 = vunpack.c.l.b16 %v157
        %v1077 = vunpack.c.l.b16 %v159
        %v1078 = vunpack.c.l.b16 %v161
        %v1079 = vunpack.c.l.b16 %v163
        %v1080 = vunpack.c.l.b16 %v165
        %v1081 = vunpack.c.l.b16 %v167
        %v1082 = vunpack.c.l.b16 %v169
        %v1083 = vunpack.c.l.b16 %v171
        %v1084 = vunpack.c.l.b16 %v173
        %v1085 = vunpack.c.l.b16 %v175
        %v1086 = vunpack.c.l.b16 %v177
        %v1087 = vunpack.c.l.b16 %v179
        %v1088 = vunpack.c.l.b16 %v181
        %v1089 = vunpack.c.l.b16 %v183
        %v1090 = vunpack.c.l.b16 %v185
        %v1091 = vunpack.c.l.b16 %v187
        %v1092 = vunpack.c.l.b16 %v189
        %v1093 = vunpack.c.l.b16 %v191
        %v1094 = vunpack.c.l.b16 %v193
        %v1095 = vunpack.c.l.b16 %v195
        %v1096 = vunpack.c.l.b16 %v197
        %v1097 = vunpack.c.l.b16 %v199
        %v1098 = vpack.c.b16 %v1067, %v1066
        %v1099 = vpack.c.b16 %v1069, %v1068
        %v1100 = vpack.c.b16 %v1071, %v1070
        %v1101 = vpack.c.b16 %v1073, %v1072
        %v1102 = vpack.c.b16 %v1075, %v1074
        %v1103 = vpack.c.b16 %v1077, %v1076
        %v1104 = vpack.c.b16 %v1079, %v1078
        %v1105 = vpack.c.b16 %v1081, %v1080
        %v1106 = vpack.c.b16 %v1083, %v1082
        %v1107 = vpack.c.b16 %v1085, %v1084
        %v1108 = vpack.c.b16 %v1087, %v1086
        %v1109 = vpack.c.b16 %v1089, %v1088
        %v1110 = vpack.c.b16 %v1091, %v1090
        %v1111 = vpack.c.b16 %v1093, %v1092
        %v1112 = vpack.c.b16 %v1095, %v1094
        %v1113 = vpack.c.b16 %v1097, %v1096
        %1130 = vmatprep.subr.bf16.mxu0 0
        %1131 = vmatpush1.bf16.msra.mxu0 %v1098
        %1132 = vmatprep.subr.bf16.mxu0 0
        %1133 = vmatpush1.bf16.msra.mxu0 %v1099
        %1134 = vmatprep.subr.bf16.mxu0 0
        %1135 = vmatpush1.bf16.msra.mxu0 %v1100
        %1136 = vmatprep.subr.bf16.mxu0 0
        %1137 = vmatpush1.bf16.msra.mxu0 %v1101
        %1138 = vmatprep.subr.bf16.mxu0 0
        %1139 = vmatpush1.bf16.msra.mxu0 %v1102
        %1140 = vmatprep.subr.bf16.mxu0 0
        %1141 = vmatpush1.bf16.msra.mxu0 %v1103
        %1142 = vmatprep.subr.bf16.mxu0 0
        %1143 = vmatpush1.bf16.msra.mxu0 %v1104
        %1144 = vmatprep.subr.bf16.mxu0 0
        %1145 = vmatpush1.bf16.msra.mxu0 %v1105
        %1146 = vmatprep.subr.bf16.mxu0 0
        %1147 = vmatpush1.bf16.msra.mxu0 %v1106
        %1148 = vmatprep.subr.bf16.mxu0 0
        %1149 = vmatpush1.bf16.msra.mxu0 %v1107
        %1150 = vmatprep.subr.bf16.mxu0 0
        %1151 = vmatpush1.bf16.msra.mxu0 %v1108
        %1152 = vmatprep.subr.bf16.mxu0 0
        %1153 = vmatpush1.bf16.msra.mxu0 %v1109
        %1154 = vmatprep.subr.bf16.mxu0 0
        %1155 = vmatpush1.bf16.msra.mxu0 %v1110
        %1156 = vmatprep.subr.bf16.mxu0 0
        %1157 = vmatpush1.bf16.msra.mxu0 %v1111
        %1158 = vmatprep.subr.bf16.mxu0 0
        %1159 = vmatpush1.bf16.msra.mxu0 %v1112
        %1160 = vmatprep.subr.bf16.mxu0 0
        %1161 = vmatpush1.bf16.msra.mxu0 %v1113
        %1162 = vmatprep.mubr.bf16.mxu0 %v1003
        %1163 = vmatmul.mubr.bf16.gmra.mrb[0].mxu0 %v1002
        %v1164 = vpop.f32.mrb[0].mxu0
        %v1165 = vadd.f32 0.0, %v1164
        %v1166 = vpop.f32.mrb[0].mxu0
        %v1167 = vpop.f32.mrb[0].mxu0
        %v1168 = vadd.f32 0.0, %v1167
        %v1169 = vpop.f32.mrb[0].mxu0
        %1170 = vmatprep.mubr.bf16.mxu0 %v1005
        %1171 = vmatmul.mubr.bf16.gmra.mrb[0].mxu0 %v1004
        %v1172 = vpop.f32.mrb[0].mxu0
        %v1173 = vadd.f32 0.0, %v1172
        %v1174 = vpop.f32.mrb[0].mxu0
        %v1175 = vpop.f32.mrb[0].mxu0
        %v1176 = vadd.f32 0.0, %v1175
        %v1177 = vpop.f32.mrb[0].mxu0
        %1178 = vmatprep.mubr.bf16.mxu0 %v1007
        %1179 = vmatmul.mubr.bf16.gmra.mrb[0].mxu0 %v1006
        %v1180 = vpop.f32.mrb[0].mxu0
        %v1181 = vadd.f32 0.0, %v1180
        %v1182 = vpop.f32.mrb[0].mxu0
        %v1183 = vpop.f32.mrb[0].mxu0
        %v1184 = vadd.f32 0.0, %v1183
        %v1185 = vpop.f32.mrb[0].mxu0
        %1186 = vmatprep.mubr.bf16.mxu0 %v1009
        %1187 = vmatmul.mubr.bf16.gmra.mrb[0].mxu0 %v1008
        %v1188 = vpop.f32.mrb[0].mxu0
        %v1189 = vadd.f32 0.0, %v1188
        %v1190 = vpop.f32.mrb[0].mxu0
        %v1191 = vpop.f32.mrb[0].mxu0
        %v1192 = vadd.f32 0.0, %v1191
        %v1193 = vpop.f32.mrb[0].mxu0
        %1194 = vmatprep.mubr.bf16.mxu0 %v1011
        %1195 = vmatmul.mubr.bf16.gmra.mrb[0].mxu0 %v1010
        %v1196 = vpop.f32.mrb[0].mxu0
        %v1197 = vadd.f32 0.0, %v1196
        %v1198 = vpop.f32.mrb[0].mxu0
        %v1199 = vpop.f32.mrb[0].mxu0
        %v1200 = vadd.f32 0.0, %v1199
        %v1201 = vpop.f32.mrb[0].mxu0
        %1202 = vmatprep.mubr.bf16.mxu0 %v1013
        %1203 = vmatmul.mubr.bf16.gmra.mrb[0].mxu0 %v1012
        %v1204 = vpop.f32.mrb[0].mxu0
        %v1205 = vadd.f32 0.0, %v1204
        %v1206 = vpop.f32.mrb[0].mxu0
        %v1207 = vpop.f32.mrb[0].mxu0
        %v1208 = vadd.f32 0.0, %v1207
        %v1209 = vpop.f32.mrb[0].mxu0
        %1210 = vmatprep.mubr.bf16.mxu0 %v1015
        %1211 = vmatmul.mubr.bf16.gmra.mrb[0].mxu0 %v1014
        %v1212 = vpop.f32.mrb[0].mxu0
        %v1213 = vadd.f32 0.0, %v1212
        %v1214 = vpop.f32.mrb[0].mxu0
        %v1215 = vpop.f32.mrb[0].mxu0
        %v1216 = vadd.f32 0.0, %v1215
        %v1217 = vpop.f32.mrb[0].mxu0
        %1218 = vmatprep.mubr.bf16.mxu0 %v1017
        %1219 = vmatmul.mubr.bf16.gmra.mrb[0].mxu0 %v1016
        %v1220 = vpop.f32.mrb[0].mxu0
        %v1221 = vadd.f32 0.0, %v1220
        %v1222 = vpop.f32.mrb[0].mxu0
        %v1223 = vpop.f32.mrb[0].mxu0
        %v1224 = vadd.f32 0.0, %v1223
        %v1225 = vpop.f32.mrb[0].mxu0
        %1226 = vmatprep.mubr.bf16.mxu0 %v1019
        %1227 = vmatmul.mubr.bf16.gmra.mrb[0].mxu0 %v1018
        %v1228 = vpop.f32.mrb[0].mxu0
        %v1229 = vadd.f32 0.0, %v1228
        %v1230 = vpop.f32.mrb[0].mxu0
        %v1231 = vpop.f32.mrb[0].mxu0
        %v1232 = vadd.f32 0.0, %v1231
        %v1233 = vpop.f32.mrb[0].mxu0
        %1234 = vmatprep.mubr.bf16.mxu0 %v1021
        %1235 = vmatmul.mubr.bf16.gmra.mrb[0].mxu0 %v1020
        %v1236 = vpop.f32.mrb[0].mxu0
        %v1237 = vadd.f32 0.0, %v1236
        %v1238 = vpop.f32.mrb[0].mxu0
        %v1239 = vpop.f32.mrb[0].mxu0
        %v1240 = vadd.f32 0.0, %v1239
        %v1241 = vpop.f32.mrb[0].mxu0
        %1242 = vmatprep.mubr.bf16.mxu0 %v1023
        %1243 = vmatmul.mubr.bf16.gmra.mrb[0].mxu0 %v1022
        %v1244 = vpop.f32.mrb[0].mxu0
        %v1245 = vadd.f32 0.0, %v1244
        %v1246 = vpop.f32.mrb[0].mxu0
        %v1247 = vpop.f32.mrb[0].mxu0
        %v1248 = vadd.f32 0.0, %v1247
        %v1249 = vpop.f32.mrb[0].mxu0
        %1250 = vmatprep.mubr.bf16.mxu0 %v1025
        %1251 = vmatmul.mubr.bf16.gmra.mrb[0].mxu0 %v1024
        %v1252 = vpop.f32.mrb[0].mxu0
        %v1253 = vadd.f32 0.0, %v1252
        %v1254 = vpop.f32.mrb[0].mxu0
        %v1255 = vpop.f32.mrb[0].mxu0
        %v1256 = vadd.f32 0.0, %v1255
        %v1257 = vpop.f32.mrb[0].mxu0
        %1258 = vmatprep.mubr.bf16.mxu0 %v1027
        %1259 = vmatmul.mubr.bf16.gmra.mrb[0].mxu0 %v1026
        %v1260 = vpop.f32.mrb[0].mxu0
        %v1261 = vadd.f32 0.0, %v1260
        %v1262 = vpop.f32.mrb[0].mxu0
        %v1263 = vpop.f32.mrb[0].mxu0
        %v1264 = vadd.f32 0.0, %v1263
        %v1265 = vpop.f32.mrb[0].mxu0
        %1266 = vmatprep.mubr.bf16.mxu0 %v1029
        %1267 = vmatmul.mubr.bf16.gmra.mrb[0].mxu0 %v1028
        %v1268 = vpop.f32.mrb[0].mxu0
        %v1269 = vadd.f32 0.0, %v1268
        %v1270 = vpop.f32.mrb[0].mxu0
        %v1271 = vpop.f32.mrb[0].mxu0
        %v1272 = vadd.f32 0.0, %v1271
        %v1273 = vpop.f32.mrb[0].mxu0
        %1274 = vmatprep.mubr.bf16.mxu0 %v1031
        %1275 = vmatmul.mubr.bf16.gmra.mrb[0].mxu0 %v1030
        %v1276 = vpop.f32.mrb[0].mxu0
        %v1277 = vadd.f32 0.0, %v1276
        %v1278 = vpop.f32.mrb[0].mxu0
        %v1279 = vpop.f32.mrb[0].mxu0
        %v1280 = vadd.f32 0.0, %v1279
        %v1281 = vpop.f32.mrb[0].mxu0
        %1282 = vmatprep.mubr.bf16.mxu0 %v1033
        %1283 = vmatmul.mubr.bf16.gmra.mrb[0].mxu0 %v1032
        %v1284 = vpop.f32.mrb[0].mxu0
        %v1285 = vadd.f32 0.0, %v1284
        %v1286 = vpop.f32.mrb[0].mxu0
        %v1287 = vpop.f32.mrb[0].mxu0
        %v1288 = vadd.f32 0.0, %v1287
        %v1289 = vpop.f32.mrb[0].mxu0
        %1290 = vdwg.mxu0
        %v1291 = vrcp.pop %v908
        %v1292 = vrcp.pop %v911
        %v1293 = vrcp.pop %v914
        %v1294 = vrcp.pop %v917
        %v1295 = vrcp.pop %v920
        %v1296 = vrcp.pop %v923
        %v1297 = vrcp.pop %v926
        %v1298 = vrcp.pop %v929
        %v1299 = vrcp.pop %v932
        %v1300 = vrcp.pop %v935
        %v1301 = vrcp.pop %v938
        %v1302 = vrcp.pop %v941
        %v1303 = vrcp.pop %v944
        %v1304 = vrcp.pop %v947
        %v1305 = vrcp.pop %v950
        %v1306 = vrcp.pop %v953
        %v1307 = vrcp.pop %v956
        %v1308 = vrcp.pop %v959
        %v1309 = vrcp.pop %v962
        %v1310 = vrcp.pop %v965
        %v1311 = vrcp.pop %v968
        %v1312 = vrcp.pop %v971
        %v1313 = vrcp.pop %v974
        %v1314 = vrcp.pop %v977
        %v1315 = vrcp.pop %v980
        %v1316 = vrcp.pop %v983
        %v1317 = vrcp.pop %v986
        %v1318 = vrcp.pop %v989
        %v1319 = vrcp.pop %v992
        %v1320 = vrcp.pop %v995
        %v1321 = vrcp.pop %v998
        %v1322 = vrcp.pop %v1001
        %v1323 = vmul.f32 %v1165, %v1291
        %v1324 = vmul.f32 %v1168, %v1292
        %v1325 = vmul.f32 %v1173, %v1293
        %v1326 = vmul.f32 %v1176, %v1294
        %v1327 = vmul.f32 %v1181, %v1295
        %v1328 = vmul.f32 %v1184, %v1296
        %v1329 = vmul.f32 %v1189, %v1297
        %v1330 = vmul.f32 %v1192, %v1298
        %v1331 = vmul.f32 %v1197, %v1299
        %v1332 = vmul.f32 %v1200, %v1300
        %v1333 = vmul.f32 %v1205, %v1301
        %v1334 = vmul.f32 %v1208, %v1302
        %v1335 = vmul.f32 %v1213, %v1303
        %v1336 = vmul.f32 %v1216, %v1304
        %v1337 = vmul.f32 %v1221, %v1305
        %v1338 = vmul.f32 %v1224, %v1306
        %v1339 = vmul.f32 %v1229, %v1307
        %v1340 = vmul.f32 %v1232, %v1308
        %v1341 = vmul.f32 %v1237, %v1309
        %v1342 = vmul.f32 %v1240, %v1310
        %v1343 = vmul.f32 %v1245, %v1311
        %v1344 = vmul.f32 %v1248, %v1312
        %v1345 = vmul.f32 %v1253, %v1313
        %v1346 = vmul.f32 %v1256, %v1314
        %v1347 = vmul.f32 %v1261, %v1315
        %v1348 = vmul.f32 %v1264, %v1316
        %v1349 = vmul.f32 %v1269, %v1317
        %v1350 = vmul.f32 %v1272, %v1318
        %v1351 = vmul.f32 %v1277, %v1319
        %v1352 = vmul.f32 %v1280, %v1320
        %v1353 = vmul.f32 %v1285, %v1321
        %v1354 = vmul.f32 %v1288, %v1322
        %1355 = vrot.lane.b32.xlu0 %v264, 96
        %v1356 = vpop.permute.xlu0 %1355
        %1357 = vrot.lane.b32.xlu0 %v265, 96
        %v1358 = vpop.permute.xlu0 %1357
        %1359 = vrot.lane.b32.xlu0 %v266, 96
        %v1360 = vpop.permute.xlu0 %1359
        %1361 = vrot.lane.b32.xlu0 %v267, 96
        %v1362 = vpop.permute.xlu0 %1361
        %1363 = vrot.lane.b32.xlu0 %v268, 96
        %v1364 = vpop.permute.xlu0 %1363
        %1365 = vrot.lane.b32.xlu0 %v269, 96
        %v1366 = vpop.permute.xlu0 %1365
        %1367 = vrot.lane.b32.xlu0 %v270, 96
        %v1368 = vpop.permute.xlu0 %1367
        %1369 = vrot.lane.b32.xlu0 %v271, 96
        %v1370 = vpop.permute.xlu0 %1369
        %1371 = vrot.lane.b32.xlu0 %v272, 96
        %v1372 = vpop.permute.xlu0 %1371
        %1373 = vrot.lane.b32.xlu0 %v273, 96
        %v1374 = vpop.permute.xlu0 %1373
        %1375 = vrot.lane.b32.xlu0 %v274, 96
        %v1376 = vpop.permute.xlu0 %1375
        %1377 = vrot.lane.b32.xlu0 %v275, 96
        %v1378 = vpop.permute.xlu0 %1377
        %1379 = vrot.lane.b32.xlu0 %v276, 96
        %v1380 = vpop.permute.xlu0 %1379
        %1381 = vrot.lane.b32.xlu0 %v277, 96
        %v1382 = vpop.permute.xlu0 %1381
        %1383 = vrot.lane.b32.xlu0 %v278, 96
        %v1384 = vpop.permute.xlu0 %1383
        %1385 = vrot.lane.b32.xlu0 %v279, 96
        %v1386 = vpop.permute.xlu0 %1385
        %1387 = vrot.lane.b32.xlu0 %v312, 96
        %v1388 = vpop.permute.xlu0 %1387
        %1389 = vrot.lane.b32.xlu0 %v313, 96
        %v1390 = vpop.permute.xlu0 %1389
        %1391 = vrot.lane.b32.xlu0 %v314, 96
        %v1392 = vpop.permute.xlu0 %1391
        %1393 = vrot.lane.b32.xlu0 %v315, 96
        %v1394 = vpop.permute.xlu0 %1393
        %1395 = vrot.lane.b32.xlu0 %v316, 96
        %v1396 = vpop.permute.xlu0 %1395
        %1397 = vrot.lane.b32.xlu0 %v317, 96
        %v1398 = vpop.permute.xlu0 %1397
        %1399 = vrot.lane.b32.xlu0 %v318, 96
        %v1400 = vpop.permute.xlu0 %1399
        %1401 = vrot.lane.b32.xlu0 %v319, 96
        %v1402 = vpop.permute.xlu0 %1401
        %1403 = vrot.lane.b32.xlu0 %v320, 96
        %v1404 = vpop.permute.xlu0 %1403
        %1405 = vrot.lane.b32.xlu0 %v321, 96
        %v1406 = vpop.permute.xlu0 %1405
        %1407 = vrot.lane.b32.xlu0 %v322, 96
        %v1408 = vpop.permute.xlu0 %1407
        %1409 = vrot.lane.b32.xlu0 %v323, 96
        %v1410 = vpop.permute.xlu0 %1409
        %1411 = vrot.lane.b32.xlu0 %v324, 96
        %v1412 = vpop.permute.xlu0 %1411
        %1413 = vrot.lane.b32.xlu0 %v325, 96
        %v1414 = vpop.permute.xlu0 %1413
        %1415 = vrot.lane.b32.xlu0 %v326, 96
        %v1416 = vpop.permute.xlu0 %1415
        %1417 = vrot.lane.b32.xlu0 %v327, 96
        %v1418 = vpop.permute.xlu0 %1417
        %v1420 = vsel %vm328, %v1356, 0
        %v1423 = vsel %vm328, %v1358, 0
        %v1426 = vsel %vm328, %v1360, 0
        %v1429 = vsel %vm328, %v1362, 0
        %v1432 = vsel %vm328, %v1364, 0
        %v1435 = vsel %vm328, %v1366, 0
        %v1438 = vsel %vm328, %v1368, 0
        %v1441 = vsel %vm328, %v1370, 0
        %v1444 = vsel %vm328, %v1372, 0
        %v1447 = vsel %vm328, %v1374, 0
        %v1450 = vsel %vm328, %v1376, 0
        %v1453 = vsel %vm328, %v1378, 0
        %v1456 = vsel %vm328, %v1380, 0
        %v1459 = vsel %vm328, %v1382, 0
        %v1462 = vsel %vm328, %v1384, 0
        %v1465 = vsel %vm328, %v1386, 0
        %v1468 = vsel %vm328, %v1388, 0
        %v1471 = vsel %vm328, %v1390, 0
        %v1474 = vsel %vm328, %v1392, 0
        %v1477 = vsel %vm328, %v1394, 0
        %v1480 = vsel %vm328, %v1396, 0
        %v1483 = vsel %vm328, %v1398, 0
        %v1486 = vsel %vm328, %v1400, 0
        %v1489 = vsel %vm328, %v1402, 0
        %v1492 = vsel %vm328, %v1404, 0
        %v1495 = vsel %vm328, %v1406, 0
        %v1498 = vsel %vm328, %v1408, 0
        %v1501 = vsel %vm328, %v1410, 0
        %v1504 = vsel %vm328, %v1412, 0
        %v1507 = vsel %vm328, %v1414, 0
        %v1510 = vsel %vm328, %v1416, 0
        %v1513 = vsel %vm328, %v1418, 0
        %1515 = vmatprep.subr.bf16.mxu0 0
        %1516 = vmatpush1.bf16.xpose.msra.mxu0 %v1468
        %1517 = vmatprep.subr.bf16.mxu0 0
        %1518 = vmatpush1.bf16.xpose.msra.mxu0 %v1471
        %1519 = vmatprep.subr.bf16.mxu0 0
        %1520 = vmatpush1.bf16.xpose.msra.mxu0 %v1474
        %1521 = vmatprep.subr.bf16.mxu0 0
        %1522 = vmatpush1.bf16.xpose.msra.mxu0 %v1477
        %1523 = vmatprep.subr.bf16.mxu0 0
        %1524 = vmatpush1.bf16.xpose.msra.mxu0 %v1480
        %1525 = vmatprep.subr.bf16.mxu0 0
        %1526 = vmatpush1.bf16.xpose.msra.mxu0 %v1483
        %1527 = vmatprep.subr.bf16.mxu0 0
        %1528 = vmatpush1.bf16.xpose.msra.mxu0 %v1486
        %1529 = vmatprep.subr.bf16.mxu0 0
        %1530 = vmatpush1.bf16.xpose.msra.mxu0 %v1489
        %1531 = vmatprep.subr.bf16.mxu0 0
        %1532 = vmatpush1.bf16.xpose.msra.mxu0 %v1492
        %1533 = vmatprep.subr.bf16.mxu0 0
        %1534 = vmatpush1.bf16.xpose.msra.mxu0 %v1495
        %1535 = vmatprep.subr.bf16.mxu0 0
        %1536 = vmatpush1.bf16.xpose.msra.mxu0 %v1498
        %1537 = vmatprep.subr.bf16.mxu0 0
        %1538 = vmatpush1.bf16.xpose.msra.mxu0 %v1501
        %1539 = vmatprep.subr.bf16.mxu0 0
        %1540 = vmatpush1.bf16.xpose.msra.mxu0 %v1504
        %1541 = vmatprep.subr.bf16.mxu0 0
        %1542 = vmatpush1.bf16.xpose.msra.mxu0 %v1507
        %1543 = vmatprep.subr.bf16.mxu0 0
        %1544 = vmatpush1.bf16.xpose.msra.mxu0 %v1510
        %1545 = vmatprep.subr.bf16.mxu0 0
        %1546 = vmatpush1.bf16.xpose.msra.mxu0 %v1513
        %1547 = vmatprep.mubr.bf16.mxu0 0
        %1548 = vmatmul.mubr.bf16.gmra.mrb[0].mxu0 %v1420
        %v1549 = vpop.f32.mrb[0].mxu0
        %v1550 = vadd.f32 0.0, %v1549
        %v1551 = vpop.f32.mrb[0].mxu0
        %v1552 = vadd.f32 0.0, %v1551
        %v1553 = vpop.f32.mrb[0].mxu0
        %v1554 = vadd.f32 0.0, %v1553
        %v1555 = vpop.f32.mrb[0].mxu0
        %v1556 = vadd.f32 0.0, %v1555
        %1557 = vmatprep.mubr.bf16.mxu0 0
        %1558 = vmatmul.mubr.bf16.gmra.mrb[0].mxu0 %v1423
        %v1559 = vpop.f32.mrb[0].mxu0
        %v1560 = vadd.f32 0.0, %v1559
        %v1561 = vpop.f32.mrb[0].mxu0
        %v1562 = vadd.f32 0.0, %v1561
        %v1563 = vpop.f32.mrb[0].mxu0
        %v1564 = vadd.f32 0.0, %v1563
        %v1565 = vpop.f32.mrb[0].mxu0
        %v1566 = vadd.f32 0.0, %v1565
        %1567 = vmatprep.mubr.bf16.mxu0 0
        %1568 = vmatmul.mubr.bf16.gmra.mrb[0].mxu0 %v1426
        %v1569 = vpop.f32.mrb[0].mxu0
        %v1570 = vadd.f32 0.0, %v1569
        %v1571 = vpop.f32.mrb[0].mxu0
        %v1572 = vadd.f32 0.0, %v1571
        %v1573 = vpop.f32.mrb[0].mxu0
        %v1574 = vadd.f32 0.0, %v1573
        %v1575 = vpop.f32.mrb[0].mxu0
        %v1576 = vadd.f32 0.0, %v1575
        %1577 = vmatprep.mubr.bf16.mxu0 0
        %1578 = vmatmul.mubr.bf16.gmra.mrb[0].mxu0 %v1429
        %v1579 = vpop.f32.mrb[0].mxu0
        %v1580 = vadd.f32 0.0, %v1579
        %v1581 = vpop.f32.mrb[0].mxu0
        %v1582 = vadd.f32 0.0, %v1581
        %v1583 = vpop.f32.mrb[0].mxu0
        %v1584 = vadd.f32 0.0, %v1583
        %v1585 = vpop.f32.mrb[0].mxu0
        %v1586 = vadd.f32 0.0, %v1585
        %1587 = vmatprep.mubr.bf16.mxu0 0
        %1588 = vmatmul.mubr.bf16.gmra.mrb[0].mxu0 %v1432
        %v1589 = vpop.f32.mrb[0].mxu0
        %v1590 = vadd.f32 0.0, %v1589
        %v1591 = vpop.f32.mrb[0].mxu0
        %v1592 = vadd.f32 0.0, %v1591
        %v1593 = vpop.f32.mrb[0].mxu0
        %v1594 = vadd.f32 0.0, %v1593
        %v1595 = vpop.f32.mrb[0].mxu0
        %v1596 = vadd.f32 0.0, %v1595
        %1597 = vmatprep.mubr.bf16.mxu0 0
        %1598 = vmatmul.mubr.bf16.gmra.mrb[0].mxu0 %v1435
        %v1599 = vpop.f32.mrb[0].mxu0
        %v1600 = vadd.f32 0.0, %v1599
        %v1601 = vpop.f32.mrb[0].mxu0
        %v1602 = vadd.f32 0.0, %v1601
        %v1603 = vpop.f32.mrb[0].mxu0
        %v1604 = vadd.f32 0.0, %v1603
        %v1605 = vpop.f32.mrb[0].mxu0
        %v1606 = vadd.f32 0.0, %v1605
        %1607 = vmatprep.mubr.bf16.mxu0 0
        %1608 = vmatmul.mubr.bf16.gmra.mrb[0].mxu0 %v1438
        %v1609 = vpop.f32.mrb[0].mxu0
        %v1610 = vadd.f32 0.0, %v1609
        %v1611 = vpop.f32.mrb[0].mxu0
        %v1612 = vadd.f32 0.0, %v1611
        %v1613 = vpop.f32.mrb[0].mxu0
        %v1614 = vadd.f32 0.0, %v1613
        %v1615 = vpop.f32.mrb[0].mxu0
        %v1616 = vadd.f32 0.0, %v1615
        %1617 = vmatprep.mubr.bf16.mxu0 0
        %1618 = vmatmul.mubr.bf16.gmra.mrb[0].mxu0 %v1441
        %v1619 = vpop.f32.mrb[0].mxu0
        %v1620 = vadd.f32 0.0, %v1619
        %v1621 = vpop.f32.mrb[0].mxu0
        %v1622 = vadd.f32 0.0, %v1621
        %v1623 = vpop.f32.mrb[0].mxu0
        %v1624 = vadd.f32 0.0, %v1623
        %v1625 = vpop.f32.mrb[0].mxu0
        %v1626 = vadd.f32 0.0, %v1625
        %1627 = vmatprep.mubr.bf16.mxu0 0
        %1628 = vmatmul.mubr.bf16.gmra.mrb[0].mxu0 %v1444
        %v1629 = vpop.f32.mrb[0].mxu0
        %v1630 = vadd.f32 0.0, %v1629
        %v1631 = vpop.f32.mrb[0].mxu0
        %v1632 = vadd.f32 0.0, %v1631
        %v1633 = vpop.f32.mrb[0].mxu0
        %v1634 = vadd.f32 0.0, %v1633
        %v1635 = vpop.f32.mrb[0].mxu0
        %v1636 = vadd.f32 0.0, %v1635
        %1637 = vmatprep.mubr.bf16.mxu0 0
        %1638 = vmatmul.mubr.bf16.gmra.mrb[0].mxu0 %v1447
        %v1639 = vpop.f32.mrb[0].mxu0
        %v1640 = vadd.f32 0.0, %v1639
        %v1641 = vpop.f32.mrb[0].mxu0
        %v1642 = vadd.f32 0.0, %v1641
        %v1643 = vpop.f32.mrb[0].mxu0
        %v1644 = vadd.f32 0.0, %v1643
        %v1645 = vpop.f32.mrb[0].mxu0
        %v1646 = vadd.f32 0.0, %v1645
        %1647 = vmatprep.mubr.bf16.mxu0 0
        %1648 = vmatmul.mubr.bf16.gmra.mrb[0].mxu0 %v1450
        %v1649 = vpop.f32.mrb[0].mxu0
        %v1650 = vadd.f32 0.0, %v1649
        %v1651 = vpop.f32.mrb[0].mxu0
        %v1652 = vadd.f32 0.0, %v1651
        %v1653 = vpop.f32.mrb[0].mxu0
        %v1654 = vadd.f32 0.0, %v1653
        %v1655 = vpop.f32.mrb[0].mxu0
        %v1656 = vadd.f32 0.0, %v1655
        %1657 = vmatprep.mubr.bf16.mxu0 0
        %1658 = vmatmul.mubr.bf16.gmra.mrb[0].mxu0 %v1453
        %v1659 = vpop.f32.mrb[0].mxu0
        %v1660 = vadd.f32 0.0, %v1659
        %v1661 = vpop.f32.mrb[0].mxu0
        %v1662 = vadd.f32 0.0, %v1661
        %v1663 = vpop.f32.mrb[0].mxu0
        %v1664 = vadd.f32 0.0, %v1663
        %v1665 = vpop.f32.mrb[0].mxu0
        %v1666 = vadd.f32 0.0, %v1665
        %1667 = vmatprep.mubr.bf16.mxu0 0
        %1668 = vmatmul.mubr.bf16.gmra.mrb[0].mxu0 %v1456
        %v1669 = vpop.f32.mrb[0].mxu0
        %v1670 = vadd.f32 0.0, %v1669
        %v1671 = vpop.f32.mrb[0].mxu0
        %v1672 = vadd.f32 0.0, %v1671
        %v1673 = vpop.f32.mrb[0].mxu0
        %v1674 = vadd.f32 0.0, %v1673
        %v1675 = vpop.f32.mrb[0].mxu0
        %v1676 = vadd.f32 0.0, %v1675
        %1677 = vmatprep.mubr.bf16.mxu0 0
        %1678 = vmatmul.mubr.bf16.gmra.mrb[0].mxu0 %v1459
        %v1679 = vpop.f32.mrb[0].mxu0
        %v1680 = vadd.f32 0.0, %v1679
        %v1681 = vpop.f32.mrb[0].mxu0
        %v1682 = vadd.f32 0.0, %v1681
        %v1683 = vpop.f32.mrb[0].mxu0
        %v1684 = vadd.f32 0.0, %v1683
        %v1685 = vpop.f32.mrb[0].mxu0
        %v1686 = vadd.f32 0.0, %v1685
        %1687 = vmatprep.mubr.bf16.mxu0 0
        %1688 = vmatmul.mubr.bf16.gmra.mrb[0].mxu0 %v1462
        %v1689 = vpop.f32.mrb[0].mxu0
        %v1690 = vadd.f32 0.0, %v1689
        %v1691 = vpop.f32.mrb[0].mxu0
        %v1692 = vadd.f32 0.0, %v1691
        %v1693 = vpop.f32.mrb[0].mxu0
        %v1694 = vadd.f32 0.0, %v1693
        %v1695 = vpop.f32.mrb[0].mxu0
        %v1696 = vadd.f32 0.0, %v1695
        %1697 = vmatprep.mubr.bf16.mxu0 0
        %1698 = vmatmul.mubr.bf16.gmra.mrb[0].mxu0 %v1465
        %v1699 = vpop.f32.mrb[0].mxu0
        %v1700 = vadd.f32 0.0, %v1699
        %v1701 = vpop.f32.mrb[0].mxu0
        %v1702 = vadd.f32 0.0, %v1701
        %v1703 = vpop.f32.mrb[0].mxu0
        %v1704 = vadd.f32 0.0, %v1703
        %v1705 = vpop.f32.mrb[0].mxu0
        %v1706 = vadd.f32 0.0, %v1705
        %1707 = vdwg.mxu0
        %v1708 = vmax.f32 %v1550, %v1552
        %1709 = vmax.xlane.f32.xlu0 %v1708
        %v1710 = vpop.xlane.xlu0 %1709
        %v1711 = vmax.f32 %v1554, %v1556
        %1712 = vmax.xlane.f32.xlu0 %v1711
        %v1713 = vpop.xlane.xlu0 %1712
        %v1714 = vmax.f32 %v1560, %v1562
        %1715 = vmax.xlane.f32.xlu0 %v1714
        %v1716 = vpop.xlane.xlu0 %1715
        %v1717 = vmax.f32 %v1564, %v1566
        %1718 = vmax.xlane.f32.xlu0 %v1717
        %v1719 = vpop.xlane.xlu0 %1718
        %v1720 = vmax.f32 %v1570, %v1572
        %1721 = vmax.xlane.f32.xlu0 %v1720
        %v1722 = vpop.xlane.xlu0 %1721
        %v1723 = vmax.f32 %v1574, %v1576
        %1724 = vmax.xlane.f32.xlu0 %v1723
        %v1725 = vpop.xlane.xlu0 %1724
        %v1726 = vmax.f32 %v1580, %v1582
        %1727 = vmax.xlane.f32.xlu0 %v1726
        %v1728 = vpop.xlane.xlu0 %1727
        %v1729 = vmax.f32 %v1584, %v1586
        %1730 = vmax.xlane.f32.xlu0 %v1729
        %v1731 = vpop.xlane.xlu0 %1730
        %v1732 = vmax.f32 %v1590, %v1592
        %1733 = vmax.xlane.f32.xlu0 %v1732
        %v1734 = vpop.xlane.xlu0 %1733
        %v1735 = vmax.f32 %v1594, %v1596
        %1736 = vmax.xlane.f32.xlu0 %v1735
        %v1737 = vpop.xlane.xlu0 %1736
        %v1738 = vmax.f32 %v1600, %v1602
        %1739 = vmax.xlane.f32.xlu0 %v1738
        %v1740 = vpop.xlane.xlu0 %1739
        %v1741 = vmax.f32 %v1604, %v1606
        %1742 = vmax.xlane.f32.xlu0 %v1741
        %v1743 = vpop.xlane.xlu0 %1742
        %v1744 = vmax.f32 %v1610, %v1612
        %1745 = vmax.xlane.f32.xlu0 %v1744
        %v1746 = vpop.xlane.xlu0 %1745
        %v1747 = vmax.f32 %v1614, %v1616
        %1748 = vmax.xlane.f32.xlu0 %v1747
        %v1749 = vpop.xlane.xlu0 %1748
        %v1750 = vmax.f32 %v1620, %v1622
        %1751 = vmax.xlane.f32.xlu0 %v1750
        %v1752 = vpop.xlane.xlu0 %1751
        %v1753 = vmax.f32 %v1624, %v1626
        %1754 = vmax.xlane.f32.xlu0 %v1753
        %v1755 = vpop.xlane.xlu0 %1754
        %v1756 = vmax.f32 %v1630, %v1632
        %1757 = vmax.xlane.f32.xlu0 %v1756
        %v1758 = vpop.xlane.xlu0 %1757
        %v1759 = vmax.f32 %v1634, %v1636
        %1760 = vmax.xlane.f32.xlu0 %v1759
        %v1761 = vpop.xlane.xlu0 %1760
        %v1762 = vmax.f32 %v1640, %v1642
        %1763 = vmax.xlane.f32.xlu0 %v1762
        %v1764 = vpop.xlane.xlu0 %1763
        %v1765 = vmax.f32 %v1644, %v1646
        %1766 = vmax.xlane.f32.xlu0 %v1765
        %v1767 = vpop.xlane.xlu0 %1766
        %v1768 = vmax.f32 %v1650, %v1652
        %1769 = vmax.xlane.f32.xlu0 %v1768
        %v1770 = vpop.xlane.xlu0 %1769
        %v1771 = vmax.f32 %v1654, %v1656
        %1772 = vmax.xlane.f32.xlu0 %v1771
        %v1773 = vpop.xlane.xlu0 %1772
        %v1774 = vmax.f32 %v1660, %v1662
        %1775 = vmax.xlane.f32.xlu0 %v1774
        %v1776 = vpop.xlane.xlu0 %1775
        %v1777 = vmax.f32 %v1664, %v1666
        %1778 = vmax.xlane.f32.xlu0 %v1777
        %v1779 = vpop.xlane.xlu0 %1778
        %v1780 = vmax.f32 %v1670, %v1672
        %1781 = vmax.xlane.f32.xlu0 %v1780
        %v1782 = vpop.xlane.xlu0 %1781
        %v1783 = vmax.f32 %v1674, %v1676
        %1784 = vmax.xlane.f32.xlu0 %v1783
        %v1785 = vpop.xlane.xlu0 %1784
        %v1786 = vmax.f32 %v1680, %v1682
        %1787 = vmax.xlane.f32.xlu0 %v1786
        %v1788 = vpop.xlane.xlu0 %1787
        %v1789 = vmax.f32 %v1684, %v1686
        %1790 = vmax.xlane.f32.xlu0 %v1789
        %v1791 = vpop.xlane.xlu0 %1790
        %v1792 = vmax.f32 %v1690, %v1692
        %1793 = vmax.xlane.f32.xlu0 %v1792
        %v1794 = vpop.xlane.xlu0 %1793
        %v1795 = vmax.f32 %v1694, %v1696
        %1796 = vmax.xlane.f32.xlu0 %v1795
        %v1797 = vpop.xlane.xlu0 %1796
        %v1798 = vmax.f32 %v1700, %v1702
        %1799 = vmax.xlane.f32.xlu0 %v1798
        %v1800 = vpop.xlane.xlu0 %1799
        %v1801 = vmax.f32 %v1704, %v1706
        %1802 = vmax.xlane.f32.xlu0 %v1801
        %v1803 = vpop.xlane.xlu0 %1802
        %v1804 = vsub.f32 %v1550, %v1710
        %v1805 = vsub.f32 %v1552, %v1710
        %v1806 = vsub.f32 %v1554, %v1713
        %v1807 = vsub.f32 %v1556, %v1713
        %v1808 = vsub.f32 %v1560, %v1716
        %v1809 = vsub.f32 %v1562, %v1716
        %v1810 = vsub.f32 %v1564, %v1719
        %v1811 = vsub.f32 %v1566, %v1719
        %v1812 = vsub.f32 %v1570, %v1722
        %v1813 = vsub.f32 %v1572, %v1722
        %v1814 = vsub.f32 %v1574, %v1725
        %v1815 = vsub.f32 %v1576, %v1725
        %v1816 = vsub.f32 %v1580, %v1728
        %v1817 = vsub.f32 %v1582, %v1728
        %v1818 = vsub.f32 %v1584, %v1731
        %v1819 = vsub.f32 %v1586, %v1731
        %v1820 = vsub.f32 %v1590, %v1734
        %v1821 = vsub.f32 %v1592, %v1734
        %v1822 = vsub.f32 %v1594, %v1737
        %v1823 = vsub.f32 %v1596, %v1737
        %v1824 = vsub.f32 %v1600, %v1740
        %v1825 = vsub.f32 %v1602, %v1740
        %v1826 = vsub.f32 %v1604, %v1743
        %v1827 = vsub.f32 %v1606, %v1743
        %v1828 = vsub.f32 %v1610, %v1746
        %v1829 = vsub.f32 %v1612, %v1746
        %v1830 = vsub.f32 %v1614, %v1749
        %v1831 = vsub.f32 %v1616, %v1749
        %v1832 = vsub.f32 %v1620, %v1752
        %v1833 = vsub.f32 %v1622, %v1752
        %v1834 = vsub.f32 %v1624, %v1755
        %v1835 = vsub.f32 %v1626, %v1755
        %v1836 = vsub.f32 %v1630, %v1758
        %v1837 = vsub.f32 %v1632, %v1758
        %v1838 = vsub.f32 %v1634, %v1761
        %v1839 = vsub.f32 %v1636, %v1761
        %v1840 = vsub.f32 %v1640, %v1764
        %v1841 = vsub.f32 %v1642, %v1764
        %v1842 = vsub.f32 %v1644, %v1767
        %v1843 = vsub.f32 %v1646, %v1767
        %v1844 = vsub.f32 %v1650, %v1770
        %v1845 = vsub.f32 %v1652, %v1770
        %v1846 = vsub.f32 %v1654, %v1773
        %v1847 = vsub.f32 %v1656, %v1773
        %v1848 = vsub.f32 %v1660, %v1776
        %v1849 = vsub.f32 %v1662, %v1776
        %v1850 = vsub.f32 %v1664, %v1779
        %v1851 = vsub.f32 %v1666, %v1779
        %v1852 = vsub.f32 %v1670, %v1782
        %v1853 = vsub.f32 %v1672, %v1782
        %v1854 = vsub.f32 %v1674, %v1785
        %v1855 = vsub.f32 %v1676, %v1785
        %v1856 = vsub.f32 %v1680, %v1788
        %v1857 = vsub.f32 %v1682, %v1788
        %v1858 = vsub.f32 %v1684, %v1791
        %v1859 = vsub.f32 %v1686, %v1791
        %v1860 = vsub.f32 %v1690, %v1794
        %v1861 = vsub.f32 %v1692, %v1794
        %v1862 = vsub.f32 %v1694, %v1797
        %v1863 = vsub.f32 %v1696, %v1797
        %v1864 = vsub.f32 %v1700, %v1800
        %v1865 = vsub.f32 %v1702, %v1800
        %v1866 = vsub.f32 %v1704, %v1803
        %v1867 = vsub.f32 %v1706, %v1803
        %v1868 = vmul.f32 %v1804, 1.442695
        %v1869 = vpow.pop %v1868
        %v1870 = vmul.f32 %v1805, 1.442695
        %v1871 = vpow.pop %v1870
        %v1872 = vmul.f32 %v1806, 1.442695
        %v1873 = vpow.pop %v1872
        %v1874 = vmul.f32 %v1807, 1.442695
        %v1875 = vpow.pop %v1874
        %v1876 = vmul.f32 %v1808, 1.442695
        %v1877 = vpow.pop %v1876
        %v1878 = vmul.f32 %v1809, 1.442695
        %v1879 = vpow.pop %v1878
        %v1880 = vmul.f32 %v1810, 1.442695
        %v1881 = vpow.pop %v1880
        %v1882 = vmul.f32 %v1811, 1.442695
        %v1883 = vpow.pop %v1882
        %v1884 = vmul.f32 %v1812, 1.442695
        %v1885 = vpow.pop %v1884
        %v1886 = vmul.f32 %v1813, 1.442695
        %v1887 = vpow.pop %v1886
        %v1888 = vmul.f32 %v1814, 1.442695
        %v1889 = vpow.pop %v1888
        %v1890 = vmul.f32 %v1815, 1.442695
        %v1891 = vpow.pop %v1890
        %v1892 = vmul.f32 %v1816, 1.442695
        %v1893 = vpow.pop %v1892
        %v1894 = vmul.f32 %v1817, 1.442695
        %v1895 = vpow.pop %v1894
        %v1896 = vmul.f32 %v1818, 1.442695
        %v1897 = vpow.pop %v1896
        %v1898 = vmul.f32 %v1819, 1.442695
        %v1899 = vpow.pop %v1898
        %v1900 = vmul.f32 %v1820, 1.442695
        %v1901 = vpow.pop %v1900
        %v1902 = vmul.f32 %v1821, 1.442695
        %v1903 = vpow.pop %v1902
        %v1904 = vmul.f32 %v1822, 1.442695
        %v1905 = vpow.pop %v1904
        %v1906 = vmul.f32 %v1823, 1.442695
        %v1907 = vpow.pop %v1906
        %v1908 = vmul.f32 %v1824, 1.442695
        %v1909 = vpow.pop %v1908
        %v1910 = vmul.f32 %v1825, 1.442695
        %v1911 = vpow.pop %v1910
        %v1912 = vmul.f32 %v1826, 1.442695
        %v1913 = vpow.pop %v1912
        %v1914 = vmul.f32 %v1827, 1.442695
        %v1915 = vpow.pop %v1914
        %v1916 = vmul.f32 %v1828, 1.442695
        %v1917 = vpow.pop %v1916
        %v1918 = vmul.f32 %v1829, 1.442695
        %v1919 = vpow.pop %v1918
        %v1920 = vmul.f32 %v1830, 1.442695
        %v1921 = vpow.pop %v1920
        %v1922 = vmul.f32 %v1831, 1.442695
        %v1923 = vpow.pop %v1922
        %v1924 = vmul.f32 %v1832, 1.442695
        %v1925 = vpow.pop %v1924
        %v1926 = vmul.f32 %v1833, 1.442695
        %v1927 = vpow.pop %v1926
        %v1928 = vmul.f32 %v1834, 1.442695
        %v1929 = vpow.pop %v1928
        %v1930 = vmul.f32 %v1835, 1.442695
        %v1931 = vpow.pop %v1930
        %v1932 = vmul.f32 %v1836, 1.442695
        %v1933 = vpow.pop %v1932
        %v1934 = vmul.f32 %v1837, 1.442695
        %v1935 = vpow.pop %v1934
        %v1936 = vmul.f32 %v1838, 1.442695
        %v1937 = vpow.pop %v1936
        %v1938 = vmul.f32 %v1839, 1.442695
        %v1939 = vpow.pop %v1938
        %v1940 = vmul.f32 %v1840, 1.442695
        %v1941 = vpow.pop %v1940
        %v1942 = vmul.f32 %v1841, 1.442695
        %v1943 = vpow.pop %v1942
        %v1944 = vmul.f32 %v1842, 1.442695
        %v1945 = vpow.pop %v1944
        %v1946 = vmul.f32 %v1843, 1.442695
        %v1947 = vpow.pop %v1946
        %v1948 = vmul.f32 %v1844, 1.442695
        %v1949 = vpow.pop %v1948
        %v1950 = vmul.f32 %v1845, 1.442695
        %v1951 = vpow.pop %v1950
        %v1952 = vmul.f32 %v1846, 1.442695
        %v1953 = vpow.pop %v1952
        %v1954 = vmul.f32 %v1847, 1.442695
        %v1955 = vpow.pop %v1954
        %v1956 = vmul.f32 %v1848, 1.442695
        %v1957 = vpow.pop %v1956
        %v1958 = vmul.f32 %v1849, 1.442695
        %v1959 = vpow.pop %v1958
        %v1960 = vmul.f32 %v1850, 1.442695
        %v1961 = vpow.pop %v1960
        %v1962 = vmul.f32 %v1851, 1.442695
        %v1963 = vpow.pop %v1962
        %v1964 = vmul.f32 %v1852, 1.442695
        %v1965 = vpow.pop %v1964
        %v1966 = vmul.f32 %v1853, 1.442695
        %v1967 = vpow.pop %v1966
        %v1968 = vmul.f32 %v1854, 1.442695
        %v1969 = vpow.pop %v1968
        %v1970 = vmul.f32 %v1855, 1.442695
        %v1971 = vpow.pop %v1970
        %v1972 = vmul.f32 %v1856, 1.442695
        %v1973 = vpow.pop %v1972
        %v1974 = vmul.f32 %v1857, 1.442695
        %v1975 = vpow.pop %v1974
        %v1976 = vmul.f32 %v1858, 1.442695
        %v1977 = vpow.pop %v1976
        %v1978 = vmul.f32 %v1859, 1.442695
        %v1979 = vpow.pop %v1978
        %v1980 = vmul.f32 %v1860, 1.442695
        %v1981 = vpow.pop %v1980
        %v1982 = vmul.f32 %v1861, 1.442695
        %v1983 = vpow.pop %v1982
        %v1984 = vmul.f32 %v1862, 1.442695
        %v1985 = vpow.pop %v1984
        %v1986 = vmul.f32 %v1863, 1.442695
        %v1987 = vpow.pop %v1986
        %v1988 = vmul.f32 %v1864, 1.442695
        %v1989 = vpow.pop %v1988
        %v1990 = vmul.f32 %v1865, 1.442695
        %v1991 = vpow.pop %v1990
        %v1992 = vmul.f32 %v1866, 1.442695
        %v1993 = vpow.pop %v1992
        %v1994 = vmul.f32 %v1867, 1.442695
        %v1995 = vpow.pop %v1994
        %v1996 = vadd.f32 %v1869, %v1871
        %1997 = vadd.xlane.f32.xlu0 %v1996
        %v1998 = vpop.xlane.xlu0 %1997
        %v1999 = vadd.f32 %v1873, %v1875
        %2000 = vadd.xlane.f32.xlu0 %v1999
        %v2001 = vpop.xlane.xlu0 %2000
        %v2002 = vadd.f32 %v1877, %v1879
        %2003 = vadd.xlane.f32.xlu0 %v2002
        %v2004 = vpop.xlane.xlu0 %2003
        %v2005 = vadd.f32 %v1881, %v1883
        %2006 = vadd.xlane.f32.xlu0 %v2005
        %v2007 = vpop.xlane.xlu0 %2006
        %v2008 = vadd.f32 %v1885, %v1887
        %2009 = vadd.xlane.f32.xlu0 %v2008
        %v2010 = vpop.xlane.xlu0 %2009
        %v2011 = vadd.f32 %v1889, %v1891
        %2012 = vadd.xlane.f32.xlu0 %v2011
        %v2013 = vpop.xlane.xlu0 %2012
        %v2014 = vadd.f32 %v1893, %v1895
        %2015 = vadd.xlane.f32.xlu0 %v2014
        %v2016 = vpop.xlane.xlu0 %2015
        %v2017 = vadd.f32 %v1897, %v1899
        %2018 = vadd.xlane.f32.xlu0 %v2017
        %v2019 = vpop.xlane.xlu0 %2018
        %v2020 = vadd.f32 %v1901, %v1903
        %2021 = vadd.xlane.f32.xlu0 %v2020
        %v2022 = vpop.xlane.xlu0 %2021
        %v2023 = vadd.f32 %v1905, %v1907
        %2024 = vadd.xlane.f32.xlu0 %v2023
        %v2025 = vpop.xlane.xlu0 %2024
        %v2026 = vadd.f32 %v1909, %v1911
        %2027 = vadd.xlane.f32.xlu0 %v2026
        %v2028 = vpop.xlane.xlu0 %2027
        %v2029 = vadd.f32 %v1913, %v1915
        %2030 = vadd.xlane.f32.xlu0 %v2029
        %v2031 = vpop.xlane.xlu0 %2030
        %v2032 = vadd.f32 %v1917, %v1919
        %2033 = vadd.xlane.f32.xlu0 %v2032
        %v2034 = vpop.xlane.xlu0 %2033
        %v2035 = vadd.f32 %v1921, %v1923
        %2036 = vadd.xlane.f32.xlu0 %v2035
        %v2037 = vpop.xlane.xlu0 %2036
        %v2038 = vadd.f32 %v1925, %v1927
        %2039 = vadd.xlane.f32.xlu0 %v2038
        %v2040 = vpop.xlane.xlu0 %2039
        %v2041 = vadd.f32 %v1929, %v1931
        %2042 = vadd.xlane.f32.xlu0 %v2041
        %v2043 = vpop.xlane.xlu0 %2042
        %v2044 = vadd.f32 %v1933, %v1935
        %2045 = vadd.xlane.f32.xlu0 %v2044
        %v2046 = vpop.xlane.xlu0 %2045
        %v2047 = vadd.f32 %v1937, %v1939
        %2048 = vadd.xlane.f32.xlu0 %v2047
        %v2049 = vpop.xlane.xlu0 %2048
        %v2050 = vadd.f32 %v1941, %v1943
        %2051 = vadd.xlane.f32.xlu0 %v2050
        %v2052 = vpop.xlane.xlu0 %2051
        %v2053 = vadd.f32 %v1945, %v1947
        %2054 = vadd.xlane.f32.xlu0 %v2053
        %v2055 = vpop.xlane.xlu0 %2054
        %v2056 = vadd.f32 %v1949, %v1951
        %2057 = vadd.xlane.f32.xlu0 %v2056
        %v2058 = vpop.xlane.xlu0 %2057
        %v2059 = vadd.f32 %v1953, %v1955
        %2060 = vadd.xlane.f32.xlu0 %v2059
        %v2061 = vpop.xlane.xlu0 %2060
        %v2062 = vadd.f32 %v1957, %v1959
        %2063 = vadd.xlane.f32.xlu0 %v2062
        %v2064 = vpop.xlane.xlu0 %2063
        %v2065 = vadd.f32 %v1961, %v1963
        %2066 = vadd.xlane.f32.xlu0 %v2065
        %v2067 = vpop.xlane.xlu0 %2066
        %v2068 = vadd.f32 %v1965, %v1967
        %2069 = vadd.xlane.f32.xlu0 %v2068
        %v2070 = vpop.xlane.xlu0 %2069
        %v2071 = vadd.f32 %v1969, %v1971
        %2072 = vadd.xlane.f32.xlu0 %v2071
        %v2073 = vpop.xlane.xlu0 %2072
        %v2074 = vadd.f32 %v1973, %v1975
        %2075 = vadd.xlane.f32.xlu0 %v2074
        %v2076 = vpop.xlane.xlu0 %2075
        %v2077 = vadd.f32 %v1977, %v1979
        %2078 = vadd.xlane.f32.xlu0 %v2077
        %v2079 = vpop.xlane.xlu0 %2078
        %v2080 = vadd.f32 %v1981, %v1983
        %2081 = vadd.xlane.f32.xlu0 %v2080
        %v2082 = vpop.xlane.xlu0 %2081
        %v2083 = vadd.f32 %v1985, %v1987
        %2084 = vadd.xlane.f32.xlu0 %v2083
        %v2085 = vpop.xlane.xlu0 %2084
        %v2086 = vadd.f32 %v1989, %v1991
        %2087 = vadd.xlane.f32.xlu0 %v2086
        %v2088 = vpop.xlane.xlu0 %2087
        %v2089 = vadd.f32 %v1993, %v1995
        %2090 = vadd.xlane.f32.xlu0 %v2089
        %v2091 = vpop.xlane.xlu0 %2090
        %v2092 = vpack.c.bf16 %v1873, %v1869
        %v2093 = vpack.c.bf16 %v1875, %v1871
        %v2094 = vpack.c.bf16 %v1881, %v1877
        %v2095 = vpack.c.bf16 %v1883, %v1879
        %v2096 = vpack.c.bf16 %v1889, %v1885
        %v2097 = vpack.c.bf16 %v1891, %v1887
        %v2098 = vpack.c.bf16 %v1897, %v1893
        %v2099 = vpack.c.bf16 %v1899, %v1895
        %v2100 = vpack.c.bf16 %v1905, %v1901
        %v2101 = vpack.c.bf16 %v1907, %v1903
        %v2102 = vpack.c.bf16 %v1913, %v1909
        %v2103 = vpack.c.bf16 %v1915, %v1911
        %v2104 = vpack.c.bf16 %v1921, %v1917
        %v2105 = vpack.c.bf16 %v1923, %v1919
        %v2106 = vpack.c.bf16 %v1929, %v1925
        %v2107 = vpack.c.bf16 %v1931, %v1927
        %v2108 = vpack.c.bf16 %v1937, %v1933
        %v2109 = vpack.c.bf16 %v1939, %v1935
        %v2110 = vpack.c.bf16 %v1945, %v1941
        %v2111 = vpack.c.bf16 %v1947, %v1943
        %v2112 = vpack.c.bf16 %v1953, %v1949
        %v2113 = vpack.c.bf16 %v1955, %v1951
        %v2114 = vpack.c.bf16 %v1961, %v1957
        %v2115 = vpack.c.bf16 %v1963, %v1959
        %v2116 = vpack.c.bf16 %v1969, %v1965
        %v2117 = vpack.c.bf16 %v1971, %v1967
        %v2118 = vpack.c.bf16 %v1977, %v1973
        %v2119 = vpack.c.bf16 %v1979, %v1975
        %v2120 = vpack.c.bf16 %v1985, %v1981
        %v2121 = vpack.c.bf16 %v1987, %v1983
        %v2122 = vpack.c.bf16 %v1993, %v1989
        %v2123 = vpack.c.bf16 %v1995, %v1991
        %2124 = vrot.lane.b32.xlu0 %v1098, 96
        %v2125 = vpop.permute.xlu0 %2124
        %2126 = vrot.lane.b32.xlu0 %v1099, 96
        %v2127 = vpop.permute.xlu0 %2126
        %2128 = vrot.lane.b32.xlu0 %v1100, 96
        %v2129 = vpop.permute.xlu0 %2128
        %2130 = vrot.lane.b32.xlu0 %v1101, 96
        %v2131 = vpop.permute.xlu0 %2130
        %2132 = vrot.lane.b32.xlu0 %v1102, 96
        %v2133 = vpop.permute.xlu0 %2132
        %2134 = vrot.lane.b32.xlu0 %v1103, 96
        %v2135 = vpop.permute.xlu0 %2134
        %2136 = vrot.lane.b32.xlu0 %v1104, 96
        %v2137 = vpop.permute.xlu0 %2136
        %2138 = vrot.lane.b32.xlu0 %v1105, 96
        %v2139 = vpop.permute.xlu0 %2138
        %2140 = vrot.lane.b32.xlu0 %v1106, 96
        %v2141 = vpop.permute.xlu0 %2140
        %2142 = vrot.lane.b32.xlu0 %v1107, 96
        %v2143 = vpop.permute.xlu0 %2142
        %2144 = vrot.lane.b32.xlu0 %v1108, 96
        %v2145 = vpop.permute.xlu0 %2144
        %2146 = vrot.lane.b32.xlu0 %v1109, 96
        %v2147 = vpop.permute.xlu0 %2146
        %2148 = vrot.lane.b32.xlu0 %v1110, 96
        %v2149 = vpop.permute.xlu0 %2148
        %2150 = vrot.lane.b32.xlu0 %v1111, 96
        %v2151 = vpop.permute.xlu0 %2150
        %2152 = vrot.lane.b32.xlu0 %v1112, 96
        %v2153 = vpop.permute.xlu0 %2152
        %2154 = vrot.lane.b32.xlu0 %v1113, 96
        %v2155 = vpop.permute.xlu0 %2154
        %2172 = vmatprep.subr.bf16.mxu0 0
        %2173 = vmatpush1.bf16.msra.mxu0 %v2125
        %2174 = vmatprep.subr.bf16.mxu0 0
        %2175 = vmatpush1.bf16.msra.mxu0 %v2127
        %2176 = vmatprep.subr.bf16.mxu0 0
        %2177 = vmatpush1.bf16.msra.mxu0 %v2129
        %2178 = vmatprep.subr.bf16.mxu0 0
        %2179 = vmatpush1.bf16.msra.mxu0 %v2131
        %2180 = vmatprep.subr.bf16.mxu0 0
        %2181 = vmatpush1.bf16.msra.mxu0 %v2133
        %2182 = vmatprep.subr.bf16.mxu0 0
        %2183 = vmatpush1.bf16.msra.mxu0 %v2135
        %2184 = vmatprep.subr.bf16.mxu0 0
        %2185 = vmatpush1.bf16.msra.mxu0 %v2137
        %2186 = vmatprep.subr.bf16.mxu0 0
        %2187 = vmatpush1.bf16.msra.mxu0 %v2139
        %2188 = vmatprep.subr.bf16.mxu0 0
        %2189 = vmatpush1.bf16.msra.mxu0 %v2141
        %2190 = vmatprep.subr.bf16.mxu0 0
        %2191 = vmatpush1.bf16.msra.mxu0 %v2143
        %2192 = vmatprep.subr.bf16.mxu0 0
        %2193 = vmatpush1.bf16.msra.mxu0 %v2145
        %2194 = vmatprep.subr.bf16.mxu0 0
        %2195 = vmatpush1.bf16.msra.mxu0 %v2147
        %2196 = vmatprep.subr.bf16.mxu0 0
        %2197 = vmatpush1.bf16.msra.mxu0 %v2149
        %2198 = vmatprep.subr.bf16.mxu0 0
        %2199 = vmatpush1.bf16.msra.mxu0 %v2151
        %2200 = vmatprep.subr.bf16.mxu0 0
        %2201 = vmatpush1.bf16.msra.mxu0 %v2153
        %2202 = vmatprep.subr.bf16.mxu0 0
        %2203 = vmatpush1.bf16.msra.mxu0 %v2155
        %2204 = vmatprep.mubr.bf16.mxu0 %v2093
        %2205 = vmatmul.mubr.bf16.gmra.mrb[0].mxu0 %v2092
        %v2206 = vpop.f32.mrb[0].mxu0
        %v2207 = vadd.f32 0.0, %v2206
        %v2208 = vpop.f32.mrb[0].mxu0
        %v2209 = vpop.f32.mrb[0].mxu0
        %v2210 = vadd.f32 0.0, %v2209
        %v2211 = vpop.f32.mrb[0].mxu0
        %2212 = vmatprep.mubr.bf16.mxu0 %v2095
        %2213 = vmatmul.mubr.bf16.gmra.mrb[0].mxu0 %v2094
        %v2214 = vpop.f32.mrb[0].mxu0
        %v2215 = vadd.f32 0.0, %v2214
        %v2216 = vpop.f32.mrb[0].mxu0
        %v2217 = vpop.f32.mrb[0].mxu0
        %v2218 = vadd.f32 0.0, %v2217
        %v2219 = vpop.f32.mrb[0].mxu0
        %2220 = vmatprep.mubr.bf16.mxu0 %v2097
        %2221 = vmatmul.mubr.bf16.gmra.mrb[0].mxu0 %v2096
        %v2222 = vpop.f32.mrb[0].mxu0
        %v2223 = vadd.f32 0.0, %v2222
        %v2224 = vpop.f32.mrb[0].mxu0
        %v2225 = vpop.f32.mrb[0].mxu0
        %v2226 = vadd.f32 0.0, %v2225
        %v2227 = vpop.f32.mrb[0].mxu0
        %2228 = vmatprep.mubr.bf16.mxu0 %v2099
        %2229 = vmatmul.mubr.bf16.gmra.mrb[0].mxu0 %v2098
        %v2230 = vpop.f32.mrb[0].mxu0
        %v2231 = vadd.f32 0.0, %v2230
        %v2232 = vpop.f32.mrb[0].mxu0
        %v2233 = vpop.f32.mrb[0].mxu0
        %v2234 = vadd.f32 0.0, %v2233
        %v2235 = vpop.f32.mrb[0].mxu0
        %2236 = vmatprep.mubr.bf16.mxu0 %v2101
        %2237 = vmatmul.mubr.bf16.gmra.mrb[0].mxu0 %v2100
        %v2238 = vpop.f32.mrb[0].mxu0
        %v2239 = vadd.f32 0.0, %v2238
        %v2240 = vpop.f32.mrb[0].mxu0
        %v2241 = vpop.f32.mrb[0].mxu0
        %v2242 = vadd.f32 0.0, %v2241
        %v2243 = vpop.f32.mrb[0].mxu0
        %2244 = vmatprep.mubr.bf16.mxu0 %v2103
        %2245 = vmatmul.mubr.bf16.gmra.mrb[0].mxu0 %v2102
        %v2246 = vpop.f32.mrb[0].mxu0
        %v2247 = vadd.f32 0.0, %v2246
        %v2248 = vpop.f32.mrb[0].mxu0
        %v2249 = vpop.f32.mrb[0].mxu0
        %v2250 = vadd.f32 0.0, %v2249
        %v2251 = vpop.f32.mrb[0].mxu0
        %2252 = vmatprep.mubr.bf16.mxu0 %v2105
        %2253 = vmatmul.mubr.bf16.gmra.mrb[0].mxu0 %v2104
        %v2254 = vpop.f32.mrb[0].mxu0
        %v2255 = vadd.f32 0.0, %v2254
        %v2256 = vpop.f32.mrb[0].mxu0
        %v2257 = vpop.f32.mrb[0].mxu0
        %v2258 = vadd.f32 0.0, %v2257
        %v2259 = vpop.f32.mrb[0].mxu0
        %2260 = vmatprep.mubr.bf16.mxu0 %v2107
        %2261 = vmatmul.mubr.bf16.gmra.mrb[0].mxu0 %v2106
        %v2262 = vpop.f32.mrb[0].mxu0
        %v2263 = vadd.f32 0.0, %v2262
        %v2264 = vpop.f32.mrb[0].mxu0
        %v2265 = vpop.f32.mrb[0].mxu0
        %v2266 = vadd.f32 0.0, %v2265
        %v2267 = vpop.f32.mrb[0].mxu0
        %2268 = vmatprep.mubr.bf16.mxu0 %v2109
        %2269 = vmatmul.mubr.bf16.gmra.mrb[0].mxu0 %v2108
        %v2270 = vpop.f32.mrb[0].mxu0
        %v2271 = vadd.f32 0.0, %v2270
        %v2272 = vpop.f32.mrb[0].mxu0
        %v2273 = vpop.f32.mrb[0].mxu0
        %v2274 = vadd.f32 0.0, %v2273
        %v2275 = vpop.f32.mrb[0].mxu0
        %2276 = vmatprep.mubr.bf16.mxu0 %v2111
        %2277 = vmatmul.mubr.bf16.gmra.mrb[0].mxu0 %v2110
        %v2278 = vpop.f32.mrb[0].mxu0
        %v2279 = vadd.f32 0.0, %v2278
        %v2280 = vpop.f32.mrb[0].mxu0
        %v2281 = vpop.f32.mrb[0].mxu0
        %v2282 = vadd.f32 0.0, %v2281
        %v2283 = vpop.f32.mrb[0].mxu0
        %2284 = vmatprep.mubr.bf16.mxu0 %v2113
        %2285 = vmatmul.mubr.bf16.gmra.mrb[0].mxu0 %v2112
        %v2286 = vpop.f32.mrb[0].mxu0
        %v2287 = vadd.f32 0.0, %v2286
        %v2288 = vpop.f32.mrb[0].mxu0
        %v2289 = vpop.f32.mrb[0].mxu0
        %v2290 = vadd.f32 0.0, %v2289
        %v2291 = vpop.f32.mrb[0].mxu0
        %2292 = vmatprep.mubr.bf16.mxu0 %v2115
        %2293 = vmatmul.mubr.bf16.gmra.mrb[0].mxu0 %v2114
        %v2294 = vpop.f32.mrb[0].mxu0
        %v2295 = vadd.f32 0.0, %v2294
        %v2296 = vpop.f32.mrb[0].mxu0
        %v2297 = vpop.f32.mrb[0].mxu0
        %v2298 = vadd.f32 0.0, %v2297
        %v2299 = vpop.f32.mrb[0].mxu0
        %2300 = vmatprep.mubr.bf16.mxu0 %v2117
        %2301 = vmatmul.mubr.bf16.gmra.mrb[0].mxu0 %v2116
        %v2302 = vpop.f32.mrb[0].mxu0
        %v2303 = vadd.f32 0.0, %v2302
        %v2304 = vpop.f32.mrb[0].mxu0
        %v2305 = vpop.f32.mrb[0].mxu0
        %v2306 = vadd.f32 0.0, %v2305
        %v2307 = vpop.f32.mrb[0].mxu0
        %2308 = vmatprep.mubr.bf16.mxu0 %v2119
        %2309 = vmatmul.mubr.bf16.gmra.mrb[0].mxu0 %v2118
        %v2310 = vpop.f32.mrb[0].mxu0
        %v2311 = vadd.f32 0.0, %v2310
        %v2312 = vpop.f32.mrb[0].mxu0
        %v2313 = vpop.f32.mrb[0].mxu0
        %v2314 = vadd.f32 0.0, %v2313
        %v2315 = vpop.f32.mrb[0].mxu0
        %2316 = vmatprep.mubr.bf16.mxu0 %v2121
        %2317 = vmatmul.mubr.bf16.gmra.mrb[0].mxu0 %v2120
        %v2318 = vpop.f32.mrb[0].mxu0
        %v2319 = vadd.f32 0.0, %v2318
        %v2320 = vpop.f32.mrb[0].mxu0
        %v2321 = vpop.f32.mrb[0].mxu0
        %v2322 = vadd.f32 0.0, %v2321
        %v2323 = vpop.f32.mrb[0].mxu0
        %2324 = vmatprep.mubr.bf16.mxu0 %v2123
        %2325 = vmatmul.mubr.bf16.gmra.mrb[0].mxu0 %v2122
        %v2326 = vpop.f32.mrb[0].mxu0
        %v2327 = vadd.f32 0.0, %v2326
        %v2328 = vpop.f32.mrb[0].mxu0
        %v2329 = vpop.f32.mrb[0].mxu0
        %v2330 = vadd.f32 0.0, %v2329
        %v2331 = vpop.f32.mrb[0].mxu0
        %2332 = vdwg.mxu0
        %v2333 = vrcp.pop %v1998
        %v2334 = vrcp.pop %v2001
        %v2335 = vrcp.pop %v2004
        %v2336 = vrcp.pop %v2007
        %v2337 = vrcp.pop %v2010
        %v2338 = vrcp.pop %v2013
        %v2339 = vrcp.pop %v2016
        %v2340 = vrcp.pop %v2019
        %v2341 = vrcp.pop %v2022
        %v2342 = vrcp.pop %v2025
        %v2343 = vrcp.pop %v2028
        %v2344 = vrcp.pop %v2031
        %v2345 = vrcp.pop %v2034
        %v2346 = vrcp.pop %v2037
        %v2347 = vrcp.pop %v2040
        %v2348 = vrcp.pop %v2043
        %v2349 = vrcp.pop %v2046
        %v2350 = vrcp.pop %v2049
        %v2351 = vrcp.pop %v2052
        %v2352 = vrcp.pop %v2055
        %v2353 = vrcp.pop %v2058
        %v2354 = vrcp.pop %v2061
        %v2355 = vrcp.pop %v2064
        %v2356 = vrcp.pop %v2067
        %v2357 = vrcp.pop %v2070
        %v2358 = vrcp.pop %v2073
        %v2359 = vrcp.pop %v2076
        %v2360 = vrcp.pop %v2079
        %v2361 = vrcp.pop %v2082
        %v2362 = vrcp.pop %v2085
        %v2363 = vrcp.pop %v2088
        %v2364 = vrcp.pop %v2091
        %v2365 = vmul.f32 %v2207, %v2333
        %v2366 = vmul.f32 %v2210, %v2334
        %v2367 = vmul.f32 %v2215, %v2335
        %v2368 = vmul.f32 %v2218, %v2336
        %v2369 = vmul.f32 %v2223, %v2337
        %v2370 = vmul.f32 %v2226, %v2338
        %v2371 = vmul.f32 %v2231, %v2339
        %v2372 = vmul.f32 %v2234, %v2340
        %v2373 = vmul.f32 %v2239, %v2341
        %v2374 = vmul.f32 %v2242, %v2342
        %v2375 = vmul.f32 %v2247, %v2343
        %v2376 = vmul.f32 %v2250, %v2344
        %v2377 = vmul.f32 %v2255, %v2345
        %v2378 = vmul.f32 %v2258, %v2346
        %v2379 = vmul.f32 %v2263, %v2347
        %v2380 = vmul.f32 %v2266, %v2348
        %v2381 = vmul.f32 %v2271, %v2349
        %v2382 = vmul.f32 %v2274, %v2350
        %v2383 = vmul.f32 %v2279, %v2351
        %v2384 = vmul.f32 %v2282, %v2352
        %v2385 = vmul.f32 %v2287, %v2353
        %v2386 = vmul.f32 %v2290, %v2354
        %v2387 = vmul.f32 %v2295, %v2355
        %v2388 = vmul.f32 %v2298, %v2356
        %v2389 = vmul.f32 %v2303, %v2357
        %v2390 = vmul.f32 %v2306, %v2358
        %v2391 = vmul.f32 %v2311, %v2359
        %v2392 = vmul.f32 %v2314, %v2360
        %v2393 = vmul.f32 %v2319, %v2361
        %v2394 = vmul.f32 %v2322, %v2362
        %v2395 = vmul.f32 %v2327, %v2363
        %v2396 = vmul.f32 %v2330, %v2364
        %2397 = vrot.lane.b32.xlu0 %v264, 64
        %v2398 = vpop.permute.xlu0 %2397
        %2399 = vrot.lane.b32.xlu0 %v265, 64
        %v2400 = vpop.permute.xlu0 %2399
        %2401 = vrot.lane.b32.xlu0 %v266, 64
        %v2402 = vpop.permute.xlu0 %2401
        %2403 = vrot.lane.b32.xlu0 %v267, 64
        %v2404 = vpop.permute.xlu0 %2403
        %2405 = vrot.lane.b32.xlu0 %v268, 64
        %v2406 = vpop.permute.xlu0 %2405
        %2407 = vrot.lane.b32.xlu0 %v269, 64
        %v2408 = vpop.permute.xlu0 %2407
        %2409 = vrot.lane.b32.xlu0 %v270, 64
        %v2410 = vpop.permute.xlu0 %2409
        %2411 = vrot.lane.b32.xlu0 %v271, 64
        %v2412 = vpop.permute.xlu0 %2411
        %2413 = vrot.lane.b32.xlu0 %v272, 64
        %v2414 = vpop.permute.xlu0 %2413
        %2415 = vrot.lane.b32.xlu0 %v273, 64
        %v2416 = vpop.permute.xlu0 %2415
        %2417 = vrot.lane.b32.xlu0 %v274, 64
        %v2418 = vpop.permute.xlu0 %2417
        %2419 = vrot.lane.b32.xlu0 %v275, 64
        %v2420 = vpop.permute.xlu0 %2419
        %2421 = vrot.lane.b32.xlu0 %v276, 64
        %v2422 = vpop.permute.xlu0 %2421
        %2423 = vrot.lane.b32.xlu0 %v277, 64
        %v2424 = vpop.permute.xlu0 %2423
        %2425 = vrot.lane.b32.xlu0 %v278, 64
        %v2426 = vpop.permute.xlu0 %2425
        %2427 = vrot.lane.b32.xlu0 %v279, 64
        %v2428 = vpop.permute.xlu0 %2427
        %2429 = vrot.lane.b32.xlu0 %v312, 64
        %v2430 = vpop.permute.xlu0 %2429
        %2431 = vrot.lane.b32.xlu0 %v313, 64
        %v2432 = vpop.permute.xlu0 %2431
        %2433 = vrot.lane.b32.xlu0 %v314, 64
        %v2434 = vpop.permute.xlu0 %2433
        %2435 = vrot.lane.b32.xlu0 %v315, 64
        %v2436 = vpop.permute.xlu0 %2435
        %2437 = vrot.lane.b32.xlu0 %v316, 64
        %v2438 = vpop.permute.xlu0 %2437
        %2439 = vrot.lane.b32.xlu0 %v317, 64
        %v2440 = vpop.permute.xlu0 %2439
        %2441 = vrot.lane.b32.xlu0 %v318, 64
        %v2442 = vpop.permute.xlu0 %2441
        %2443 = vrot.lane.b32.xlu0 %v319, 64
        %v2444 = vpop.permute.xlu0 %2443
        %2445 = vrot.lane.b32.xlu0 %v320, 64
        %v2446 = vpop.permute.xlu0 %2445
        %2447 = vrot.lane.b32.xlu0 %v321, 64
        %v2448 = vpop.permute.xlu0 %2447
        %2449 = vrot.lane.b32.xlu0 %v322, 64
        %v2450 = vpop.permute.xlu0 %2449
        %2451 = vrot.lane.b32.xlu0 %v323, 64
        %v2452 = vpop.permute.xlu0 %2451
        %2453 = vrot.lane.b32.xlu0 %v324, 64
        %v2454 = vpop.permute.xlu0 %2453
        %2455 = vrot.lane.b32.xlu0 %v325, 64
        %v2456 = vpop.permute.xlu0 %2455
        %2457 = vrot.lane.b32.xlu0 %v326, 64
        %v2458 = vpop.permute.xlu0 %2457
        %2459 = vrot.lane.b32.xlu0 %v327, 64
        %v2460 = vpop.permute.xlu0 %2459
        %v2462 = vsel %vm328, %v2398, 0
        %v2465 = vsel %vm328, %v2400, 0
        %v2468 = vsel %vm328, %v2402, 0
        %v2471 = vsel %vm328, %v2404, 0
        %v2474 = vsel %vm328, %v2406, 0
        %v2477 = vsel %vm328, %v2408, 0
        %v2480 = vsel %vm328, %v2410, 0
        %v2483 = vsel %vm328, %v2412, 0
        %v2486 = vsel %vm328, %v2414, 0
        %v2489 = vsel %vm328, %v2416, 0
        %v2492 = vsel %vm328, %v2418, 0
        %v2495 = vsel %vm328, %v2420, 0
        %v2498 = vsel %vm328, %v2422, 0
        %v2501 = vsel %vm328, %v2424, 0
        %v2504 = vsel %vm328, %v2426, 0
        %v2507 = vsel %vm328, %v2428, 0
        %v2510 = vsel %vm328, %v2430, 0
        %v2513 = vsel %vm328, %v2432, 0
        %v2516 = vsel %vm328, %v2434, 0
        %v2519 = vsel %vm328, %v2436, 0
        %v2522 = vsel %vm328, %v2438, 0
        %v2525 = vsel %vm328, %v2440, 0
        %v2528 = vsel %vm328, %v2442, 0
        %v2531 = vsel %vm328, %v2444, 0
        %v2534 = vsel %vm328, %v2446, 0
        %v2537 = vsel %vm328, %v2448, 0
        %v2540 = vsel %vm328, %v2450, 0
        %v2543 = vsel %vm328, %v2452, 0
        %v2546 = vsel %vm328, %v2454, 0
        %v2549 = vsel %vm328, %v2456, 0
        %v2552 = vsel %vm328, %v2458, 0
        %v2555 = vsel %vm328, %v2460, 0
        %2557 = vmatprep.subr.bf16.mxu0 0
        %2558 = vmatpush1.bf16.xpose.msra.mxu0 %v2510
        %2559 = vmatprep.subr.bf16.mxu0 0
        %2560 = vmatpush1.bf16.xpose.msra.mxu0 %v2513
        %2561 = vmatprep.subr.bf16.mxu0 0
        %2562 = vmatpush1.bf16.xpose.msra.mxu0 %v2516
        %2563 = vmatprep.subr.bf16.mxu0 0
        %2564 = vmatpush1.bf16.xpose.msra.mxu0 %v2519
        %2565 = vmatprep.subr.bf16.mxu0 0
        %2566 = vmatpush1.bf16.xpose.msra.mxu0 %v2522
        %2567 = vmatprep.subr.bf16.mxu0 0
        %2568 = vmatpush1.bf16.xpose.msra.mxu0 %v2525
        %2569 = vmatprep.subr.bf16.mxu0 0
        %2570 = vmatpush1.bf16.xpose.msra.mxu0 %v2528
        %2571 = vmatprep.subr.bf16.mxu0 0
        %2572 = vmatpush1.bf16.xpose.msra.mxu0 %v2531
        %2573 = vmatprep.subr.bf16.mxu0 0
        %2574 = vmatpush1.bf16.xpose.msra.mxu0 %v2534
        %2575 = vmatprep.subr.bf16.mxu0 0
        %2576 = vmatpush1.bf16.xpose.msra.mxu0 %v2537
        %2577 = vmatprep.subr.bf16.mxu0 0
        %2578 = vmatpush1.bf16.xpose.msra.mxu0 %v2540
        %2579 = vmatprep.subr.bf16.mxu0 0
        %2580 = vmatpush1.bf16.xpose.msra.mxu0 %v2543
        %2581 = vmatprep.subr.bf16.mxu0 0
        %2582 = vmatpush1.bf16.xpose.msra.mxu0 %v2546
        %2583 = vmatprep.subr.bf16.mxu0 0
        %2584 = vmatpush1.bf16.xpose.msra.mxu0 %v2549
        %2585 = vmatprep.subr.bf16.mxu0 0
        %2586 = vmatpush1.bf16.xpose.msra.mxu0 %v2552
        %2587 = vmatprep.subr.bf16.mxu0 0
        %2588 = vmatpush1.bf16.xpose.msra.mxu0 %v2555
        %2589 = vmatprep.mubr.bf16.mxu0 0
        %2590 = vmatmul.mubr.bf16.gmra.mrb[0].mxu0 %v2462
        %v2591 = vpop.f32.mrb[0].mxu0
        %v2592 = vadd.f32 0.0, %v2591
        %v2593 = vpop.f32.mrb[0].mxu0
        %v2594 = vadd.f32 0.0, %v2593
        %v2595 = vpop.f32.mrb[0].mxu0
        %v2596 = vadd.f32 0.0, %v2595
        %v2597 = vpop.f32.mrb[0].mxu0
        %v2598 = vadd.f32 0.0, %v2597
        %2599 = vmatprep.mubr.bf16.mxu0 0
        %2600 = vmatmul.mubr.bf16.gmra.mrb[0].mxu0 %v2465
        %v2601 = vpop.f32.mrb[0].mxu0
        %v2602 = vadd.f32 0.0, %v2601
        %v2603 = vpop.f32.mrb[0].mxu0
        %v2604 = vadd.f32 0.0, %v2603
        %v2605 = vpop.f32.mrb[0].mxu0
        %v2606 = vadd.f32 0.0, %v2605
        %v2607 = vpop.f32.mrb[0].mxu0
        %v2608 = vadd.f32 0.0, %v2607
        %2609 = vmatprep.mubr.bf16.mxu0 0
        %2610 = vmatmul.mubr.bf16.gmra.mrb[0].mxu0 %v2468
        %v2611 = vpop.f32.mrb[0].mxu0
        %v2612 = vadd.f32 0.0, %v2611
        %v2613 = vpop.f32.mrb[0].mxu0
        %v2614 = vadd.f32 0.0, %v2613
        %v2615 = vpop.f32.mrb[0].mxu0
        %v2616 = vadd.f32 0.0, %v2615
        %v2617 = vpop.f32.mrb[0].mxu0
        %v2618 = vadd.f32 0.0, %v2617
        %2619 = vmatprep.mubr.bf16.mxu0 0
        %2620 = vmatmul.mubr.bf16.gmra.mrb[0].mxu0 %v2471
        %v2621 = vpop.f32.mrb[0].mxu0
        %v2622 = vadd.f32 0.0, %v2621
        %v2623 = vpop.f32.mrb[0].mxu0
        %v2624 = vadd.f32 0.0, %v2623
        %v2625 = vpop.f32.mrb[0].mxu0
        %v2626 = vadd.f32 0.0, %v2625
        %v2627 = vpop.f32.mrb[0].mxu0
        %v2628 = vadd.f32 0.0, %v2627
        %2629 = vmatprep.mubr.bf16.mxu0 0
        %2630 = vmatmul.mubr.bf16.gmra.mrb[0].mxu0 %v2474
        %v2631 = vpop.f32.mrb[0].mxu0
        %v2632 = vadd.f32 0.0, %v2631
        %v2633 = vpop.f32.mrb[0].mxu0
        %v2634 = vadd.f32 0.0, %v2633
        %v2635 = vpop.f32.mrb[0].mxu0
        %v2636 = vadd.f32 0.0, %v2635
        %v2637 = vpop.f32.mrb[0].mxu0
        %v2638 = vadd.f32 0.0, %v2637
        %2639 = vmatprep.mubr.bf16.mxu0 0
        %2640 = vmatmul.mubr.bf16.gmra.mrb[0].mxu0 %v2477
        %v2641 = vpop.f32.mrb[0].mxu0
        %v2642 = vadd.f32 0.0, %v2641
        %v2643 = vpop.f32.mrb[0].mxu0
        %v2644 = vadd.f32 0.0, %v2643
        %v2645 = vpop.f32.mrb[0].mxu0
        %v2646 = vadd.f32 0.0, %v2645
        %v2647 = vpop.f32.mrb[0].mxu0
        %v2648 = vadd.f32 0.0, %v2647
        %2649 = vmatprep.mubr.bf16.mxu0 0
        %2650 = vmatmul.mubr.bf16.gmra.mrb[0].mxu0 %v2480
        %v2651 = vpop.f32.mrb[0].mxu0
        %v2652 = vadd.f32 0.0, %v2651
        %v2653 = vpop.f32.mrb[0].mxu0
        %v2654 = vadd.f32 0.0, %v2653
        %v2655 = vpop.f32.mrb[0].mxu0
        %v2656 = vadd.f32 0.0, %v2655
        %v2657 = vpop.f32.mrb[0].mxu0
        %v2658 = vadd.f32 0.0, %v2657
        %2659 = vmatprep.mubr.bf16.mxu0 0
        %2660 = vmatmul.mubr.bf16.gmra.mrb[0].mxu0 %v2483
        %v2661 = vpop.f32.mrb[0].mxu0
        %v2662 = vadd.f32 0.0, %v2661
        %v2663 = vpop.f32.mrb[0].mxu0
        %v2664 = vadd.f32 0.0, %v2663
        %v2665 = vpop.f32.mrb[0].mxu0
        %v2666 = vadd.f32 0.0, %v2665
        %v2667 = vpop.f32.mrb[0].mxu0
        %v2668 = vadd.f32 0.0, %v2667
        %2669 = vmatprep.mubr.bf16.mxu0 0
        %2670 = vmatmul.mubr.bf16.gmra.mrb[0].mxu0 %v2486
        %v2671 = vpop.f32.mrb[0].mxu0
        %v2672 = vadd.f32 0.0, %v2671
        %v2673 = vpop.f32.mrb[0].mxu0
        %v2674 = vadd.f32 0.0, %v2673
        %v2675 = vpop.f32.mrb[0].mxu0
        %v2676 = vadd.f32 0.0, %v2675
        %v2677 = vpop.f32.mrb[0].mxu0
        %v2678 = vadd.f32 0.0, %v2677
        %2679 = vmatprep.mubr.bf16.mxu0 0
        %2680 = vmatmul.mubr.bf16.gmra.mrb[0].mxu0 %v2489
        %v2681 = vpop.f32.mrb[0].mxu0
        %v2682 = vadd.f32 0.0, %v2681
        %v2683 = vpop.f32.mrb[0].mxu0
        %v2684 = vadd.f32 0.0, %v2683
        %v2685 = vpop.f32.mrb[0].mxu0
        %v2686 = vadd.f32 0.0, %v2685
        %v2687 = vpop.f32.mrb[0].mxu0
        %v2688 = vadd.f32 0.0, %v2687
        %2689 = vmatprep.mubr.bf16.mxu0 0
        %2690 = vmatmul.mubr.bf16.gmra.mrb[0].mxu0 %v2492
        %v2691 = vpop.f32.mrb[0].mxu0
        %v2692 = vadd.f32 0.0, %v2691
        %v2693 = vpop.f32.mrb[0].mxu0
        %v2694 = vadd.f32 0.0, %v2693
        %v2695 = vpop.f32.mrb[0].mxu0
        %v2696 = vadd.f32 0.0, %v2695
        %v2697 = vpop.f32.mrb[0].mxu0
        %v2698 = vadd.f32 0.0, %v2697
        %2699 = vmatprep.mubr.bf16.mxu0 0
        %2700 = vmatmul.mubr.bf16.gmra.mrb[0].mxu0 %v2495
        %v2701 = vpop.f32.mrb[0].mxu0
        %v2702 = vadd.f32 0.0, %v2701
        %v2703 = vpop.f32.mrb[0].mxu0
        %v2704 = vadd.f32 0.0, %v2703
        %v2705 = vpop.f32.mrb[0].mxu0
        %v2706 = vadd.f32 0.0, %v2705
        %v2707 = vpop.f32.mrb[0].mxu0
        %v2708 = vadd.f32 0.0, %v2707
        %2709 = vmatprep.mubr.bf16.mxu0 0
        %2710 = vmatmul.mubr.bf16.gmra.mrb[0].mxu0 %v2498
        %v2711 = vpop.f32.mrb[0].mxu0
        %v2712 = vadd.f32 0.0, %v2711
        %v2713 = vpop.f32.mrb[0].mxu0
        %v2714 = vadd.f32 0.0, %v2713
        %v2715 = vpop.f32.mrb[0].mxu0
        %v2716 = vadd.f32 0.0, %v2715
        %v2717 = vpop.f32.mrb[0].mxu0
        %v2718 = vadd.f32 0.0, %v2717
        %2719 = vmatprep.mubr.bf16.mxu0 0
        %2720 = vmatmul.mubr.bf16.gmra.mrb[0].mxu0 %v2501
        %v2721 = vpop.f32.mrb[0].mxu0
        %v2722 = vadd.f32 0.0, %v2721
        %v2723 = vpop.f32.mrb[0].mxu0
        %v2724 = vadd.f32 0.0, %v2723
        %v2725 = vpop.f32.mrb[0].mxu0
        %v2726 = vadd.f32 0.0, %v2725
        %v2727 = vpop.f32.mrb[0].mxu0
        %v2728 = vadd.f32 0.0, %v2727
        %2729 = vmatprep.mubr.bf16.mxu0 0
        %2730 = vmatmul.mubr.bf16.gmra.mrb[0].mxu0 %v2504
        %v2731 = vpop.f32.mrb[0].mxu0
        %v2732 = vadd.f32 0.0, %v2731
        %v2733 = vpop.f32.mrb[0].mxu0
        %v2734 = vadd.f32 0.0, %v2733
        %v2735 = vpop.f32.mrb[0].mxu0
        %v2736 = vadd.f32 0.0, %v2735
        %v2737 = vpop.f32.mrb[0].mxu0
        %v2738 = vadd.f32 0.0, %v2737
        %2739 = vmatprep.mubr.bf16.mxu0 0
        %2740 = vmatmul.mubr.bf16.gmra.mrb[0].mxu0 %v2507
        %v2741 = vpop.f32.mrb[0].mxu0
        %v2742 = vadd.f32 0.0, %v2741
        %v2743 = vpop.f32.mrb[0].mxu0
        %v2744 = vadd.f32 0.0, %v2743
        %v2745 = vpop.f32.mrb[0].mxu0
        %v2746 = vadd.f32 0.0, %v2745
        %v2747 = vpop.f32.mrb[0].mxu0
        %v2748 = vadd.f32 0.0, %v2747
        %2749 = vdwg.mxu0
        %v2750 = vmax.f32 %v2592, %v2594
        %2751 = vmax.xlane.f32.xlu0 %v2750
        %v2752 = vpop.xlane.xlu0 %2751
        %v2753 = vmax.f32 %v2596, %v2598
        %2754 = vmax.xlane.f32.xlu0 %v2753
        %v2755 = vpop.xlane.xlu0 %2754
        %v2756 = vmax.f32 %v2602, %v2604
        %2757 = vmax.xlane.f32.xlu0 %v2756
        %v2758 = vpop.xlane.xlu0 %2757
        %v2759 = vmax.f32 %v2606, %v2608
        %2760 = vmax.xlane.f32.xlu0 %v2759
        %v2761 = vpop.xlane.xlu0 %2760
        %v2762 = vmax.f32 %v2612, %v2614
        %2763 = vmax.xlane.f32.xlu0 %v2762
        %v2764 = vpop.xlane.xlu0 %2763
        %v2765 = vmax.f32 %v2616, %v2618
        %2766 = vmax.xlane.f32.xlu0 %v2765
        %v2767 = vpop.xlane.xlu0 %2766
        %v2768 = vmax.f32 %v2622, %v2624
        %2769 = vmax.xlane.f32.xlu0 %v2768
        %v2770 = vpop.xlane.xlu0 %2769
        %v2771 = vmax.f32 %v2626, %v2628
        %2772 = vmax.xlane.f32.xlu0 %v2771
        %v2773 = vpop.xlane.xlu0 %2772
        %v2774 = vmax.f32 %v2632, %v2634
        %2775 = vmax.xlane.f32.xlu0 %v2774
        %v2776 = vpop.xlane.xlu0 %2775
        %v2777 = vmax.f32 %v2636, %v2638
        %2778 = vmax.xlane.f32.xlu0 %v2777
        %v2779 = vpop.xlane.xlu0 %2778
        %v2780 = vmax.f32 %v2642, %v2644
        %2781 = vmax.xlane.f32.xlu0 %v2780
        %v2782 = vpop.xlane.xlu0 %2781
        %v2783 = vmax.f32 %v2646, %v2648
        %2784 = vmax.xlane.f32.xlu0 %v2783
        %v2785 = vpop.xlane.xlu0 %2784
        %v2786 = vmax.f32 %v2652, %v2654
        %2787 = vmax.xlane.f32.xlu0 %v2786
        %v2788 = vpop.xlane.xlu0 %2787
        %v2789 = vmax.f32 %v2656, %v2658
        %2790 = vmax.xlane.f32.xlu0 %v2789
        %v2791 = vpop.xlane.xlu0 %2790
        %v2792 = vmax.f32 %v2662, %v2664
        %2793 = vmax.xlane.f32.xlu0 %v2792
        %v2794 = vpop.xlane.xlu0 %2793
        %v2795 = vmax.f32 %v2666, %v2668
        %2796 = vmax.xlane.f32.xlu0 %v2795
        %v2797 = vpop.xlane.xlu0 %2796
        %v2798 = vmax.f32 %v2672, %v2674
        %2799 = vmax.xlane.f32.xlu0 %v2798
        %v2800 = vpop.xlane.xlu0 %2799
        %v2801 = vmax.f32 %v2676, %v2678
        %2802 = vmax.xlane.f32.xlu0 %v2801
        %v2803 = vpop.xlane.xlu0 %2802
        %v2804 = vmax.f32 %v2682, %v2684
        %2805 = vmax.xlane.f32.xlu0 %v2804
        %v2806 = vpop.xlane.xlu0 %2805
        %v2807 = vmax.f32 %v2686, %v2688
        %2808 = vmax.xlane.f32.xlu0 %v2807
        %v2809 = vpop.xlane.xlu0 %2808
        %v2810 = vmax.f32 %v2692, %v2694
        %2811 = vmax.xlane.f32.xlu0 %v2810
        %v2812 = vpop.xlane.xlu0 %2811
        %v2813 = vmax.f32 %v2696, %v2698
        %2814 = vmax.xlane.f32.xlu0 %v2813
        %v2815 = vpop.xlane.xlu0 %2814
        %v2816 = vmax.f32 %v2702, %v2704
        %2817 = vmax.xlane.f32.xlu0 %v2816
        %v2818 = vpop.xlane.xlu0 %2817
        %v2819 = vmax.f32 %v2706, %v2708
        %2820 = vmax.xlane.f32.xlu0 %v2819
        %v2821 = vpop.xlane.xlu0 %2820
        %v2822 = vmax.f32 %v2712, %v2714
        %2823 = vmax.xlane.f32.xlu0 %v2822
        %v2824 = vpop.xlane.xlu0 %2823
        %v2825 = vmax.f32 %v2716, %v2718
        %2826 = vmax.xlane.f32.xlu0 %v2825
        %v2827 = vpop.xlane.xlu0 %2826
        %v2828 = vmax.f32 %v2722, %v2724
        %2829 = vmax.xlane.f32.xlu0 %v2828
        %v2830 = vpop.xlane.xlu0 %2829
        %v2831 = vmax.f32 %v2726, %v2728
        %2832 = vmax.xlane.f32.xlu0 %v2831
        %v2833 = vpop.xlane.xlu0 %2832
        %v2834 = vmax.f32 %v2732, %v2734
        %2835 = vmax.xlane.f32.xlu0 %v2834
        %v2836 = vpop.xlane.xlu0 %2835
        %v2837 = vmax.f32 %v2736, %v2738
        %2838 = vmax.xlane.f32.xlu0 %v2837
        %v2839 = vpop.xlane.xlu0 %2838
        %v2840 = vmax.f32 %v2742, %v2744
        %2841 = vmax.xlane.f32.xlu0 %v2840
        %v2842 = vpop.xlane.xlu0 %2841
        %v2843 = vmax.f32 %v2746, %v2748
        %2844 = vmax.xlane.f32.xlu0 %v2843
        %v2845 = vpop.xlane.xlu0 %2844
        %v2846 = vsub.f32 %v2592, %v2752
        %v2847 = vsub.f32 %v2594, %v2752
        %v2848 = vsub.f32 %v2596, %v2755
        %v2849 = vsub.f32 %v2598, %v2755
        %v2850 = vsub.f32 %v2602, %v2758
        %v2851 = vsub.f32 %v2604, %v2758
        %v2852 = vsub.f32 %v2606, %v2761
        %v2853 = vsub.f32 %v2608, %v2761
        %v2854 = vsub.f32 %v2612, %v2764
        %v2855 = vsub.f32 %v2614, %v2764
        %v2856 = vsub.f32 %v2616, %v2767
        %v2857 = vsub.f32 %v2618, %v2767
        %v2858 = vsub.f32 %v2622, %v2770
        %v2859 = vsub.f32 %v2624, %v2770
        %v2860 = vsub.f32 %v2626, %v2773
        %v2861 = vsub.f32 %v2628, %v2773
        %v2862 = vsub.f32 %v2632, %v2776
        %v2863 = vsub.f32 %v2634, %v2776
        %v2864 = vsub.f32 %v2636, %v2779
        %v2865 = vsub.f32 %v2638, %v2779
        %v2866 = vsub.f32 %v2642, %v2782
        %v2867 = vsub.f32 %v2644, %v2782
        %v2868 = vsub.f32 %v2646, %v2785
        %v2869 = vsub.f32 %v2648, %v2785
        %v2870 = vsub.f32 %v2652, %v2788
        %v2871 = vsub.f32 %v2654, %v2788
        %v2872 = vsub.f32 %v2656, %v2791
        %v2873 = vsub.f32 %v2658, %v2791
        %v2874 = vsub.f32 %v2662, %v2794
        %v2875 = vsub.f32 %v2664, %v2794
        %v2876 = vsub.f32 %v2666, %v2797
        %v2877 = vsub.f32 %v2668, %v2797
        %v2878 = vsub.f32 %v2672, %v2800
        %v2879 = vsub.f32 %v2674, %v2800
        %v2880 = vsub.f32 %v2676, %v2803
        %v2881 = vsub.f32 %v2678, %v2803
        %v2882 = vsub.f32 %v2682, %v2806
        %v2883 = vsub.f32 %v2684, %v2806
        %v2884 = vsub.f32 %v2686, %v2809
        %v2885 = vsub.f32 %v2688, %v2809
        %v2886 = vsub.f32 %v2692, %v2812
        %v2887 = vsub.f32 %v2694, %v2812
        %v2888 = vsub.f32 %v2696, %v2815
        %v2889 = vsub.f32 %v2698, %v2815
        %v2890 = vsub.f32 %v2702, %v2818
        %v2891 = vsub.f32 %v2704, %v2818
        %v2892 = vsub.f32 %v2706, %v2821
        %v2893 = vsub.f32 %v2708, %v2821
        %v2894 = vsub.f32 %v2712, %v2824
        %v2895 = vsub.f32 %v2714, %v2824
        %v2896 = vsub.f32 %v2716, %v2827
        %v2897 = vsub.f32 %v2718, %v2827
        %v2898 = vsub.f32 %v2722, %v2830
        %v2899 = vsub.f32 %v2724, %v2830
        %v2900 = vsub.f32 %v2726, %v2833
        %v2901 = vsub.f32 %v2728, %v2833
        %v2902 = vsub.f32 %v2732, %v2836
        %v2903 = vsub.f32 %v2734, %v2836
        %v2904 = vsub.f32 %v2736, %v2839
        %v2905 = vsub.f32 %v2738, %v2839
        %v2906 = vsub.f32 %v2742, %v2842
        %v2907 = vsub.f32 %v2744, %v2842
        %v2908 = vsub.f32 %v2746, %v2845
        %v2909 = vsub.f32 %v2748, %v2845
        %v2910 = vmul.f32 %v2846, 1.442695
        %v2911 = vpow.pop %v2910
        %v2912 = vmul.f32 %v2847, 1.442695
        %v2913 = vpow.pop %v2912
        %v2914 = vmul.f32 %v2848, 1.442695
        %v2915 = vpow.pop %v2914
        %v2916 = vmul.f32 %v2849, 1.442695
        %v2917 = vpow.pop %v2916
        %v2918 = vmul.f32 %v2850, 1.442695
        %v2919 = vpow.pop %v2918
        %v2920 = vmul.f32 %v2851, 1.442695
        %v2921 = vpow.pop %v2920
        %v2922 = vmul.f32 %v2852, 1.442695
        %v2923 = vpow.pop %v2922
        %v2924 = vmul.f32 %v2853, 1.442695
        %v2925 = vpow.pop %v2924
        %v2926 = vmul.f32 %v2854, 1.442695
        %v2927 = vpow.pop %v2926
        %v2928 = vmul.f32 %v2855, 1.442695
        %v2929 = vpow.pop %v2928
        %v2930 = vmul.f32 %v2856, 1.442695
        %v2931 = vpow.pop %v2930
        %v2932 = vmul.f32 %v2857, 1.442695
        %v2933 = vpow.pop %v2932
        %v2934 = vmul.f32 %v2858, 1.442695
        %v2935 = vpow.pop %v2934
        %v2936 = vmul.f32 %v2859, 1.442695
        %v2937 = vpow.pop %v2936
        %v2938 = vmul.f32 %v2860, 1.442695
        %v2939 = vpow.pop %v2938
        %v2940 = vmul.f32 %v2861, 1.442695
        %v2941 = vpow.pop %v2940
        %v2942 = vmul.f32 %v2862, 1.442695
        %v2943 = vpow.pop %v2942
        %v2944 = vmul.f32 %v2863, 1.442695
        %v2945 = vpow.pop %v2944
        %v2946 = vmul.f32 %v2864, 1.442695
        %v2947 = vpow.pop %v2946
        %v2948 = vmul.f32 %v2865, 1.442695
        %v2949 = vpow.pop %v2948
        %v2950 = vmul.f32 %v2866, 1.442695
        %v2951 = vpow.pop %v2950
        %v2952 = vmul.f32 %v2867, 1.442695
        %v2953 = vpow.pop %v2952
        %v2954 = vmul.f32 %v2868, 1.442695
        %v2955 = vpow.pop %v2954
        %v2956 = vmul.f32 %v2869, 1.442695
        %v2957 = vpow.pop %v2956
        %v2958 = vmul.f32 %v2870, 1.442695
        %v2959 = vpow.pop %v2958
        %v2960 = vmul.f32 %v2871, 1.442695
        %v2961 = vpow.pop %v2960
        %v2962 = vmul.f32 %v2872, 1.442695
        %v2963 = vpow.pop %v2962
        %v2964 = vmul.f32 %v2873, 1.442695
        %v2965 = vpow.pop %v2964
        %v2966 = vmul.f32 %v2874, 1.442695
        %v2967 = vpow.pop %v2966
        %v2968 = vmul.f32 %v2875, 1.442695
        %v2969 = vpow.pop %v2968
        %v2970 = vmul.f32 %v2876, 1.442695
        %v2971 = vpow.pop %v2970
        %v2972 = vmul.f32 %v2877, 1.442695
        %v2973 = vpow.pop %v2972
        %v2974 = vmul.f32 %v2878, 1.442695
        %v2975 = vpow.pop %v2974
        %v2976 = vmul.f32 %v2879, 1.442695
        %v2977 = vpow.pop %v2976
        %v2978 = vmul.f32 %v2880, 1.442695
        %v2979 = vpow.pop %v2978
        %v2980 = vmul.f32 %v2881, 1.442695
        %v2981 = vpow.pop %v2980
        %v2982 = vmul.f32 %v2882, 1.442695
        %v2983 = vpow.pop %v2982
        %v2984 = vmul.f32 %v2883, 1.442695
        %v2985 = vpow.pop %v2984
        %v2986 = vmul.f32 %v2884, 1.442695
        %v2987 = vpow.pop %v2986
        %v2988 = vmul.f32 %v2885, 1.442695
        %v2989 = vpow.pop %v2988
        %v2990 = vmul.f32 %v2886, 1.442695
        %v2991 = vpow.pop %v2990
        %v2992 = vmul.f32 %v2887, 1.442695
        %v2993 = vpow.pop %v2992
        %v2994 = vmul.f32 %v2888, 1.442695
        %v2995 = vpow.pop %v2994
        %v2996 = vmul.f32 %v2889, 1.442695
        %v2997 = vpow.pop %v2996
        %v2998 = vmul.f32 %v2890, 1.442695
        %v2999 = vpow.pop %v2998
        %v3000 = vmul.f32 %v2891, 1.442695
        %v3001 = vpow.pop %v3000
        %v3002 = vmul.f32 %v2892, 1.442695
        %v3003 = vpow.pop %v3002
        %v3004 = vmul.f32 %v2893, 1.442695
        %v3005 = vpow.pop %v3004
        %v3006 = vmul.f32 %v2894, 1.442695
        %v3007 = vpow.pop %v3006
        %v3008 = vmul.f32 %v2895, 1.442695
        %v3009 = vpow.pop %v3008
        %v3010 = vmul.f32 %v2896, 1.442695
        %v3011 = vpow.pop %v3010
        %v3012 = vmul.f32 %v2897, 1.442695
        %v3013 = vpow.pop %v3012
        %v3014 = vmul.f32 %v2898, 1.442695
        %v3015 = vpow.pop %v3014
        %v3016 = vmul.f32 %v2899, 1.442695
        %v3017 = vpow.pop %v3016
        %v3018 = vmul.f32 %v2900, 1.442695
        %v3019 = vpow.pop %v3018
        %v3020 = vmul.f32 %v2901, 1.442695
        %v3021 = vpow.pop %v3020
        %v3022 = vmul.f32 %v2902, 1.442695
        %v3023 = vpow.pop %v3022
        %v3024 = vmul.f32 %v2903, 1.442695
        %v3025 = vpow.pop %v3024
        %v3026 = vmul.f32 %v2904, 1.442695
        %v3027 = vpow.pop %v3026
        %v3028 = vmul.f32 %v2905, 1.442695
        %v3029 = vpow.pop %v3028
        %v3030 = vmul.f32 %v2906, 1.442695
        %v3031 = vpow.pop %v3030
        %v3032 = vmul.f32 %v2907, 1.442695
        %v3033 = vpow.pop %v3032
        %v3034 = vmul.f32 %v2908, 1.442695
        %v3035 = vpow.pop %v3034
        %v3036 = vmul.f32 %v2909, 1.442695
        %v3037 = vpow.pop %v3036
        %v3038 = vadd.f32 %v2911, %v2913
        %3039 = vadd.xlane.f32.xlu0 %v3038
        %v3040 = vpop.xlane.xlu0 %3039
        %v3041 = vadd.f32 %v2915, %v2917
        %3042 = vadd.xlane.f32.xlu0 %v3041
        %v3043 = vpop.xlane.xlu0 %3042
        %v3044 = vadd.f32 %v2919, %v2921
        %3045 = vadd.xlane.f32.xlu0 %v3044
        %v3046 = vpop.xlane.xlu0 %3045
        %v3047 = vadd.f32 %v2923, %v2925
        %3048 = vadd.xlane.f32.xlu0 %v3047
        %v3049 = vpop.xlane.xlu0 %3048
        %v3050 = vadd.f32 %v2927, %v2929
        %3051 = vadd.xlane.f32.xlu0 %v3050
        %v3052 = vpop.xlane.xlu0 %3051
        %v3053 = vadd.f32 %v2931, %v2933
        %3054 = vadd.xlane.f32.xlu0 %v3053
        %v3055 = vpop.xlane.xlu0 %3054
        %v3056 = vadd.f32 %v2935, %v2937
        %3057 = vadd.xlane.f32.xlu0 %v3056
        %v3058 = vpop.xlane.xlu0 %3057
        %v3059 = vadd.f32 %v2939, %v2941
        %3060 = vadd.xlane.f32.xlu0 %v3059
        %v3061 = vpop.xlane.xlu0 %3060
        %v3062 = vadd.f32 %v2943, %v2945
        %3063 = vadd.xlane.f32.xlu0 %v3062
        %v3064 = vpop.xlane.xlu0 %3063
        %v3065 = vadd.f32 %v2947, %v2949
        %3066 = vadd.xlane.f32.xlu0 %v3065
        %v3067 = vpop.xlane.xlu0 %3066
        %v3068 = vadd.f32 %v2951, %v2953
        %3069 = vadd.xlane.f32.xlu0 %v3068
        %v3070 = vpop.xlane.xlu0 %3069
        %v3071 = vadd.f32 %v2955, %v2957
        %3072 = vadd.xlane.f32.xlu0 %v3071
        %v3073 = vpop.xlane.xlu0 %3072
        %v3074 = vadd.f32 %v2959, %v2961
        %3075 = vadd.xlane.f32.xlu0 %v3074
        %v3076 = vpop.xlane.xlu0 %3075
        %v3077 = vadd.f32 %v2963, %v2965
        %3078 = vadd.xlane.f32.xlu0 %v3077
        %v3079 = vpop.xlane.xlu0 %3078
        %v3080 = vadd.f32 %v2967, %v2969
        %3081 = vadd.xlane.f32.xlu0 %v3080
        %v3082 = vpop.xlane.xlu0 %3081
        %v3083 = vadd.f32 %v2971, %v2973
        %3084 = vadd.xlane.f32.xlu0 %v3083
        %v3085 = vpop.xlane.xlu0 %3084
        %v3086 = vadd.f32 %v2975, %v2977
        %3087 = vadd.xlane.f32.xlu0 %v3086
        %v3088 = vpop.xlane.xlu0 %3087
        %v3089 = vadd.f32 %v2979, %v2981
        %3090 = vadd.xlane.f32.xlu0 %v3089
        %v3091 = vpop.xlane.xlu0 %3090
        %v3092 = vadd.f32 %v2983, %v2985
        %3093 = vadd.xlane.f32.xlu0 %v3092
        %v3094 = vpop.xlane.xlu0 %3093
        %v3095 = vadd.f32 %v2987, %v2989
        %3096 = vadd.xlane.f32.xlu0 %v3095
        %v3097 = vpop.xlane.xlu0 %3096
        %v3098 = vadd.f32 %v2991, %v2993
        %3099 = vadd.xlane.f32.xlu0 %v3098
        %v3100 = vpop.xlane.xlu0 %3099
        %v3101 = vadd.f32 %v2995, %v2997
        %3102 = vadd.xlane.f32.xlu0 %v3101
        %v3103 = vpop.xlane.xlu0 %3102
        %v3104 = vadd.f32 %v2999, %v3001
        %3105 = vadd.xlane.f32.xlu0 %v3104
        %v3106 = vpop.xlane.xlu0 %3105
        %v3107 = vadd.f32 %v3003, %v3005
        %3108 = vadd.xlane.f32.xlu0 %v3107
        %v3109 = vpop.xlane.xlu0 %3108
        %v3110 = vadd.f32 %v3007, %v3009
        %3111 = vadd.xlane.f32.xlu0 %v3110
        %v3112 = vpop.xlane.xlu0 %3111
        %v3113 = vadd.f32 %v3011, %v3013
        %3114 = vadd.xlane.f32.xlu0 %v3113
        %v3115 = vpop.xlane.xlu0 %3114
        %v3116 = vadd.f32 %v3015, %v3017
        %3117 = vadd.xlane.f32.xlu0 %v3116
        %v3118 = vpop.xlane.xlu0 %3117
        %v3119 = vadd.f32 %v3019, %v3021
        %3120 = vadd.xlane.f32.xlu0 %v3119
        %v3121 = vpop.xlane.xlu0 %3120
        %v3122 = vadd.f32 %v3023, %v3025
        %3123 = vadd.xlane.f32.xlu0 %v3122
        %v3124 = vpop.xlane.xlu0 %3123
        %v3125 = vadd.f32 %v3027, %v3029
        %3126 = vadd.xlane.f32.xlu0 %v3125
        %v3127 = vpop.xlane.xlu0 %3126
        %v3128 = vadd.f32 %v3031, %v3033
        %3129 = vadd.xlane.f32.xlu0 %v3128
        %v3130 = vpop.xlane.xlu0 %3129
        %v3131 = vadd.f32 %v3035, %v3037
        %3132 = vadd.xlane.f32.xlu0 %v3131
        %v3133 = vpop.xlane.xlu0 %3132
        %v3134 = vpack.c.bf16 %v2915, %v2911
        %v3135 = vpack.c.bf16 %v2917, %v2913
        %v3136 = vpack.c.bf16 %v2923, %v2919
        %v3137 = vpack.c.bf16 %v2925, %v2921
        %v3138 = vpack.c.bf16 %v2931, %v2927
        %v3139 = vpack.c.bf16 %v2933, %v2929
        %v3140 = vpack.c.bf16 %v2939, %v2935
        %v3141 = vpack.c.bf16 %v2941, %v2937
        %v3142 = vpack.c.bf16 %v2947, %v2943
        %v3143 = vpack.c.bf16 %v2949, %v2945
        %v3144 = vpack.c.bf16 %v2955, %v2951
        %v3145 = vpack.c.bf16 %v2957, %v2953
        %v3146 = vpack.c.bf16 %v2963, %v2959
        %v3147 = vpack.c.bf16 %v2965, %v2961
        %v3148 = vpack.c.bf16 %v2971, %v2967
        %v3149 = vpack.c.bf16 %v2973, %v2969
        %v3150 = vpack.c.bf16 %v2979, %v2975
        %v3151 = vpack.c.bf16 %v2981, %v2977
        %v3152 = vpack.c.bf16 %v2987, %v2983
        %v3153 = vpack.c.bf16 %v2989, %v2985
        %v3154 = vpack.c.bf16 %v2995, %v2991
        %v3155 = vpack.c.bf16 %v2997, %v2993
        %v3156 = vpack.c.bf16 %v3003, %v2999
        %v3157 = vpack.c.bf16 %v3005, %v3001
        %v3158 = vpack.c.bf16 %v3011, %v3007
        %v3159 = vpack.c.bf16 %v3013, %v3009
        %v3160 = vpack.c.bf16 %v3019, %v3015
        %v3161 = vpack.c.bf16 %v3021, %v3017
        %v3162 = vpack.c.bf16 %v3027, %v3023
        %v3163 = vpack.c.bf16 %v3029, %v3025
        %v3164 = vpack.c.bf16 %v3035, %v3031
        %v3165 = vpack.c.bf16 %v3037, %v3033
        %3166 = vrot.lane.b32.xlu0 %v1098, 64
        %v3167 = vpop.permute.xlu0 %3166
        %3168 = vrot.lane.b32.xlu0 %v1099, 64
        %v3169 = vpop.permute.xlu0 %3168
        %3170 = vrot.lane.b32.xlu0 %v1100, 64
        %v3171 = vpop.permute.xlu0 %3170
        %3172 = vrot.lane.b32.xlu0 %v1101, 64
        %v3173 = vpop.permute.xlu0 %3172
        %3174 = vrot.lane.b32.xlu0 %v1102, 64
        %v3175 = vpop.permute.xlu0 %3174
        %3176 = vrot.lane.b32.xlu0 %v1103, 64
        %v3177 = vpop.permute.xlu0 %3176
        %3178 = vrot.lane.b32.xlu0 %v1104, 64
        %v3179 = vpop.permute.xlu0 %3178
        %3180 = vrot.lane.b32.xlu0 %v1105, 64
        %v3181 = vpop.permute.xlu0 %3180
        %3182 = vrot.lane.b32.xlu0 %v1106, 64
        %v3183 = vpop.permute.xlu0 %3182
        %3184 = vrot.lane.b32.xlu0 %v1107, 64
        %v3185 = vpop.permute.xlu0 %3184
        %3186 = vrot.lane.b32.xlu0 %v1108, 64
        %v3187 = vpop.permute.xlu0 %3186
        %3188 = vrot.lane.b32.xlu0 %v1109, 64
        %v3189 = vpop.permute.xlu0 %3188
        %3190 = vrot.lane.b32.xlu0 %v1110, 64
        %v3191 = vpop.permute.xlu0 %3190
        %3192 = vrot.lane.b32.xlu0 %v1111, 64
        %v3193 = vpop.permute.xlu0 %3192
        %3194 = vrot.lane.b32.xlu0 %v1112, 64
        %v3195 = vpop.permute.xlu0 %3194
        %3196 = vrot.lane.b32.xlu0 %v1113, 64
        %v3197 = vpop.permute.xlu0 %3196
        %3214 = vmatprep.subr.bf16.mxu0 0
        %3215 = vmatpush1.bf16.msra.mxu0 %v3167
        %3216 = vmatprep.subr.bf16.mxu0 0
        %3217 = vmatpush1.bf16.msra.mxu0 %v3169
        %3218 = vmatprep.subr.bf16.mxu0 0
        %3219 = vmatpush1.bf16.msra.mxu0 %v3171
        %3220 = vmatprep.subr.bf16.mxu0 0
        %3221 = vmatpush1.bf16.msra.mxu0 %v3173
        %3222 = vmatprep.subr.bf16.mxu0 0
        %3223 = vmatpush1.bf16.msra.mxu0 %v3175
        %3224 = vmatprep.subr.bf16.mxu0 0
        %3225 = vmatpush1.bf16.msra.mxu0 %v3177
        %3226 = vmatprep.subr.bf16.mxu0 0
        %3227 = vmatpush1.bf16.msra.mxu0 %v3179
        %3228 = vmatprep.subr.bf16.mxu0 0
        %3229 = vmatpush1.bf16.msra.mxu0 %v3181
        %3230 = vmatprep.subr.bf16.mxu0 0
        %3231 = vmatpush1.bf16.msra.mxu0 %v3183
        %3232 = vmatprep.subr.bf16.mxu0 0
        %3233 = vmatpush1.bf16.msra.mxu0 %v3185
        %3234 = vmatprep.subr.bf16.mxu0 0
        %3235 = vmatpush1.bf16.msra.mxu0 %v3187
        %3236 = vmatprep.subr.bf16.mxu0 0
        %3237 = vmatpush1.bf16.msra.mxu0 %v3189
        %3238 = vmatprep.subr.bf16.mxu0 0
        %3239 = vmatpush1.bf16.msra.mxu0 %v3191
        %3240 = vmatprep.subr.bf16.mxu0 0
        %3241 = vmatpush1.bf16.msra.mxu0 %v3193
        %3242 = vmatprep.subr.bf16.mxu0 0
        %3243 = vmatpush1.bf16.msra.mxu0 %v3195
        %3244 = vmatprep.subr.bf16.mxu0 0
        %3245 = vmatpush1.bf16.msra.mxu0 %v3197
        %3246 = vmatprep.mubr.bf16.mxu0 %v3135
        %3247 = vmatmul.mubr.bf16.gmra.mrb[0].mxu0 %v3134
        %v3248 = vpop.f32.mrb[0].mxu0
        %v3249 = vadd.f32 0.0, %v3248
        %v3250 = vpop.f32.mrb[0].mxu0
        %v3251 = vpop.f32.mrb[0].mxu0
        %v3252 = vadd.f32 0.0, %v3251
        %v3253 = vpop.f32.mrb[0].mxu0
        %3254 = vmatprep.mubr.bf16.mxu0 %v3137
        %3255 = vmatmul.mubr.bf16.gmra.mrb[0].mxu0 %v3136
        %v3256 = vpop.f32.mrb[0].mxu0
        %v3257 = vadd.f32 0.0, %v3256
        %v3258 = vpop.f32.mrb[0].mxu0
        %v3259 = vpop.f32.mrb[0].mxu0
        %v3260 = vadd.f32 0.0, %v3259
        %v3261 = vpop.f32.mrb[0].mxu0
        %3262 = vmatprep.mubr.bf16.mxu0 %v3139
        %3263 = vmatmul.mubr.bf16.gmra.mrb[0].mxu0 %v3138
        %v3264 = vpop.f32.mrb[0].mxu0
        %v3265 = vadd.f32 0.0, %v3264
        %v3266 = vpop.f32.mrb[0].mxu0
        %v3267 = vpop.f32.mrb[0].mxu0
        %v3268 = vadd.f32 0.0, %v3267
        %v3269 = vpop.f32.mrb[0].mxu0
        %3270 = vmatprep.mubr.bf16.mxu0 %v3141
        %3271 = vmatmul.mubr.bf16.gmra.mrb[0].mxu0 %v3140
        %v3272 = vpop.f32.mrb[0].mxu0
        %v3273 = vadd.f32 0.0, %v3272
        %v3274 = vpop.f32.mrb[0].mxu0
        %v3275 = vpop.f32.mrb[0].mxu0
        %v3276 = vadd.f32 0.0, %v3275
        %v3277 = vpop.f32.mrb[0].mxu0
        %3278 = vmatprep.mubr.bf16.mxu0 %v3143
        %3279 = vmatmul.mubr.bf16.gmra.mrb[0].mxu0 %v3142
        %v3280 = vpop.f32.mrb[0].mxu0
        %v3281 = vadd.f32 0.0, %v3280
        %v3282 = vpop.f32.mrb[0].mxu0
        %v3283 = vpop.f32.mrb[0].mxu0
        %v3284 = vadd.f32 0.0, %v3283
        %v3285 = vpop.f32.mrb[0].mxu0
        %3286 = vmatprep.mubr.bf16.mxu0 %v3145
        %3287 = vmatmul.mubr.bf16.gmra.mrb[0].mxu0 %v3144
        %v3288 = vpop.f32.mrb[0].mxu0
        %v3289 = vadd.f32 0.0, %v3288
        %v3290 = vpop.f32.mrb[0].mxu0
        %v3291 = vpop.f32.mrb[0].mxu0
        %v3292 = vadd.f32 0.0, %v3291
        %v3293 = vpop.f32.mrb[0].mxu0
        %3294 = vmatprep.mubr.bf16.mxu0 %v3147
        %3295 = vmatmul.mubr.bf16.gmra.mrb[0].mxu0 %v3146
        %v3296 = vpop.f32.mrb[0].mxu0
        %v3297 = vadd.f32 0.0, %v3296
        %v3298 = vpop.f32.mrb[0].mxu0
        %v3299 = vpop.f32.mrb[0].mxu0
        %v3300 = vadd.f32 0.0, %v3299
        %v3301 = vpop.f32.mrb[0].mxu0
        %3302 = vmatprep.mubr.bf16.mxu0 %v3149
        %3303 = vmatmul.mubr.bf16.gmra.mrb[0].mxu0 %v3148
        %v3304 = vpop.f32.mrb[0].mxu0
        %v3305 = vadd.f32 0.0, %v3304
        %v3306 = vpop.f32.mrb[0].mxu0
        %v3307 = vpop.f32.mrb[0].mxu0
        %v3308 = vadd.f32 0.0, %v3307
        %v3309 = vpop.f32.mrb[0].mxu0
        %3310 = vmatprep.mubr.bf16.mxu0 %v3151
        %3311 = vmatmul.mubr.bf16.gmra.mrb[0].mxu0 %v3150
        %v3312 = vpop.f32.mrb[0].mxu0
        %v3313 = vadd.f32 0.0, %v3312
        %v3314 = vpop.f32.mrb[0].mxu0
        %v3315 = vpop.f32.mrb[0].mxu0
        %v3316 = vadd.f32 0.0, %v3315
        %v3317 = vpop.f32.mrb[0].mxu0
        %3318 = vmatprep.mubr.bf16.mxu0 %v3153
        %3319 = vmatmul.mubr.bf16.gmra.mrb[0].mxu0 %v3152
        %v3320 = vpop.f32.mrb[0].mxu0
        %v3321 = vadd.f32 0.0, %v3320
        %v3322 = vpop.f32.mrb[0].mxu0
        %v3323 = vpop.f32.mrb[0].mxu0
        %v3324 = vadd.f32 0.0, %v3323
        %v3325 = vpop.f32.mrb[0].mxu0
        %3326 = vmatprep.mubr.bf16.mxu0 %v3155
        %3327 = vmatmul.mubr.bf16.gmra.mrb[0].mxu0 %v3154
        %v3328 = vpop.f32.mrb[0].mxu0
        %v3329 = vadd.f32 0.0, %v3328
        %v3330 = vpop.f32.mrb[0].mxu0
        %v3331 = vpop.f32.mrb[0].mxu0
        %v3332 = vadd.f32 0.0, %v3331
        %v3333 = vpop.f32.mrb[0].mxu0
        %3334 = vmatprep.mubr.bf16.mxu0 %v3157
        %3335 = vmatmul.mubr.bf16.gmra.mrb[0].mxu0 %v3156
        %v3336 = vpop.f32.mrb[0].mxu0
        %v3337 = vadd.f32 0.0, %v3336
        %v3338 = vpop.f32.mrb[0].mxu0
        %v3339 = vpop.f32.mrb[0].mxu0
        %v3340 = vadd.f32 0.0, %v3339
        %v3341 = vpop.f32.mrb[0].mxu0
        %3342 = vmatprep.mubr.bf16.mxu0 %v3159
        %3343 = vmatmul.mubr.bf16.gmra.mrb[0].mxu0 %v3158
        %v3344 = vpop.f32.mrb[0].mxu0
        %v3345 = vadd.f32 0.0, %v3344
        %v3346 = vpop.f32.mrb[0].mxu0
        %v3347 = vpop.f32.mrb[0].mxu0
        %v3348 = vadd.f32 0.0, %v3347
        %v3349 = vpop.f32.mrb[0].mxu0
        %3350 = vmatprep.mubr.bf16.mxu0 %v3161
        %3351 = vmatmul.mubr.bf16.gmra.mrb[0].mxu0 %v3160
        %v3352 = vpop.f32.mrb[0].mxu0
        %v3353 = vadd.f32 0.0, %v3352
        %v3354 = vpop.f32.mrb[0].mxu0
        %v3355 = vpop.f32.mrb[0].mxu0
        %v3356 = vadd.f32 0.0, %v3355
        %v3357 = vpop.f32.mrb[0].mxu0
        %3358 = vmatprep.mubr.bf16.mxu0 %v3163
        %3359 = vmatmul.mubr.bf16.gmra.mrb[0].mxu0 %v3162
        %v3360 = vpop.f32.mrb[0].mxu0
        %v3361 = vadd.f32 0.0, %v3360
        %v3362 = vpop.f32.mrb[0].mxu0
        %v3363 = vpop.f32.mrb[0].mxu0
        %v3364 = vadd.f32 0.0, %v3363
        %v3365 = vpop.f32.mrb[0].mxu0
        %3366 = vmatprep.mubr.bf16.mxu0 %v3165
        %3367 = vmatmul.mubr.bf16.gmra.mrb[0].mxu0 %v3164
        %v3368 = vpop.f32.mrb[0].mxu0
        %v3369 = vadd.f32 0.0, %v3368
        %v3370 = vpop.f32.mrb[0].mxu0
        %v3371 = vpop.f32.mrb[0].mxu0
        %v3372 = vadd.f32 0.0, %v3371
        %v3373 = vpop.f32.mrb[0].mxu0
        %3374 = vdwg.mxu0
        %v3375 = vrcp.pop %v3040
        %v3376 = vrcp.pop %v3043
        %v3377 = vrcp.pop %v3046
        %v3378 = vrcp.pop %v3049
        %v3379 = vrcp.pop %v3052
        %v3380 = vrcp.pop %v3055
        %v3381 = vrcp.pop %v3058
        %v3382 = vrcp.pop %v3061
        %v3383 = vrcp.pop %v3064
        %v3384 = vrcp.pop %v3067
        %v3385 = vrcp.pop %v3070
        %v3386 = vrcp.pop %v3073
        %v3387 = vrcp.pop %v3076
        %v3388 = vrcp.pop %v3079
        %v3389 = vrcp.pop %v3082
        %v3390 = vrcp.pop %v3085
        %v3391 = vrcp.pop %v3088
        %v3392 = vrcp.pop %v3091
        %v3393 = vrcp.pop %v3094
        %v3394 = vrcp.pop %v3097
        %v3395 = vrcp.pop %v3100
        %v3396 = vrcp.pop %v3103
        %v3397 = vrcp.pop %v3106
        %v3398 = vrcp.pop %v3109
        %v3399 = vrcp.pop %v3112
        %v3400 = vrcp.pop %v3115
        %v3401 = vrcp.pop %v3118
        %v3402 = vrcp.pop %v3121
        %v3403 = vrcp.pop %v3124
        %v3404 = vrcp.pop %v3127
        %v3405 = vrcp.pop %v3130
        %v3406 = vrcp.pop %v3133
        %v3407 = vmul.f32 %v3249, %v3375
        %v3408 = vmul.f32 %v3252, %v3376
        %v3409 = vmul.f32 %v3257, %v3377
        %v3410 = vmul.f32 %v3260, %v3378
        %v3411 = vmul.f32 %v3265, %v3379
        %v3412 = vmul.f32 %v3268, %v3380
        %v3413 = vmul.f32 %v3273, %v3381
        %v3414 = vmul.f32 %v3276, %v3382
        %v3415 = vmul.f32 %v3281, %v3383
        %v3416 = vmul.f32 %v3284, %v3384
        %v3417 = vmul.f32 %v3289, %v3385
        %v3418 = vmul.f32 %v3292, %v3386
        %v3419 = vmul.f32 %v3297, %v3387
        %v3420 = vmul.f32 %v3300, %v3388
        %v3421 = vmul.f32 %v3305, %v3389
        %v3422 = vmul.f32 %v3308, %v3390
        %v3423 = vmul.f32 %v3313, %v3391
        %v3424 = vmul.f32 %v3316, %v3392
        %v3425 = vmul.f32 %v3321, %v3393
        %v3426 = vmul.f32 %v3324, %v3394
        %v3427 = vmul.f32 %v3329, %v3395
        %v3428 = vmul.f32 %v3332, %v3396
        %v3429 = vmul.f32 %v3337, %v3397
        %v3430 = vmul.f32 %v3340, %v3398
        %v3431 = vmul.f32 %v3345, %v3399
        %v3432 = vmul.f32 %v3348, %v3400
        %v3433 = vmul.f32 %v3353, %v3401
        %v3434 = vmul.f32 %v3356, %v3402
        %v3435 = vmul.f32 %v3361, %v3403
        %v3436 = vmul.f32 %v3364, %v3404
        %v3437 = vmul.f32 %v3369, %v3405
        %v3438 = vmul.f32 %v3372, %v3406
        %3439 = vrot.lane.b32.xlu0 %v264, 32
        %v3440 = vpop.permute.xlu0 %3439
        %3441 = vrot.lane.b32.xlu0 %v265, 32
        %v3442 = vpop.permute.xlu0 %3441
        %3443 = vrot.lane.b32.xlu0 %v266, 32
        %v3444 = vpop.permute.xlu0 %3443
        %3445 = vrot.lane.b32.xlu0 %v267, 32
        %v3446 = vpop.permute.xlu0 %3445
        %3447 = vrot.lane.b32.xlu0 %v268, 32
        %v3448 = vpop.permute.xlu0 %3447
        %3449 = vrot.lane.b32.xlu0 %v269, 32
        %v3450 = vpop.permute.xlu0 %3449
        %3451 = vrot.lane.b32.xlu0 %v270, 32
        %v3452 = vpop.permute.xlu0 %3451
        %3453 = vrot.lane.b32.xlu0 %v271, 32
        %v3454 = vpop.permute.xlu0 %3453
        %3455 = vrot.lane.b32.xlu0 %v272, 32
        %v3456 = vpop.permute.xlu0 %3455
        %3457 = vrot.lane.b32.xlu0 %v273, 32
        %v3458 = vpop.permute.xlu0 %3457
        %3459 = vrot.lane.b32.xlu0 %v274, 32
        %v3460 = vpop.permute.xlu0 %3459
        %3461 = vrot.lane.b32.xlu0 %v275, 32
        %v3462 = vpop.permute.xlu0 %3461
        %3463 = vrot.lane.b32.xlu0 %v276, 32
        %v3464 = vpop.permute.xlu0 %3463
        %3465 = vrot.lane.b32.xlu0 %v277, 32
        %v3466 = vpop.permute.xlu0 %3465
        %3467 = vrot.lane.b32.xlu0 %v278, 32
        %v3468 = vpop.permute.xlu0 %3467
        %3469 = vrot.lane.b32.xlu0 %v279, 32
        %v3470 = vpop.permute.xlu0 %3469
        %3471 = vrot.lane.b32.xlu0 %v312, 32
        %v3472 = vpop.permute.xlu0 %3471
        %3473 = vrot.lane.b32.xlu0 %v313, 32
        %v3474 = vpop.permute.xlu0 %3473
        %3475 = vrot.lane.b32.xlu0 %v314, 32
        %v3476 = vpop.permute.xlu0 %3475
        %3477 = vrot.lane.b32.xlu0 %v315, 32
        %v3478 = vpop.permute.xlu0 %3477
        %3479 = vrot.lane.b32.xlu0 %v316, 32
        %v3480 = vpop.permute.xlu0 %3479
        %3481 = vrot.lane.b32.xlu0 %v317, 32
        %v3482 = vpop.permute.xlu0 %3481
        %3483 = vrot.lane.b32.xlu0 %v318, 32
        %v3484 = vpop.permute.xlu0 %3483
        %3485 = vrot.lane.b32.xlu0 %v319, 32
        %v3486 = vpop.permute.xlu0 %3485
        %3487 = vrot.lane.b32.xlu0 %v320, 32
        %v3488 = vpop.permute.xlu0 %3487
        %3489 = vrot.lane.b32.xlu0 %v321, 32
        %v3490 = vpop.permute.xlu0 %3489
        %3491 = vrot.lane.b32.xlu0 %v322, 32
        %v3492 = vpop.permute.xlu0 %3491
        %3493 = vrot.lane.b32.xlu0 %v323, 32
        %v3494 = vpop.permute.xlu0 %3493
        %3495 = vrot.lane.b32.xlu0 %v324, 32
        %v3496 = vpop.permute.xlu0 %3495
        %3497 = vrot.lane.b32.xlu0 %v325, 32
        %v3498 = vpop.permute.xlu0 %3497
        %3499 = vrot.lane.b32.xlu0 %v326, 32
        %v3500 = vpop.permute.xlu0 %3499
        %3501 = vrot.lane.b32.xlu0 %v327, 32
        %v3502 = vpop.permute.xlu0 %3501
        %v3504 = vsel %vm328, %v3440, 0
        %v3507 = vsel %vm328, %v3442, 0
        %v3510 = vsel %vm328, %v3444, 0
        %v3513 = vsel %vm328, %v3446, 0
        %v3516 = vsel %vm328, %v3448, 0
        %v3519 = vsel %vm328, %v3450, 0
        %v3522 = vsel %vm328, %v3452, 0
        %v3525 = vsel %vm328, %v3454, 0
        %v3528 = vsel %vm328, %v3456, 0
        %v3531 = vsel %vm328, %v3458, 0
        %v3534 = vsel %vm328, %v3460, 0
        %v3537 = vsel %vm328, %v3462, 0
        %v3540 = vsel %vm328, %v3464, 0
        %v3543 = vsel %vm328, %v3466, 0
        %v3546 = vsel %vm328, %v3468, 0
        %v3549 = vsel %vm328, %v3470, 0
        %v3552 = vsel %vm328, %v3472, 0
        %v3555 = vsel %vm328, %v3474, 0
        %v3558 = vsel %vm328, %v3476, 0
        %v3561 = vsel %vm328, %v3478, 0
        %v3564 = vsel %vm328, %v3480, 0
        %v3567 = vsel %vm328, %v3482, 0
        %v3570 = vsel %vm328, %v3484, 0
        %v3573 = vsel %vm328, %v3486, 0
        %v3576 = vsel %vm328, %v3488, 0
        %v3579 = vsel %vm328, %v3490, 0
        %v3582 = vsel %vm328, %v3492, 0
        %v3585 = vsel %vm328, %v3494, 0
        %v3588 = vsel %vm328, %v3496, 0
        %v3591 = vsel %vm328, %v3498, 0
        %v3594 = vsel %vm328, %v3500, 0
        %v3597 = vsel %vm328, %v3502, 0
        %3599 = vmatprep.subr.bf16.mxu0 0
        %3600 = vmatpush1.bf16.xpose.msra.mxu0 %v3552
        %3601 = vmatprep.subr.bf16.mxu0 0
        %3602 = vmatpush1.bf16.xpose.msra.mxu0 %v3555
        %3603 = vmatprep.subr.bf16.mxu0 0
        %3604 = vmatpush1.bf16.xpose.msra.mxu0 %v3558
        %3605 = vmatprep.subr.bf16.mxu0 0
        %3606 = vmatpush1.bf16.xpose.msra.mxu0 %v3561
        %3607 = vmatprep.subr.bf16.mxu0 0
        %3608 = vmatpush1.bf16.xpose.msra.mxu0 %v3564
        %3609 = vmatprep.subr.bf16.mxu0 0
        %3610 = vmatpush1.bf16.xpose.msra.mxu0 %v3567
        %3611 = vmatprep.subr.bf16.mxu0 0
        %3612 = vmatpush1.bf16.xpose.msra.mxu0 %v3570
        %3613 = vmatprep.subr.bf16.mxu0 0
        %3614 = vmatpush1.bf16.xpose.msra.mxu0 %v3573
        %3615 = vmatprep.subr.bf16.mxu0 0
        %3616 = vmatpush1.bf16.xpose.msra.mxu0 %v3576
        %3617 = vmatprep.subr.bf16.mxu0 0
        %3618 = vmatpush1.bf16.xpose.msra.mxu0 %v3579
        %3619 = vmatprep.subr.bf16.mxu0 0
        %3620 = vmatpush1.bf16.xpose.msra.mxu0 %v3582
        %3621 = vmatprep.subr.bf16.mxu0 0
        %3622 = vmatpush1.bf16.xpose.msra.mxu0 %v3585
        %3623 = vmatprep.subr.bf16.mxu0 0
        %3624 = vmatpush1.bf16.xpose.msra.mxu0 %v3588
        %3625 = vmatprep.subr.bf16.mxu0 0
        %3626 = vmatpush1.bf16.xpose.msra.mxu0 %v3591
        %3627 = vmatprep.subr.bf16.mxu0 0
        %3628 = vmatpush1.bf16.xpose.msra.mxu0 %v3594
        %3629 = vmatprep.subr.bf16.mxu0 0
        %3630 = vmatpush1.bf16.xpose.msra.mxu0 %v3597
        %3631 = vmatprep.mubr.bf16.mxu0 0
        %3632 = vmatmul.mubr.bf16.gmra.mrb[0].mxu0 %v3504
        %v3633 = vpop.f32.mrb[0].mxu0
        %v3634 = vadd.f32 0.0, %v3633
        %v3635 = vpop.f32.mrb[0].mxu0
        %v3636 = vadd.f32 0.0, %v3635
        %v3637 = vpop.f32.mrb[0].mxu0
        %v3638 = vadd.f32 0.0, %v3637
        %v3639 = vpop.f32.mrb[0].mxu0
        %v3640 = vadd.f32 0.0, %v3639
        %3641 = vmatprep.mubr.bf16.mxu0 0
        %3642 = vmatmul.mubr.bf16.gmra.mrb[0].mxu0 %v3507
        %v3643 = vpop.f32.mrb[0].mxu0
        %v3644 = vadd.f32 0.0, %v3643
        %v3645 = vpop.f32.mrb[0].mxu0
        %v3646 = vadd.f32 0.0, %v3645
        %v3647 = vpop.f32.mrb[0].mxu0
        %v3648 = vadd.f32 0.0, %v3647
        %v3649 = vpop.f32.mrb[0].mxu0
        %v3650 = vadd.f32 0.0, %v3649
        %3651 = vmatprep.mubr.bf16.mxu0 0
        %3652 = vmatmul.mubr.bf16.gmra.mrb[0].mxu0 %v3510
        %v3653 = vpop.f32.mrb[0].mxu0
        %v3654 = vadd.f32 0.0, %v3653
        %v3655 = vpop.f32.mrb[0].mxu0
        %v3656 = vadd.f32 0.0, %v3655
        %v3657 = vpop.f32.mrb[0].mxu0
        %v3658 = vadd.f32 0.0, %v3657
        %v3659 = vpop.f32.mrb[0].mxu0
        %v3660 = vadd.f32 0.0, %v3659
        %3661 = vmatprep.mubr.bf16.mxu0 0
        %3662 = vmatmul.mubr.bf16.gmra.mrb[0].mxu0 %v3513
        %v3663 = vpop.f32.mrb[0].mxu0
        %v3664 = vadd.f32 0.0, %v3663
        %v3665 = vpop.f32.mrb[0].mxu0
        %v3666 = vadd.f32 0.0, %v3665
        %v3667 = vpop.f32.mrb[0].mxu0
        %v3668 = vadd.f32 0.0, %v3667
        %v3669 = vpop.f32.mrb[0].mxu0
        %v3670 = vadd.f32 0.0, %v3669
        %3671 = vmatprep.mubr.bf16.mxu0 0
        %3672 = vmatmul.mubr.bf16.gmra.mrb[0].mxu0 %v3516
        %v3673 = vpop.f32.mrb[0].mxu0
        %v3674 = vadd.f32 0.0, %v3673
        %v3675 = vpop.f32.mrb[0].mxu0
        %v3676 = vadd.f32 0.0, %v3675
        %v3677 = vpop.f32.mrb[0].mxu0
        %v3678 = vadd.f32 0.0, %v3677
        %v3679 = vpop.f32.mrb[0].mxu0
        %v3680 = vadd.f32 0.0, %v3679
        %3681 = vmatprep.mubr.bf16.mxu0 0
        %3682 = vmatmul.mubr.bf16.gmra.mrb[0].mxu0 %v3519
        %v3683 = vpop.f32.mrb[0].mxu0
        %v3684 = vadd.f32 0.0, %v3683
        %v3685 = vpop.f32.mrb[0].mxu0
        %v3686 = vadd.f32 0.0, %v3685
        %v3687 = vpop.f32.mrb[0].mxu0
        %v3688 = vadd.f32 0.0, %v3687
        %v3689 = vpop.f32.mrb[0].mxu0
        %v3690 = vadd.f32 0.0, %v3689
        %3691 = vmatprep.mubr.bf16.mxu0 0
        %3692 = vmatmul.mubr.bf16.gmra.mrb[0].mxu0 %v3522
        %v3693 = vpop.f32.mrb[0].mxu0
        %v3694 = vadd.f32 0.0, %v3693
        %v3695 = vpop.f32.mrb[0].mxu0
        %v3696 = vadd.f32 0.0, %v3695
        %v3697 = vpop.f32.mrb[0].mxu0
        %v3698 = vadd.f32 0.0, %v3697
        %v3699 = vpop.f32.mrb[0].mxu0
        %v3700 = vadd.f32 0.0, %v3699
        %3701 = vmatprep.mubr.bf16.mxu0 0
        %3702 = vmatmul.mubr.bf16.gmra.mrb[0].mxu0 %v3525
        %v3703 = vpop.f32.mrb[0].mxu0
        %v3704 = vadd.f32 0.0, %v3703
        %v3705 = vpop.f32.mrb[0].mxu0
        %v3706 = vadd.f32 0.0, %v3705
        %v3707 = vpop.f32.mrb[0].mxu0
        %v3708 = vadd.f32 0.0, %v3707
        %v3709 = vpop.f32.mrb[0].mxu0
        %v3710 = vadd.f32 0.0, %v3709
        %3711 = vmatprep.mubr.bf16.mxu0 0
        %3712 = vmatmul.mubr.bf16.gmra.mrb[0].mxu0 %v3528
        %v3713 = vpop.f32.mrb[0].mxu0
        %v3714 = vadd.f32 0.0, %v3713
        %v3715 = vpop.f32.mrb[0].mxu0
        %v3716 = vadd.f32 0.0, %v3715
        %v3717 = vpop.f32.mrb[0].mxu0
        %v3718 = vadd.f32 0.0, %v3717
        %v3719 = vpop.f32.mrb[0].mxu0
        %v3720 = vadd.f32 0.0, %v3719
        %3721 = vmatprep.mubr.bf16.mxu0 0
        %3722 = vmatmul.mubr.bf16.gmra.mrb[0].mxu0 %v3531
        %v3723 = vpop.f32.mrb[0].mxu0
        %v3724 = vadd.f32 0.0, %v3723
        %v3725 = vpop.f32.mrb[0].mxu0
        %v3726 = vadd.f32 0.0, %v3725
        %v3727 = vpop.f32.mrb[0].mxu0
        %v3728 = vadd.f32 0.0, %v3727
        %v3729 = vpop.f32.mrb[0].mxu0
        %v3730 = vadd.f32 0.0, %v3729
        %3731 = vmatprep.mubr.bf16.mxu0 0
        %3732 = vmatmul.mubr.bf16.gmra.mrb[0].mxu0 %v3534
        %v3733 = vpop.f32.mrb[0].mxu0
        %v3734 = vadd.f32 0.0, %v3733
        %v3735 = vpop.f32.mrb[0].mxu0
        %v3736 = vadd.f32 0.0, %v3735
        %v3737 = vpop.f32.mrb[0].mxu0
        %v3738 = vadd.f32 0.0, %v3737
        %v3739 = vpop.f32.mrb[0].mxu0
        %v3740 = vadd.f32 0.0, %v3739
        %3741 = vmatprep.mubr.bf16.mxu0 0
        %3742 = vmatmul.mubr.bf16.gmra.mrb[0].mxu0 %v3537
        %v3743 = vpop.f32.mrb[0].mxu0
        %v3744 = vadd.f32 0.0, %v3743
        %v3745 = vpop.f32.mrb[0].mxu0
        %v3746 = vadd.f32 0.0, %v3745
        %v3747 = vpop.f32.mrb[0].mxu0
        %v3748 = vadd.f32 0.0, %v3747
        %v3749 = vpop.f32.mrb[0].mxu0
        %v3750 = vadd.f32 0.0, %v3749
        %3751 = vmatprep.mubr.bf16.mxu0 0
        %3752 = vmatmul.mubr.bf16.gmra.mrb[0].mxu0 %v3540
        %v3753 = vpop.f32.mrb[0].mxu0
        %v3754 = vadd.f32 0.0, %v3753
        %v3755 = vpop.f32.mrb[0].mxu0
        %v3756 = vadd.f32 0.0, %v3755
        %v3757 = vpop.f32.mrb[0].mxu0
        %v3758 = vadd.f32 0.0, %v3757
        %v3759 = vpop.f32.mrb[0].mxu0
        %v3760 = vadd.f32 0.0, %v3759
        %3761 = vmatprep.mubr.bf16.mxu0 0
        %3762 = vmatmul.mubr.bf16.gmra.mrb[0].mxu0 %v3543
        %v3763 = vpop.f32.mrb[0].mxu0
        %v3764 = vadd.f32 0.0, %v3763
        %v3765 = vpop.f32.mrb[0].mxu0
        %v3766 = vadd.f32 0.0, %v3765
        %v3767 = vpop.f32.mrb[0].mxu0
        %v3768 = vadd.f32 0.0, %v3767
        %v3769 = vpop.f32.mrb[0].mxu0
        %v3770 = vadd.f32 0.0, %v3769
        %3771 = vmatprep.mubr.bf16.mxu0 0
        %3772 = vmatmul.mubr.bf16.gmra.mrb[0].mxu0 %v3546
        %v3773 = vpop.f32.mrb[0].mxu0
        %v3774 = vadd.f32 0.0, %v3773
        %v3775 = vpop.f32.mrb[0].mxu0
        %v3776 = vadd.f32 0.0, %v3775
        %v3777 = vpop.f32.mrb[0].mxu0
        %v3778 = vadd.f32 0.0, %v3777
        %v3779 = vpop.f32.mrb[0].mxu0
        %v3780 = vadd.f32 0.0, %v3779
        %3781 = vmatprep.mubr.bf16.mxu0 0
        %3782 = vmatmul.mubr.bf16.gmra.mrb[0].mxu0 %v3549
        %v3783 = vpop.f32.mrb[0].mxu0
        %v3784 = vadd.f32 0.0, %v3783
        %v3785 = vpop.f32.mrb[0].mxu0
        %v3786 = vadd.f32 0.0, %v3785
        %v3787 = vpop.f32.mrb[0].mxu0
        %v3788 = vadd.f32 0.0, %v3787
        %v3789 = vpop.f32.mrb[0].mxu0
        %v3790 = vadd.f32 0.0, %v3789
        %3791 = vdwg.mxu0
        %v3792 = vmax.f32 %v3634, %v3636
        %3793 = vmax.xlane.f32.xlu0 %v3792
        %v3794 = vpop.xlane.xlu0 %3793
        %v3795 = vmax.f32 %v3638, %v3640
        %3796 = vmax.xlane.f32.xlu0 %v3795
        %v3797 = vpop.xlane.xlu0 %3796
        %v3798 = vmax.f32 %v3644, %v3646
        %3799 = vmax.xlane.f32.xlu0 %v3798
        %v3800 = vpop.xlane.xlu0 %3799
        %v3801 = vmax.f32 %v3648, %v3650
        %3802 = vmax.xlane.f32.xlu0 %v3801
        %v3803 = vpop.xlane.xlu0 %3802
        %v3804 = vmax.f32 %v3654, %v3656
        %3805 = vmax.xlane.f32.xlu0 %v3804
        %v3806 = vpop.xlane.xlu0 %3805
        %v3807 = vmax.f32 %v3658, %v3660
        %3808 = vmax.xlane.f32.xlu0 %v3807
        %v3809 = vpop.xlane.xlu0 %3808
        %v3810 = vmax.f32 %v3664, %v3666
        %3811 = vmax.xlane.f32.xlu0 %v3810
        %v3812 = vpop.xlane.xlu0 %3811
        %v3813 = vmax.f32 %v3668, %v3670
        %3814 = vmax.xlane.f32.xlu0 %v3813
        %v3815 = vpop.xlane.xlu0 %3814
        %v3816 = vmax.f32 %v3674, %v3676
        %3817 = vmax.xlane.f32.xlu0 %v3816
        %v3818 = vpop.xlane.xlu0 %3817
        %v3819 = vmax.f32 %v3678, %v3680
        %3820 = vmax.xlane.f32.xlu0 %v3819
        %v3821 = vpop.xlane.xlu0 %3820
        %v3822 = vmax.f32 %v3684, %v3686
        %3823 = vmax.xlane.f32.xlu0 %v3822
        %v3824 = vpop.xlane.xlu0 %3823
        %v3825 = vmax.f32 %v3688, %v3690
        %3826 = vmax.xlane.f32.xlu0 %v3825
        %v3827 = vpop.xlane.xlu0 %3826
        %v3828 = vmax.f32 %v3694, %v3696
        %3829 = vmax.xlane.f32.xlu0 %v3828
        %v3830 = vpop.xlane.xlu0 %3829
        %v3831 = vmax.f32 %v3698, %v3700
        %3832 = vmax.xlane.f32.xlu0 %v3831
        %v3833 = vpop.xlane.xlu0 %3832
        %v3834 = vmax.f32 %v3704, %v3706
        %3835 = vmax.xlane.f32.xlu0 %v3834
        %v3836 = vpop.xlane.xlu0 %3835
        %v3837 = vmax.f32 %v3708, %v3710
        %3838 = vmax.xlane.f32.xlu0 %v3837
        %v3839 = vpop.xlane.xlu0 %3838
        %v3840 = vmax.f32 %v3714, %v3716
        %3841 = vmax.xlane.f32.xlu0 %v3840
        %v3842 = vpop.xlane.xlu0 %3841
        %v3843 = vmax.f32 %v3718, %v3720
        %3844 = vmax.xlane.f32.xlu0 %v3843
        %v3845 = vpop.xlane.xlu0 %3844
        %v3846 = vmax.f32 %v3724, %v3726
        %3847 = vmax.xlane.f32.xlu0 %v3846
        %v3848 = vpop.xlane.xlu0 %3847
        %v3849 = vmax.f32 %v3728, %v3730
        %3850 = vmax.xlane.f32.xlu0 %v3849
        %v3851 = vpop.xlane.xlu0 %3850
        %v3852 = vmax.f32 %v3734, %v3736
        %3853 = vmax.xlane.f32.xlu0 %v3852
        %v3854 = vpop.xlane.xlu0 %3853
        %v3855 = vmax.f32 %v3738, %v3740
        %3856 = vmax.xlane.f32.xlu0 %v3855
        %v3857 = vpop.xlane.xlu0 %3856
        %v3858 = vmax.f32 %v3744, %v3746
        %3859 = vmax.xlane.f32.xlu0 %v3858
        %v3860 = vpop.xlane.xlu0 %3859
        %v3861 = vmax.f32 %v3748, %v3750
        %3862 = vmax.xlane.f32.xlu0 %v3861
        %v3863 = vpop.xlane.xlu0 %3862
        %v3864 = vmax.f32 %v3754, %v3756
        %3865 = vmax.xlane.f32.xlu0 %v3864
        %v3866 = vpop.xlane.xlu0 %3865
        %v3867 = vmax.f32 %v3758, %v3760
        %3868 = vmax.xlane.f32.xlu0 %v3867
        %v3869 = vpop.xlane.xlu0 %3868
        %v3870 = vmax.f32 %v3764, %v3766
        %3871 = vmax.xlane.f32.xlu0 %v3870
        %v3872 = vpop.xlane.xlu0 %3871
        %v3873 = vmax.f32 %v3768, %v3770
        %3874 = vmax.xlane.f32.xlu0 %v3873
        %v3875 = vpop.xlane.xlu0 %3874
        %v3876 = vmax.f32 %v3774, %v3776
        %3877 = vmax.xlane.f32.xlu0 %v3876
        %v3878 = vpop.xlane.xlu0 %3877
        %v3879 = vmax.f32 %v3778, %v3780
        %3880 = vmax.xlane.f32.xlu0 %v3879
        %v3881 = vpop.xlane.xlu0 %3880
        %v3882 = vmax.f32 %v3784, %v3786
        %3883 = vmax.xlane.f32.xlu0 %v3882
        %v3884 = vpop.xlane.xlu0 %3883
        %v3885 = vmax.f32 %v3788, %v3790
        %3886 = vmax.xlane.f32.xlu0 %v3885
        %v3887 = vpop.xlane.xlu0 %3886
        %v3888 = vsub.f32 %v3634, %v3794
        %v3889 = vsub.f32 %v3636, %v3794
        %v3890 = vsub.f32 %v3638, %v3797
        %v3891 = vsub.f32 %v3640, %v3797
        %v3892 = vsub.f32 %v3644, %v3800
        %v3893 = vsub.f32 %v3646, %v3800
        %v3894 = vsub.f32 %v3648, %v3803
        %v3895 = vsub.f32 %v3650, %v3803
        %v3896 = vsub.f32 %v3654, %v3806
        %v3897 = vsub.f32 %v3656, %v3806
        %v3898 = vsub.f32 %v3658, %v3809
        %v3899 = vsub.f32 %v3660, %v3809
        %v3900 = vsub.f32 %v3664, %v3812
        %v3901 = vsub.f32 %v3666, %v3812
        %v3902 = vsub.f32 %v3668, %v3815
        %v3903 = vsub.f32 %v3670, %v3815
        %v3904 = vsub.f32 %v3674, %v3818
        %v3905 = vsub.f32 %v3676, %v3818
        %v3906 = vsub.f32 %v3678, %v3821
        %v3907 = vsub.f32 %v3680, %v3821
        %v3908 = vsub.f32 %v3684, %v3824
        %v3909 = vsub.f32 %v3686, %v3824
        %v3910 = vsub.f32 %v3688, %v3827
        %v3911 = vsub.f32 %v3690, %v3827
        %v3912 = vsub.f32 %v3694, %v3830
        %v3913 = vsub.f32 %v3696, %v3830
        %v3914 = vsub.f32 %v3698, %v3833
        %v3915 = vsub.f32 %v3700, %v3833
        %v3916 = vsub.f32 %v3704, %v3836
        %v3917 = vsub.f32 %v3706, %v3836
        %v3918 = vsub.f32 %v3708, %v3839
        %v3919 = vsub.f32 %v3710, %v3839
        %v3920 = vsub.f32 %v3714, %v3842
        %v3921 = vsub.f32 %v3716, %v3842
        %v3922 = vsub.f32 %v3718, %v3845
        %v3923 = vsub.f32 %v3720, %v3845
        %v3924 = vsub.f32 %v3724, %v3848
        %v3925 = vsub.f32 %v3726, %v3848
        %v3926 = vsub.f32 %v3728, %v3851
        %v3927 = vsub.f32 %v3730, %v3851
        %v3928 = vsub.f32 %v3734, %v3854
        %v3929 = vsub.f32 %v3736, %v3854
        %v3930 = vsub.f32 %v3738, %v3857
        %v3931 = vsub.f32 %v3740, %v3857
        %v3932 = vsub.f32 %v3744, %v3860
        %v3933 = vsub.f32 %v3746, %v3860
        %v3934 = vsub.f32 %v3748, %v3863
        %v3935 = vsub.f32 %v3750, %v3863
        %v3936 = vsub.f32 %v3754, %v3866
        %v3937 = vsub.f32 %v3756, %v3866
        %v3938 = vsub.f32 %v3758, %v3869
        %v3939 = vsub.f32 %v3760, %v3869
        %v3940 = vsub.f32 %v3764, %v3872
        %v3941 = vsub.f32 %v3766, %v3872
        %v3942 = vsub.f32 %v3768, %v3875
        %v3943 = vsub.f32 %v3770, %v3875
        %v3944 = vsub.f32 %v3774, %v3878
        %v3945 = vsub.f32 %v3776, %v3878
        %v3946 = vsub.f32 %v3778, %v3881
        %v3947 = vsub.f32 %v3780, %v3881
        %v3948 = vsub.f32 %v3784, %v3884
        %v3949 = vsub.f32 %v3786, %v3884
        %v3950 = vsub.f32 %v3788, %v3887
        %v3951 = vsub.f32 %v3790, %v3887
        %v3952 = vmul.f32 %v3888, 1.442695
        %v3953 = vpow.pop %v3952
        %v3954 = vmul.f32 %v3889, 1.442695
        %v3955 = vpow.pop %v3954
        %v3956 = vmul.f32 %v3890, 1.442695
        %v3957 = vpow.pop %v3956
        %v3958 = vmul.f32 %v3891, 1.442695
        %v3959 = vpow.pop %v3958
        %v3960 = vmul.f32 %v3892, 1.442695
        %v3961 = vpow.pop %v3960
        %v3962 = vmul.f32 %v3893, 1.442695
        %v3963 = vpow.pop %v3962
        %v3964 = vmul.f32 %v3894, 1.442695
        %v3965 = vpow.pop %v3964
        %v3966 = vmul.f32 %v3895, 1.442695
        %v3967 = vpow.pop %v3966
        %v3968 = vmul.f32 %v3896, 1.442695
        %v3969 = vpow.pop %v3968
        %v3970 = vmul.f32 %v3897, 1.442695
        %v3971 = vpow.pop %v3970
        %v3972 = vmul.f32 %v3898, 1.442695
        %v3973 = vpow.pop %v3972
        %v3974 = vmul.f32 %v3899, 1.442695
        %v3975 = vpow.pop %v3974
        %v3976 = vmul.f32 %v3900, 1.442695
        %v3977 = vpow.pop %v3976
        %v3978 = vmul.f32 %v3901, 1.442695
        %v3979 = vpow.pop %v3978
        %v3980 = vmul.f32 %v3902, 1.442695
        %v3981 = vpow.pop %v3980
        %v3982 = vmul.f32 %v3903, 1.442695
        %v3983 = vpow.pop %v3982
        %v3984 = vmul.f32 %v3904, 1.442695
        %v3985 = vpow.pop %v3984
        %v3986 = vmul.f32 %v3905, 1.442695
        %v3987 = vpow.pop %v3986
        %v3988 = vmul.f32 %v3906, 1.442695
        %v3989 = vpow.pop %v3988
        %v3990 = vmul.f32 %v3907, 1.442695
        %v3991 = vpow.pop %v3990
        %v3992 = vmul.f32 %v3908, 1.442695
        %v3993 = vpow.pop %v3992
        %v3994 = vmul.f32 %v3909, 1.442695
        %v3995 = vpow.pop %v3994
        %v3996 = vmul.f32 %v3910, 1.442695
        %v3997 = vpow.pop %v3996
        %v3998 = vmul.f32 %v3911, 1.442695
        %v3999 = vpow.pop %v3998
        %v4000 = vmul.f32 %v3912, 1.442695
        %v4001 = vpow.pop %v4000
        %v4002 = vmul.f32 %v3913, 1.442695
        %v4003 = vpow.pop %v4002
        %v4004 = vmul.f32 %v3914, 1.442695
        %v4005 = vpow.pop %v4004
        %v4006 = vmul.f32 %v3915, 1.442695
        %v4007 = vpow.pop %v4006
        %v4008 = vmul.f32 %v3916, 1.442695
        %v4009 = vpow.pop %v4008
        %v4010 = vmul.f32 %v3917, 1.442695
        %v4011 = vpow.pop %v4010
        %v4012 = vmul.f32 %v3918, 1.442695
        %v4013 = vpow.pop %v4012
        %v4014 = vmul.f32 %v3919, 1.442695
        %v4015 = vpow.pop %v4014
        %v4016 = vmul.f32 %v3920, 1.442695
        %v4017 = vpow.pop %v4016
        %v4018 = vmul.f32 %v3921, 1.442695
        %v4019 = vpow.pop %v4018
        %v4020 = vmul.f32 %v3922, 1.442695
        %v4021 = vpow.pop %v4020
        %v4022 = vmul.f32 %v3923, 1.442695
        %v4023 = vpow.pop %v4022
        %v4024 = vmul.f32 %v3924, 1.442695
        %v4025 = vpow.pop %v4024
        %v4026 = vmul.f32 %v3925, 1.442695
        %v4027 = vpow.pop %v4026
        %v4028 = vmul.f32 %v3926, 1.442695
        %v4029 = vpow.pop %v4028
        %v4030 = vmul.f32 %v3927, 1.442695
        %v4031 = vpow.pop %v4030
        %v4032 = vmul.f32 %v3928, 1.442695
        %v4033 = vpow.pop %v4032
        %v4034 = vmul.f32 %v3929, 1.442695
        %v4035 = vpow.pop %v4034
        %v4036 = vmul.f32 %v3930, 1.442695
        %v4037 = vpow.pop %v4036
        %v4038 = vmul.f32 %v3931, 1.442695
        %v4039 = vpow.pop %v4038
        %v4040 = vmul.f32 %v3932, 1.442695
        %v4041 = vpow.pop %v4040
        %v4042 = vmul.f32 %v3933, 1.442695
        %v4043 = vpow.pop %v4042
        %v4044 = vmul.f32 %v3934, 1.442695
        %v4045 = vpow.pop %v4044
        %v4046 = vmul.f32 %v3935, 1.442695
        %v4047 = vpow.pop %v4046
        %v4048 = vmul.f32 %v3936, 1.442695
        %v4049 = vpow.pop %v4048
        %v4050 = vmul.f32 %v3937, 1.442695
        %v4051 = vpow.pop %v4050
        %v4052 = vmul.f32 %v3938, 1.442695
        %v4053 = vpow.pop %v4052
        %v4054 = vmul.f32 %v3939, 1.442695
        %v4055 = vpow.pop %v4054
        %v4056 = vmul.f32 %v3940, 1.442695
        %v4057 = vpow.pop %v4056
        %v4058 = vmul.f32 %v3941, 1.442695
        %v4059 = vpow.pop %v4058
        %v4060 = vmul.f32 %v3942, 1.442695
        %v4061 = vpow.pop %v4060
        %v4062 = vmul.f32 %v3943, 1.442695
        %v4063 = vpow.pop %v4062
        %v4064 = vmul.f32 %v3944, 1.442695
        %v4065 = vpow.pop %v4064
        %v4066 = vmul.f32 %v3945, 1.442695
        %v4067 = vpow.pop %v4066
        %v4068 = vmul.f32 %v3946, 1.442695
        %v4069 = vpow.pop %v4068
        %v4070 = vmul.f32 %v3947, 1.442695
        %v4071 = vpow.pop %v4070
        %v4072 = vmul.f32 %v3948, 1.442695
        %v4073 = vpow.pop %v4072
        %v4074 = vmul.f32 %v3949, 1.442695
        %v4075 = vpow.pop %v4074
        %v4076 = vmul.f32 %v3950, 1.442695
        %v4077 = vpow.pop %v4076
        %v4078 = vmul.f32 %v3951, 1.442695
        %v4079 = vpow.pop %v4078
        %v4080 = vadd.f32 %v3953, %v3955
        %4081 = vadd.xlane.f32.xlu0 %v4080
        %v4082 = vpop.xlane.xlu0 %4081
        %v4083 = vadd.f32 %v3957, %v3959
        %4084 = vadd.xlane.f32.xlu0 %v4083
        %v4085 = vpop.xlane.xlu0 %4084
        %v4086 = vadd.f32 %v3961, %v3963
        %4087 = vadd.xlane.f32.xlu0 %v4086
        %v4088 = vpop.xlane.xlu0 %4087
        %v4089 = vadd.f32 %v3965, %v3967
        %4090 = vadd.xlane.f32.xlu0 %v4089
        %v4091 = vpop.xlane.xlu0 %4090
        %v4092 = vadd.f32 %v3969, %v3971
        %4093 = vadd.xlane.f32.xlu0 %v4092
        %v4094 = vpop.xlane.xlu0 %4093
        %v4095 = vadd.f32 %v3973, %v3975
        %4096 = vadd.xlane.f32.xlu0 %v4095
        %v4097 = vpop.xlane.xlu0 %4096
        %v4098 = vadd.f32 %v3977, %v3979
        %4099 = vadd.xlane.f32.xlu0 %v4098
        %v4100 = vpop.xlane.xlu0 %4099
        %v4101 = vadd.f32 %v3981, %v3983
        %4102 = vadd.xlane.f32.xlu0 %v4101
        %v4103 = vpop.xlane.xlu0 %4102
        %v4104 = vadd.f32 %v3985, %v3987
        %4105 = vadd.xlane.f32.xlu0 %v4104
        %v4106 = vpop.xlane.xlu0 %4105
        %v4107 = vadd.f32 %v3989, %v3991
        %4108 = vadd.xlane.f32.xlu0 %v4107
        %v4109 = vpop.xlane.xlu0 %4108
        %v4110 = vadd.f32 %v3993, %v3995
        %4111 = vadd.xlane.f32.xlu0 %v4110
        %v4112 = vpop.xlane.xlu0 %4111
        %v4113 = vadd.f32 %v3997, %v3999
        %4114 = vadd.xlane.f32.xlu0 %v4113
        %v4115 = vpop.xlane.xlu0 %4114
        %v4116 = vadd.f32 %v4001, %v4003
        %4117 = vadd.xlane.f32.xlu0 %v4116
        %v4118 = vpop.xlane.xlu0 %4117
        %v4119 = vadd.f32 %v4005, %v4007
        %4120 = vadd.xlane.f32.xlu0 %v4119
        %v4121 = vpop.xlane.xlu0 %4120
        %v4122 = vadd.f32 %v4009, %v4011
        %4123 = vadd.xlane.f32.xlu0 %v4122
        %v4124 = vpop.xlane.xlu0 %4123
        %v4125 = vadd.f32 %v4013, %v4015
        %4126 = vadd.xlane.f32.xlu0 %v4125
        %v4127 = vpop.xlane.xlu0 %4126
        %v4128 = vadd.f32 %v4017, %v4019
        %4129 = vadd.xlane.f32.xlu0 %v4128
        %v4130 = vpop.xlane.xlu0 %4129
        %v4131 = vadd.f32 %v4021, %v4023
        %4132 = vadd.xlane.f32.xlu0 %v4131
        %v4133 = vpop.xlane.xlu0 %4132
        %v4134 = vadd.f32 %v4025, %v4027
        %4135 = vadd.xlane.f32.xlu0 %v4134
        %v4136 = vpop.xlane.xlu0 %4135
        %v4137 = vadd.f32 %v4029, %v4031
        %4138 = vadd.xlane.f32.xlu0 %v4137
        %v4139 = vpop.xlane.xlu0 %4138
        %v4140 = vadd.f32 %v4033, %v4035
        %4141 = vadd.xlane.f32.xlu0 %v4140
        %v4142 = vpop.xlane.xlu0 %4141
        %v4143 = vadd.f32 %v4037, %v4039
        %4144 = vadd.xlane.f32.xlu0 %v4143
        %v4145 = vpop.xlane.xlu0 %4144
        %v4146 = vadd.f32 %v4041, %v4043
        %4147 = vadd.xlane.f32.xlu0 %v4146
        %v4148 = vpop.xlane.xlu0 %4147
        %v4149 = vadd.f32 %v4045, %v4047
        %4150 = vadd.xlane.f32.xlu0 %v4149
        %v4151 = vpop.xlane.xlu0 %4150
        %v4152 = vadd.f32 %v4049, %v4051
        %4153 = vadd.xlane.f32.xlu0 %v4152
        %v4154 = vpop.xlane.xlu0 %4153
        %v4155 = vadd.f32 %v4053, %v4055
        %4156 = vadd.xlane.f32.xlu0 %v4155
        %v4157 = vpop.xlane.xlu0 %4156
        %v4158 = vadd.f32 %v4057, %v4059
        %4159 = vadd.xlane.f32.xlu0 %v4158
        %v4160 = vpop.xlane.xlu0 %4159
        %v4161 = vadd.f32 %v4061, %v4063
        %4162 = vadd.xlane.f32.xlu0 %v4161
        %v4163 = vpop.xlane.xlu0 %4162
        %v4164 = vadd.f32 %v4065, %v4067
        %4165 = vadd.xlane.f32.xlu0 %v4164
        %v4166 = vpop.xlane.xlu0 %4165
        %v4167 = vadd.f32 %v4069, %v4071
        %4168 = vadd.xlane.f32.xlu0 %v4167
        %v4169 = vpop.xlane.xlu0 %4168
        %v4170 = vadd.f32 %v4073, %v4075
        %4171 = vadd.xlane.f32.xlu0 %v4170
        %v4172 = vpop.xlane.xlu0 %4171
        %v4173 = vadd.f32 %v4077, %v4079
        %4174 = vadd.xlane.f32.xlu0 %v4173
        %v4175 = vpop.xlane.xlu0 %4174
        %v4176 = vpack.c.bf16 %v3957, %v3953
        %v4177 = vpack.c.bf16 %v3959, %v3955
        %v4178 = vpack.c.bf16 %v3965, %v3961
        %v4179 = vpack.c.bf16 %v3967, %v3963
        %v4180 = vpack.c.bf16 %v3973, %v3969
        %v4181 = vpack.c.bf16 %v3975, %v3971
        %v4182 = vpack.c.bf16 %v3981, %v3977
        %v4183 = vpack.c.bf16 %v3983, %v3979
        %v4184 = vpack.c.bf16 %v3989, %v3985
        %v4185 = vpack.c.bf16 %v3991, %v3987
        %v4186 = vpack.c.bf16 %v3997, %v3993
        %v4187 = vpack.c.bf16 %v3999, %v3995
        %v4188 = vpack.c.bf16 %v4005, %v4001
        %v4189 = vpack.c.bf16 %v4007, %v4003
        %v4190 = vpack.c.bf16 %v4013, %v4009
        %v4191 = vpack.c.bf16 %v4015, %v4011
        %v4192 = vpack.c.bf16 %v4021, %v4017
        %v4193 = vpack.c.bf16 %v4023, %v4019
        %v4194 = vpack.c.bf16 %v4029, %v4025
        %v4195 = vpack.c.bf16 %v4031, %v4027
        %v4196 = vpack.c.bf16 %v4037, %v4033
        %v4197 = vpack.c.bf16 %v4039, %v4035
        %v4198 = vpack.c.bf16 %v4045, %v4041
        %v4199 = vpack.c.bf16 %v4047, %v4043
        %v4200 = vpack.c.bf16 %v4053, %v4049
        %v4201 = vpack.c.bf16 %v4055, %v4051
        %v4202 = vpack.c.bf16 %v4061, %v4057
        %v4203 = vpack.c.bf16 %v4063, %v4059
        %v4204 = vpack.c.bf16 %v4069, %v4065
        %v4205 = vpack.c.bf16 %v4071, %v4067
        %v4206 = vpack.c.bf16 %v4077, %v4073
        %v4207 = vpack.c.bf16 %v4079, %v4075
        %4208 = vrot.lane.b32.xlu0 %v1098, 32
        %v4209 = vpop.permute.xlu0 %4208
        %4210 = vrot.lane.b32.xlu0 %v1099, 32
        %v4211 = vpop.permute.xlu0 %4210
        %4212 = vrot.lane.b32.xlu0 %v1100, 32
        %v4213 = vpop.permute.xlu0 %4212
        %4214 = vrot.lane.b32.xlu0 %v1101, 32
        %v4215 = vpop.permute.xlu0 %4214
        %4216 = vrot.lane.b32.xlu0 %v1102, 32
        %v4217 = vpop.permute.xlu0 %4216
        %4218 = vrot.lane.b32.xlu0 %v1103, 32
        %v4219 = vpop.permute.xlu0 %4218
        %4220 = vrot.lane.b32.xlu0 %v1104, 32
        %v4221 = vpop.permute.xlu0 %4220
        %4222 = vrot.lane.b32.xlu0 %v1105, 32
        %v4223 = vpop.permute.xlu0 %4222
        %4224 = vrot.lane.b32.xlu0 %v1106, 32
        %v4225 = vpop.permute.xlu0 %4224
        %4226 = vrot.lane.b32.xlu0 %v1107, 32
        %v4227 = vpop.permute.xlu0 %4226
        %4228 = vrot.lane.b32.xlu0 %v1108, 32
        %v4229 = vpop.permute.xlu0 %4228
        %4230 = vrot.lane.b32.xlu0 %v1109, 32
        %v4231 = vpop.permute.xlu0 %4230
        %4232 = vrot.lane.b32.xlu0 %v1110, 32
        %v4233 = vpop.permute.xlu0 %4232
        %4234 = vrot.lane.b32.xlu0 %v1111, 32
        %v4235 = vpop.permute.xlu0 %4234
        %4236 = vrot.lane.b32.xlu0 %v1112, 32
        %v4237 = vpop.permute.xlu0 %4236
        %4238 = vrot.lane.b32.xlu0 %v1113, 32
        %v4239 = vpop.permute.xlu0 %4238
        %4256 = vmatprep.subr.bf16.mxu0 0
        %4257 = vmatpush1.bf16.msra.mxu0 %v4209
        %4258 = vmatprep.subr.bf16.mxu0 0
        %4259 = vmatpush1.bf16.msra.mxu0 %v4211
        %4260 = vmatprep.subr.bf16.mxu0 0
        %4261 = vmatpush1.bf16.msra.mxu0 %v4213
        %4262 = vmatprep.subr.bf16.mxu0 0
        %4263 = vmatpush1.bf16.msra.mxu0 %v4215
        %4264 = vmatprep.subr.bf16.mxu0 0
        %4265 = vmatpush1.bf16.msra.mxu0 %v4217
        %4266 = vmatprep.subr.bf16.mxu0 0
        %4267 = vmatpush1.bf16.msra.mxu0 %v4219
        %4268 = vmatprep.subr.bf16.mxu0 0
        %4269 = vmatpush1.bf16.msra.mxu0 %v4221
        %4270 = vmatprep.subr.bf16.mxu0 0
        %4271 = vmatpush1.bf16.msra.mxu0 %v4223
        %4272 = vmatprep.subr.bf16.mxu0 0
        %4273 = vmatpush1.bf16.msra.mxu0 %v4225
        %4274 = vmatprep.subr.bf16.mxu0 0
        %4275 = vmatpush1.bf16.msra.mxu0 %v4227
        %4276 = vmatprep.subr.bf16.mxu0 0
        %4277 = vmatpush1.bf16.msra.mxu0 %v4229
        %4278 = vmatprep.subr.bf16.mxu0 0
        %4279 = vmatpush1.bf16.msra.mxu0 %v4231
        %4280 = vmatprep.subr.bf16.mxu0 0
        %4281 = vmatpush1.bf16.msra.mxu0 %v4233
        %4282 = vmatprep.subr.bf16.mxu0 0
        %4283 = vmatpush1.bf16.msra.mxu0 %v4235
        %4284 = vmatprep.subr.bf16.mxu0 0
        %4285 = vmatpush1.bf16.msra.mxu0 %v4237
        %4286 = vmatprep.subr.bf16.mxu0 0
        %4287 = vmatpush1.bf16.msra.mxu0 %v4239
        %4288 = vmatprep.mubr.bf16.mxu0 %v4177
        %4289 = vmatmul.mubr.bf16.gmra.mrb[0].mxu0 %v4176
        %v4290 = vpop.f32.mrb[0].mxu0
        %v4291 = vadd.f32 0.0, %v4290
        %v4292 = vpop.f32.mrb[0].mxu0
        %v4293 = vpop.f32.mrb[0].mxu0
        %v4294 = vadd.f32 0.0, %v4293
        %v4295 = vpop.f32.mrb[0].mxu0
        %4296 = vmatprep.mubr.bf16.mxu0 %v4179
        %4297 = vmatmul.mubr.bf16.gmra.mrb[0].mxu0 %v4178
        %v4298 = vpop.f32.mrb[0].mxu0
        %v4299 = vadd.f32 0.0, %v4298
        %v4300 = vpop.f32.mrb[0].mxu0
        %v4301 = vpop.f32.mrb[0].mxu0
        %v4302 = vadd.f32 0.0, %v4301
        %v4303 = vpop.f32.mrb[0].mxu0
        %4304 = vmatprep.mubr.bf16.mxu0 %v4181
        %4305 = vmatmul.mubr.bf16.gmra.mrb[0].mxu0 %v4180
        %v4306 = vpop.f32.mrb[0].mxu0
        %v4307 = vadd.f32 0.0, %v4306
        %v4308 = vpop.f32.mrb[0].mxu0
        %v4309 = vpop.f32.mrb[0].mxu0
        %v4310 = vadd.f32 0.0, %v4309
        %v4311 = vpop.f32.mrb[0].mxu0
        %4312 = vmatprep.mubr.bf16.mxu0 %v4183
        %4313 = vmatmul.mubr.bf16.gmra.mrb[0].mxu0 %v4182
        %v4314 = vpop.f32.mrb[0].mxu0
        %v4315 = vadd.f32 0.0, %v4314
        %v4316 = vpop.f32.mrb[0].mxu0
        %v4317 = vpop.f32.mrb[0].mxu0
        %v4318 = vadd.f32 0.0, %v4317
        %v4319 = vpop.f32.mrb[0].mxu0
        %4320 = vmatprep.mubr.bf16.mxu0 %v4185
        %4321 = vmatmul.mubr.bf16.gmra.mrb[0].mxu0 %v4184
        %v4322 = vpop.f32.mrb[0].mxu0
        %v4323 = vadd.f32 0.0, %v4322
        %v4324 = vpop.f32.mrb[0].mxu0
        %v4325 = vpop.f32.mrb[0].mxu0
        %v4326 = vadd.f32 0.0, %v4325
        %v4327 = vpop.f32.mrb[0].mxu0
        %4328 = vmatprep.mubr.bf16.mxu0 %v4187
        %4329 = vmatmul.mubr.bf16.gmra.mrb[0].mxu0 %v4186
        %v4330 = vpop.f32.mrb[0].mxu0
        %v4331 = vadd.f32 0.0, %v4330
        %v4332 = vpop.f32.mrb[0].mxu0
        %v4333 = vpop.f32.mrb[0].mxu0
        %v4334 = vadd.f32 0.0, %v4333
        %v4335 = vpop.f32.mrb[0].mxu0
        %4336 = vmatprep.mubr.bf16.mxu0 %v4189
        %4337 = vmatmul.mubr.bf16.gmra.mrb[0].mxu0 %v4188
        %v4338 = vpop.f32.mrb[0].mxu0
        %v4339 = vadd.f32 0.0, %v4338
        %v4340 = vpop.f32.mrb[0].mxu0
        %v4341 = vpop.f32.mrb[0].mxu0
        %v4342 = vadd.f32 0.0, %v4341
        %v4343 = vpop.f32.mrb[0].mxu0
        %4344 = vmatprep.mubr.bf16.mxu0 %v4191
        %4345 = vmatmul.mubr.bf16.gmra.mrb[0].mxu0 %v4190
        %v4346 = vpop.f32.mrb[0].mxu0
        %v4347 = vadd.f32 0.0, %v4346
        %v4348 = vpop.f32.mrb[0].mxu0
        %v4349 = vpop.f32.mrb[0].mxu0
        %v4350 = vadd.f32 0.0, %v4349
        %v4351 = vpop.f32.mrb[0].mxu0
        %4352 = vmatprep.mubr.bf16.mxu0 %v4193
        %4353 = vmatmul.mubr.bf16.gmra.mrb[0].mxu0 %v4192
        %v4354 = vpop.f32.mrb[0].mxu0
        %v4355 = vadd.f32 0.0, %v4354
        %v4356 = vpop.f32.mrb[0].mxu0
        %v4357 = vpop.f32.mrb[0].mxu0
        %v4358 = vadd.f32 0.0, %v4357
        %v4359 = vpop.f32.mrb[0].mxu0
        %4360 = vmatprep.mubr.bf16.mxu0 %v4195
        %4361 = vmatmul.mubr.bf16.gmra.mrb[0].mxu0 %v4194
        %v4362 = vpop.f32.mrb[0].mxu0
        %v4363 = vadd.f32 0.0, %v4362
        %v4364 = vpop.f32.mrb[0].mxu0
        %v4365 = vpop.f32.mrb[0].mxu0
        %v4366 = vadd.f32 0.0, %v4365
        %v4367 = vpop.f32.mrb[0].mxu0
        %4368 = vmatprep.mubr.bf16.mxu0 %v4197
        %4369 = vmatmul.mubr.bf16.gmra.mrb[0].mxu0 %v4196
        %v4370 = vpop.f32.mrb[0].mxu0
        %v4371 = vadd.f32 0.0, %v4370
        %v4372 = vpop.f32.mrb[0].mxu0
        %v4373 = vpop.f32.mrb[0].mxu0
        %v4374 = vadd.f32 0.0, %v4373
        %v4375 = vpop.f32.mrb[0].mxu0
        %4376 = vmatprep.mubr.bf16.mxu0 %v4199
        %4377 = vmatmul.mubr.bf16.gmra.mrb[0].mxu0 %v4198
        %v4378 = vpop.f32.mrb[0].mxu0
        %v4379 = vadd.f32 0.0, %v4378
        %v4380 = vpop.f32.mrb[0].mxu0
        %v4381 = vpop.f32.mrb[0].mxu0
        %v4382 = vadd.f32 0.0, %v4381
        %v4383 = vpop.f32.mrb[0].mxu0
        %4384 = vmatprep.mubr.bf16.mxu0 %v4201
        %4385 = vmatmul.mubr.bf16.gmra.mrb[0].mxu0 %v4200
        %v4386 = vpop.f32.mrb[0].mxu0
        %v4387 = vadd.f32 0.0, %v4386
        %v4388 = vpop.f32.mrb[0].mxu0
        %v4389 = vpop.f32.mrb[0].mxu0
        %v4390 = vadd.f32 0.0, %v4389
        %v4391 = vpop.f32.mrb[0].mxu0
        %4392 = vmatprep.mubr.bf16.mxu0 %v4203
        %4393 = vmatmul.mubr.bf16.gmra.mrb[0].mxu0 %v4202
        %v4394 = vpop.f32.mrb[0].mxu0
        %v4395 = vadd.f32 0.0, %v4394
        %v4396 = vpop.f32.mrb[0].mxu0
        %v4397 = vpop.f32.mrb[0].mxu0
        %v4398 = vadd.f32 0.0, %v4397
        %v4399 = vpop.f32.mrb[0].mxu0
        %4400 = vmatprep.mubr.bf16.mxu0 %v4205
        %4401 = vmatmul.mubr.bf16.gmra.mrb[0].mxu0 %v4204
        %v4402 = vpop.f32.mrb[0].mxu0
        %v4403 = vadd.f32 0.0, %v4402
        %v4404 = vpop.f32.mrb[0].mxu0
        %v4405 = vpop.f32.mrb[0].mxu0
        %v4406 = vadd.f32 0.0, %v4405
        %v4407 = vpop.f32.mrb[0].mxu0
        %4408 = vmatprep.mubr.bf16.mxu0 %v4207
        %4409 = vmatmul.mubr.bf16.gmra.mrb[0].mxu0 %v4206
        %v4410 = vpop.f32.mrb[0].mxu0
        %v4411 = vadd.f32 0.0, %v4410
        %v4412 = vpop.f32.mrb[0].mxu0
        %v4413 = vpop.f32.mrb[0].mxu0
        %v4414 = vadd.f32 0.0, %v4413
        %v4415 = vpop.f32.mrb[0].mxu0
        %4416 = vdwg.mxu0
        %v4417 = vrcp.pop %v4082
        %v4418 = vrcp.pop %v4085
        %v4419 = vrcp.pop %v4088
        %v4420 = vrcp.pop %v4091
        %v4421 = vrcp.pop %v4094
        %v4422 = vrcp.pop %v4097
        %v4423 = vrcp.pop %v4100
        %v4424 = vrcp.pop %v4103
        %v4425 = vrcp.pop %v4106
        %v4426 = vrcp.pop %v4109
        %v4427 = vrcp.pop %v4112
        %v4428 = vrcp.pop %v4115
        %v4429 = vrcp.pop %v4118
        %v4430 = vrcp.pop %v4121
        %v4431 = vrcp.pop %v4124
        %v4432 = vrcp.pop %v4127
        %v4433 = vrcp.pop %v4130
        %v4434 = vrcp.pop %v4133
        %v4435 = vrcp.pop %v4136
        %v4436 = vrcp.pop %v4139
        %v4437 = vrcp.pop %v4142
        %v4438 = vrcp.pop %v4145
        %v4439 = vrcp.pop %v4148
        %v4440 = vrcp.pop %v4151
        %v4441 = vrcp.pop %v4154
        %v4442 = vrcp.pop %v4157
        %v4443 = vrcp.pop %v4160
        %v4444 = vrcp.pop %v4163
        %v4445 = vrcp.pop %v4166
        %v4446 = vrcp.pop %v4169
        %v4447 = vrcp.pop %v4172
        %v4448 = vrcp.pop %v4175
        %v4449 = vmul.f32 %v4291, %v4417
        %v4450 = vmul.f32 %v4294, %v4418
        %v4451 = vmul.f32 %v4299, %v4419
        %v4452 = vmul.f32 %v4302, %v4420
        %v4453 = vmul.f32 %v4307, %v4421
        %v4454 = vmul.f32 %v4310, %v4422
        %v4455 = vmul.f32 %v4315, %v4423
        %v4456 = vmul.f32 %v4318, %v4424
        %v4457 = vmul.f32 %v4323, %v4425
        %v4458 = vmul.f32 %v4326, %v4426
        %v4459 = vmul.f32 %v4331, %v4427
        %v4460 = vmul.f32 %v4334, %v4428
        %v4461 = vmul.f32 %v4339, %v4429
        %v4462 = vmul.f32 %v4342, %v4430
        %v4463 = vmul.f32 %v4347, %v4431
        %v4464 = vmul.f32 %v4350, %v4432
        %v4465 = vmul.f32 %v4355, %v4433
        %v4466 = vmul.f32 %v4358, %v4434
        %v4467 = vmul.f32 %v4363, %v4435
        %v4468 = vmul.f32 %v4366, %v4436
        %v4469 = vmul.f32 %v4371, %v4437
        %v4470 = vmul.f32 %v4374, %v4438
        %v4471 = vmul.f32 %v4379, %v4439
        %v4472 = vmul.f32 %v4382, %v4440
        %v4473 = vmul.f32 %v4387, %v4441
        %v4474 = vmul.f32 %v4390, %v4442
        %v4475 = vmul.f32 %v4395, %v4443
        %v4476 = vmul.f32 %v4398, %v4444
        %v4477 = vmul.f32 %v4403, %v4445
        %v4478 = vmul.f32 %v4406, %v4446
        %v4479 = vmul.f32 %v4411, %v4447
        %v4480 = vmul.f32 %v4414, %v4448
        %4513 = vrot.lane.b32.xlu0 %v2365, 32
        %v4514 = vpop.permute.xlu0 %4513
        %4515 = vrot.lane.b32.xlu0 %v2366, 32
        %v4516 = vpop.permute.xlu0 %4515
        %4517 = vrot.lane.b32.xlu0 %v2367, 32
        %v4518 = vpop.permute.xlu0 %4517
        %4519 = vrot.lane.b32.xlu0 %v2368, 32
        %v4520 = vpop.permute.xlu0 %4519
        %4521 = vrot.lane.b32.xlu0 %v2369, 32
        %v4522 = vpop.permute.xlu0 %4521
        %4523 = vrot.lane.b32.xlu0 %v2370, 32
        %v4524 = vpop.permute.xlu0 %4523
        %4525 = vrot.lane.b32.xlu0 %v2371, 32
        %v4526 = vpop.permute.xlu0 %4525
        %4527 = vrot.lane.b32.xlu0 %v2372, 32
        %v4528 = vpop.permute.xlu0 %4527
        %4529 = vrot.lane.b32.xlu0 %v2373, 32
        %v4530 = vpop.permute.xlu0 %4529
        %4531 = vrot.lane.b32.xlu0 %v2374, 32
        %v4532 = vpop.permute.xlu0 %4531
        %4533 = vrot.lane.b32.xlu0 %v2375, 32
        %v4534 = vpop.permute.xlu0 %4533
        %4535 = vrot.lane.b32.xlu0 %v2376, 32
        %v4536 = vpop.permute.xlu0 %4535
        %4537 = vrot.lane.b32.xlu0 %v2377, 32
        %v4538 = vpop.permute.xlu0 %4537
        %4539 = vrot.lane.b32.xlu0 %v2378, 32
        %v4540 = vpop.permute.xlu0 %4539
        %4541 = vrot.lane.b32.xlu0 %v2379, 32
        %v4542 = vpop.permute.xlu0 %4541
        %4543 = vrot.lane.b32.xlu0 %v2380, 32
        %v4544 = vpop.permute.xlu0 %4543
        %4545 = vrot.lane.b32.xlu0 %v2381, 32
        %v4546 = vpop.permute.xlu0 %4545
        %4547 = vrot.lane.b32.xlu0 %v2382, 32
        %v4548 = vpop.permute.xlu0 %4547
        %4549 = vrot.lane.b32.xlu0 %v2383, 32
        %v4550 = vpop.permute.xlu0 %4549
        %4551 = vrot.lane.b32.xlu0 %v2384, 32
        %v4552 = vpop.permute.xlu0 %4551
        %4553 = vrot.lane.b32.xlu0 %v2385, 32
        %v4554 = vpop.permute.xlu0 %4553
        %4555 = vrot.lane.b32.xlu0 %v2386, 32
        %v4556 = vpop.permute.xlu0 %4555
        %4557 = vrot.lane.b32.xlu0 %v2387, 32
        %v4558 = vpop.permute.xlu0 %4557
        %4559 = vrot.lane.b32.xlu0 %v2388, 32
        %v4560 = vpop.permute.xlu0 %4559
        %4561 = vrot.lane.b32.xlu0 %v2389, 32
        %v4562 = vpop.permute.xlu0 %4561
        %4563 = vrot.lane.b32.xlu0 %v2390, 32
        %v4564 = vpop.permute.xlu0 %4563
        %4565 = vrot.lane.b32.xlu0 %v2391, 32
        %v4566 = vpop.permute.xlu0 %4565
        %4567 = vrot.lane.b32.xlu0 %v2392, 32
        %v4568 = vpop.permute.xlu0 %4567
        %4569 = vrot.lane.b32.xlu0 %v2393, 32
        %v4570 = vpop.permute.xlu0 %4569
        %4571 = vrot.lane.b32.xlu0 %v2394, 32
        %v4572 = vpop.permute.xlu0 %4571
        %4573 = vrot.lane.b32.xlu0 %v2395, 32
        %v4574 = vpop.permute.xlu0 %4573
        %4575 = vrot.lane.b32.xlu0 %v2396, 32
        %v4576 = vpop.permute.xlu0 %4575
        %4641 = vrot.lane.b32.xlu0 %v3407, 64
        %v4642 = vpop.permute.xlu0 %4641
        %4643 = vrot.lane.b32.xlu0 %v3408, 64
        %v4644 = vpop.permute.xlu0 %4643
        %4645 = vrot.lane.b32.xlu0 %v3409, 64
        %v4646 = vpop.permute.xlu0 %4645
        %4647 = vrot.lane.b32.xlu0 %v3410, 64
        %v4648 = vpop.permute.xlu0 %4647
        %4649 = vrot.lane.b32.xlu0 %v3411, 64
        %v4650 = vpop.permute.xlu0 %4649
        %4651 = vrot.lane.b32.xlu0 %v3412, 64
        %v4652 = vpop.permute.xlu0 %4651
        %4653 = vrot.lane.b32.xlu0 %v3413, 64
        %v4654 = vpop.permute.xlu0 %4653
        %4655 = vrot.lane.b32.xlu0 %v3414, 64
        %v4656 = vpop.permute.xlu0 %4655
        %4657 = vrot.lane.b32.xlu0 %v3415, 64
        %v4658 = vpop.permute.xlu0 %4657
        %4659 = vrot.lane.b32.xlu0 %v3416, 64
        %v4660 = vpop.permute.xlu0 %4659
        %4661 = vrot.lane.b32.xlu0 %v3417, 64
        %v4662 = vpop.permute.xlu0 %4661
        %4663 = vrot.lane.b32.xlu0 %v3418, 64
        %v4664 = vpop.permute.xlu0 %4663
        %4665 = vrot.lane.b32.xlu0 %v3419, 64
        %v4666 = vpop.permute.xlu0 %4665
        %4667 = vrot.lane.b32.xlu0 %v3420, 64
        %v4668 = vpop.permute.xlu0 %4667
        %4669 = vrot.lane.b32.xlu0 %v3421, 64
        %v4670 = vpop.permute.xlu0 %4669
        %4671 = vrot.lane.b32.xlu0 %v3422, 64
        %v4672 = vpop.permute.xlu0 %4671
        %4673 = vrot.lane.b32.xlu0 %v3423, 64
        %v4674 = vpop.permute.xlu0 %4673
        %4675 = vrot.lane.b32.xlu0 %v3424, 64
        %v4676 = vpop.permute.xlu0 %4675
        %4677 = vrot.lane.b32.xlu0 %v3425, 64
        %v4678 = vpop.permute.xlu0 %4677
        %4679 = vrot.lane.b32.xlu0 %v3426, 64
        %v4680 = vpop.permute.xlu0 %4679
        %4681 = vrot.lane.b32.xlu0 %v3427, 64
        %v4682 = vpop.permute.xlu0 %4681
        %4683 = vrot.lane.b32.xlu0 %v3428, 64
        %v4684 = vpop.permute.xlu0 %4683
        %4685 = vrot.lane.b32.xlu0 %v3429, 64
        %v4686 = vpop.permute.xlu0 %4685
        %4687 = vrot.lane.b32.xlu0 %v3430, 64
        %v4688 = vpop.permute.xlu0 %4687
        %4689 = vrot.lane.b32.xlu0 %v3431, 64
        %v4690 = vpop.permute.xlu0 %4689
        %4691 = vrot.lane.b32.xlu0 %v3432, 64
        %v4692 = vpop.permute.xlu0 %4691
        %4693 = vrot.lane.b32.xlu0 %v3433, 64
        %v4694 = vpop.permute.xlu0 %4693
        %4695 = vrot.lane.b32.xlu0 %v3434, 64
        %v4696 = vpop.permute.xlu0 %4695
        %4697 = vrot.lane.b32.xlu0 %v3435, 64
        %v4698 = vpop.permute.xlu0 %4697
        %4699 = vrot.lane.b32.xlu0 %v3436, 64
        %v4700 = vpop.permute.xlu0 %4699
        %4701 = vrot.lane.b32.xlu0 %v3437, 64
        %v4702 = vpop.permute.xlu0 %4701
        %4703 = vrot.lane.b32.xlu0 %v3438, 64
        %v4704 = vpop.permute.xlu0 %4703
        %4769 = vrot.lane.b32.xlu0 %v4449, 96
        %v4770 = vpop.permute.xlu0 %4769
        %4771 = vrot.lane.b32.xlu0 %v4450, 96
        %v4772 = vpop.permute.xlu0 %4771
        %4773 = vrot.lane.b32.xlu0 %v4451, 96
        %v4774 = vpop.permute.xlu0 %4773
        %4775 = vrot.lane.b32.xlu0 %v4452, 96
        %v4776 = vpop.permute.xlu0 %4775
        %4777 = vrot.lane.b32.xlu0 %v4453, 96
        %v4778 = vpop.permute.xlu0 %4777
        %4779 = vrot.lane.b32.xlu0 %v4454, 96
        %v4780 = vpop.permute.xlu0 %4779
        %4781 = vrot.lane.b32.xlu0 %v4455, 96
        %v4782 = vpop.permute.xlu0 %4781
        %4783 = vrot.lane.b32.xlu0 %v4456, 96
        %v4784 = vpop.permute.xlu0 %4783
        %4785 = vrot.lane.b32.xlu0 %v4457, 96
        %v4786 = vpop.permute.xlu0 %4785
        %4787 = vrot.lane.b32.xlu0 %v4458, 96
        %v4788 = vpop.permute.xlu0 %4787
        %4789 = vrot.lane.b32.xlu0 %v4459, 96
        %v4790 = vpop.permute.xlu0 %4789
        %4791 = vrot.lane.b32.xlu0 %v4460, 96
        %v4792 = vpop.permute.xlu0 %4791
        %4793 = vrot.lane.b32.xlu0 %v4461, 96
        %v4794 = vpop.permute.xlu0 %4793
        %4795 = vrot.lane.b32.xlu0 %v4462, 96
        %v4796 = vpop.permute.xlu0 %4795
        %4797 = vrot.lane.b32.xlu0 %v4463, 96
        %v4798 = vpop.permute.xlu0 %4797
        %4799 = vrot.lane.b32.xlu0 %v4464, 96
        %v4800 = vpop.permute.xlu0 %4799
        %4801 = vrot.lane.b32.xlu0 %v4465, 96
        %v4802 = vpop.permute.xlu0 %4801
        %4803 = vrot.lane.b32.xlu0 %v4466, 96
        %v4804 = vpop.permute.xlu0 %4803
        %4805 = vrot.lane.b32.xlu0 %v4467, 96
        %v4806 = vpop.permute.xlu0 %4805
        %4807 = vrot.lane.b32.xlu0 %v4468, 96
        %v4808 = vpop.permute.xlu0 %4807
        %4809 = vrot.lane.b32.xlu0 %v4469, 96
        %v4810 = vpop.permute.xlu0 %4809
        %4811 = vrot.lane.b32.xlu0 %v4470, 96
        %v4812 = vpop.permute.xlu0 %4811
        %4813 = vrot.lane.b32.xlu0 %v4471, 96
        %v4814 = vpop.permute.xlu0 %4813
        %4815 = vrot.lane.b32.xlu0 %v4472, 96
        %v4816 = vpop.permute.xlu0 %4815
        %4817 = vrot.lane.b32.xlu0 %v4473, 96
        %v4818 = vpop.permute.xlu0 %4817
        %4819 = vrot.lane.b32.xlu0 %v4474, 96
        %v4820 = vpop.permute.xlu0 %4819
        %4821 = vrot.lane.b32.xlu0 %v4475, 96
        %v4822 = vpop.permute.xlu0 %4821
        %4823 = vrot.lane.b32.xlu0 %v4476, 96
        %v4824 = vpop.permute.xlu0 %4823
        %4825 = vrot.lane.b32.xlu0 %v4477, 96
        %v4826 = vpop.permute.xlu0 %4825
        %4827 = vrot.lane.b32.xlu0 %v4478, 96
        %v4828 = vpop.permute.xlu0 %4827
        %4829 = vrot.lane.b32.xlu0 %v4479, 96
        %v4830 = vpop.permute.xlu0 %4829
        %4831 = vrot.lane.b32.xlu0 %v4480, 96
        %v4832 = vpop.permute.xlu0 %4831
        %v4865 = vsel %vm328, %v1323, %v4514
        %v4866 = vsel %vm328, %v1324, %v4516
        %v4867 = vsel %vm328, %v1325, %v4518
        %v4868 = vsel %vm328, %v1326, %v4520
        %v4869 = vsel %vm328, %v1327, %v4522
        %v4870 = vsel %vm328, %v1328, %v4524
        %v4871 = vsel %vm328, %v1329, %v4526
        %v4872 = vsel %vm328, %v1330, %v4528
        %v4873 = vsel %vm328, %v1331, %v4530
        %v4874 = vsel %vm328, %v1332, %v4532
        %v4875 = vsel %vm328, %v1333, %v4534
        %v4876 = vsel %vm328, %v1334, %v4536
        %v4877 = vsel %vm328, %v1335, %v4538
        %v4878 = vsel %vm328, %v1336, %v4540
        %v4879 = vsel %vm328, %v1337, %v4542
        %v4880 = vsel %vm328, %v1338, %v4544
        %v4881 = vsel %vm328, %v1339, %v4546
        %v4882 = vsel %vm328, %v1340, %v4548
        %v4883 = vsel %vm328, %v1341, %v4550
        %v4884 = vsel %vm328, %v1342, %v4552
        %v4885 = vsel %vm328, %v1343, %v4554
        %v4886 = vsel %vm328, %v1344, %v4556
        %v4887 = vsel %vm328, %v1345, %v4558
        %v4888 = vsel %vm328, %v1346, %v4560
        %v4889 = vsel %vm328, %v1347, %v4562
        %v4890 = vsel %vm328, %v1348, %v4564
        %v4891 = vsel %vm328, %v1349, %v4566
        %v4892 = vsel %vm328, %v1350, %v4568
        %v4893 = vsel %vm328, %v1351, %v4570
        %v4894 = vsel %vm328, %v1352, %v4572
        %v4895 = vsel %vm328, %v1353, %v4574
        %v4896 = vsel %vm328, %v1354, %v4576
        %vm4897 = vcmask 523264
        %v4898 = vsel %vm4897, %v4865, %v4642
        %v4899 = vsel %vm4897, %v4866, %v4644
        %v4900 = vsel %vm4897, %v4867, %v4646
        %v4901 = vsel %vm4897, %v4868, %v4648
        %v4902 = vsel %vm4897, %v4869, %v4650
        %v4903 = vsel %vm4897, %v4870, %v4652
        %v4904 = vsel %vm4897, %v4871, %v4654
        %v4905 = vsel %vm4897, %v4872, %v4656
        %v4906 = vsel %vm4897, %v4873, %v4658
        %v4907 = vsel %vm4897, %v4874, %v4660
        %v4908 = vsel %vm4897, %v4875, %v4662
        %v4909 = vsel %vm4897, %v4876, %v4664
        %v4910 = vsel %vm4897, %v4877, %v4666
        %v4911 = vsel %vm4897, %v4878, %v4668
        %v4912 = vsel %vm4897, %v4879, %v4670
        %v4913 = vsel %vm4897, %v4880, %v4672
        %v4914 = vsel %vm4897, %v4881, %v4674
        %v4915 = vsel %vm4897, %v4882, %v4676
        %v4916 = vsel %vm4897, %v4883, %v4678
        %v4917 = vsel %vm4897, %v4884, %v4680
        %v4918 = vsel %vm4897, %v4885, %v4682
        %v4919 = vsel %vm4897, %v4886, %v4684
        %v4920 = vsel %vm4897, %v4887, %v4686
        %v4921 = vsel %vm4897, %v4888, %v4688
        %v4922 = vsel %vm4897, %v4889, %v4690
        %v4923 = vsel %vm4897, %v4890, %v4692
        %v4924 = vsel %vm4897, %v4891, %v4694
        %v4925 = vsel %vm4897, %v4892, %v4696
        %v4926 = vsel %vm4897, %v4893, %v4698
        %v4927 = vsel %vm4897, %v4894, %v4700
        %v4928 = vsel %vm4897, %v4895, %v4702
        %v4929 = vsel %vm4897, %v4896, %v4704
        %vm4930 = vcmask 785408
        %v4931 = vsel %vm4930, %v4898, %v4770
        %v4932 = vsel %vm4930, %v4899, %v4772
        %v4933 = vsel %vm4930, %v4900, %v4774
        %v4934 = vsel %vm4930, %v4901, %v4776
        %v4935 = vsel %vm4930, %v4902, %v4778
        %v4936 = vsel %vm4930, %v4903, %v4780
        %v4937 = vsel %vm4930, %v4904, %v4782
        %v4938 = vsel %vm4930, %v4905, %v4784
        %v4939 = vsel %vm4930, %v4906, %v4786
        %v4940 = vsel %vm4930, %v4907, %v4788
        %v4941 = vsel %vm4930, %v4908, %v4790
        %v4942 = vsel %vm4930, %v4909, %v4792
        %v4943 = vsel %vm4930, %v4910, %v4794
        %v4944 = vsel %vm4930, %v4911, %v4796
        %v4945 = vsel %vm4930, %v4912, %v4798
        %v4946 = vsel %vm4930, %v4913, %v4800
        %v4947 = vsel %vm4930, %v4914, %v4802
        %v4948 = vsel %vm4930, %v4915, %v4804
        %v4949 = vsel %vm4930, %v4916, %v4806
        %v4950 = vsel %vm4930, %v4917, %v4808
        %v4951 = vsel %vm4930, %v4918, %v4810
        %v4952 = vsel %vm4930, %v4919, %v4812
        %v4953 = vsel %vm4930, %v4920, %v4814
        %v4954 = vsel %vm4930, %v4921, %v4816
        %v4955 = vsel %vm4930, %v4922, %v4818
        %v4956 = vsel %vm4930, %v4923, %v4820
        %v4957 = vsel %vm4930, %v4924, %v4822
        %v4958 = vsel %vm4930, %v4925, %v4824
        %v4959 = vsel %vm4930, %v4926, %v4826
        %v4960 = vsel %vm4930, %v4927, %v4828
        %v4961 = vsel %vm4930, %v4928, %v4830
        %v4962 = vsel %vm4930, %v4929, %v4832
        %4963 = vst [vmem:[%s134] sm:$0xff] %v4931
        %4964 = vst [vmem:[%s134 + $0x8] sm:$0xff] %v4932
        %4965 = vst [vmem:[%s134 + $0x10] sm:$0xff] %v4933
        %4966 = vst [vmem:[%s134 + $0x18] sm:$0xff] %v4934
        %4967 = vst [vmem:[%s134 + $0x20] sm:$0xff] %v4935
        %4968 = vst [vmem:[%s134 + $0x28] sm:$0xff] %v4936
        %4969 = vst [vmem:[%s134 + $0x30] sm:$0xff] %v4937
        %4970 = vst [vmem:[%s134 + $0x38] sm:$0xff] %v4938
        %4971 = vst [vmem:[%s134 + $0x40] sm:$0xff] %v4939
        %4972 = vst [vmem:[%s134 + $0x48] sm:$0xff] %v4940
        %4973 = vst [vmem:[%s134 + $0x50] sm:$0xff] %v4941
        %4974 = vst [vmem:[%s134 + $0x58] sm:$0xff] %v4942
        %4975 = vst [vmem:[%s134 + $0x60] sm:$0xff] %v4943
        %4976 = vst [vmem:[%s134 + $0x68] sm:$0xff] %v4944
        %4977 = vst [vmem:[%s134 + $0x70] sm:$0xff] %v4945
        %4978 = vst [vmem:[%s134 + $0x78] sm:$0xff] %v4946
        %4979 = vst [vmem:[%s134 + $0x80] sm:$0xff] %v4947
        %4980 = vst [vmem:[%s134 + $0x88] sm:$0xff] %v4948
        %4981 = vst [vmem:[%s134 + $0x90] sm:$0xff] %v4949
        %4982 = vst [vmem:[%s134 + $0x98] sm:$0xff] %v4950
        %4983 = vst [vmem:[%s134 + $0xa0] sm:$0xff] %v4951
        %4984 = vst [vmem:[%s134 + $0xa8] sm:$0xff] %v4952
        %4985 = vst [vmem:[%s134 + $0xb0] sm:$0xff] %v4953
        %4986 = vst [vmem:[%s134 + $0xb8] sm:$0xff] %v4954
        %4987 = vst [vmem:[%s134 + $0xc0] sm:$0xff] %v4955
        %4988 = vst [vmem:[%s134 + $0xc8] sm:$0xff] %v4956
        %4989 = vst [vmem:[%s134 + $0xd0] sm:$0xff] %v4957
        %4990 = vst [vmem:[%s134 + $0xd8] sm:$0xff] %v4958
        %4991 = vst [vmem:[%s134 + $0xe0] sm:$0xff] %v4959
        %4992 = vst [vmem:[%s134 + $0xe8] sm:$0xff] %v4960
        %4993 = vst [vmem:[%s134 + $0xf0] sm:$0xff] %v4961
        %4994 = vst [vmem:[%s134 + $0xf8] sm:$0xff] %v4962
        %s4995 = sand.u32 %s52, 1
        %s4996 = scalar_lea.sflag [#allocation4], %s4995
        %s4997 = sand.u32 %s52, 1
        %s4998 = smul.addr %s4997, 256
        %s4999 = scalar_lea.vmem [#allocation5], %s4998
        // Predicated region
        $region29: #{tpu_custom_call.1} parent=23 // pred_check
          %p5000 = pneg %p62
        $region30: #{tpu_custom_call.1} parent=23 // pred_check_branch
          %5002 = sbr.rel (%p5000) target = $region32
        $region31: #{tpu_custom_call.1} parent=23 // pred_region
          %s5004 = ssub.s32 4096, 4096
          %5005 = vsyncadd %s4996, %s5004
          %s5006 = smul.addr %s18, 32
          %s5007 = smul.addr %s5006, 128
          %s5008 = scalar_lea.hbm %s1, %s5007
          %s5009 = sshll.u32 %s4999, 4
          %s5010 = int_to_ptr.vmem [resolvable:$true] %s5009
          %5015 = dma.vmem_to_hbm [thread:$0]  %s5010, 4096, %s5008, %s4996, 128, 128, 8
        $region32: #{tpu_custom_call.1} parent=23 // pred_fallthru
          _
      $region24: #{tpu_custom_call.1} parent=5 // pred_fallthru
        _
      %p5016 = scmp.le.s32.totalorder 2, %s13
      // Predicated region
      $region33: #{tpu_custom_call.1} parent=5 // pred_check
        %p5017 = pneg %p5016
      $region34: #{tpu_custom_call.1} parent=5 // pred_check_branch
        %5019 = sbr.rel (%p5017) target = $region36
      $region35: #{tpu_custom_call.1} parent=5 // pred_region
        %s5020 = ssub.s32 %s13, 2
        // Predicated region
        $region37: #{tpu_custom_call.1} parent=35 // pred_check
          %p5021 = pneg %p68
        $region38: #{tpu_custom_call.1} parent=35 // pred_check_branch
          %5023 = sbr.rel (%p5021) target = $region40
        $region39: #{tpu_custom_call.1} parent=35 // pred_region
          %s5024 = sand.u32 %s53, 1
          %s5025 = scalar_lea.sflag [#allocation4], %s5024
          %s5026 = sand.u32 %s53, 1
          %s5027 = smul.addr %s5026, 256
          %s5028 = scalar_lea.vmem [#allocation5], %s5027
          %5029 = dma.done %s5025, 4096
        $region40: #{tpu_custom_call.1} parent=35 // pred_fallthru
          _
      $region36: #{tpu_custom_call.1} parent=5 // pred_fallthru
        _
    $region6: #{tpu_custom_call.1} parent=1 // loop_footer
      %s17 = sadd.s32 1, %s13
    $region7: #{tpu_custom_call.1} parent=1 // loop_footer_branch
      %12 = sbr.rel target = $region3
    $region8: #{tpu_custom_call.1} parent=1 // loop_exit
      _
    %5030 = vsyncpa [#allocation3], 1
    %s5031 = scalar_lea.sflag [#allocation3], 1
    %5032 = vsyncpa %s5031, 1
    %5033 = vsyncpa [#allocation4], 1
    %s5034 = scalar_lea.sflag [#allocation4], 1
    %5035 = vsyncpa %s5034, 1

</llo_original>
